<compile_context>
chip_gen: v5e
topology: v5e:2x2
jax: 0.10.0
libtpu: 0.0.40
codegen_flags: <defaults>
</compile_context>

<pallas_src>
import jax
import jax.numpy as jnp
from jax.experimental import pallas as pl
from jax.experimental.pallas import tpu as pltpu

_LANES_REF = 1024          # reference slab width used to size ~4 MiB tiles
_SMALL_N_BYPASS = 1 << 20  # below this, plain JAX beats kernel-launch overhead


def _round_up(v, m):
    return ((v + m - 1) // m) * m


def _device_config():
    """(num_partials, max_block_rows@1024 lanes, vmem_limit_bytes) per TPU gen."""
    kind = ""
    try:
        kind = jax.devices()[0].device_kind.lower()
    except Exception:
        pass
    if "v7" in kind:
        # 2 TensorCores, 64 MiB VMEM per TC: keep 1024x1024 tiles (<=16 MiB
        # double-buffered f32 inputs per core) and shard the grid across TCs.
        return 2, 1024, 32 * 1024 * 1024
    if "v6" in kind:
        # Single TC, 128 MiB VMEM: 2048-row tiles amortize per-step overhead.
        return 1, 2048, 80 * 1024 * 1024
    # v5e / unknown: conservative defaults (already ~86% of HBM roofline).
    return 1, 1024, 32 * 1024 * 1024


def _make_kernel(num_partials, steps, block_rows, rows, lanes, needs_mask):
    groups = block_rows // 8

    def kernel(x_ref, t_ref, o_ref):
        if num_partials == 1:
            i = pl.program_id(0)
            blk = i
        else:
            i = pl.program_id(1)
            blk = pl.program_id(0) * steps + i

        @pl.when(i == 0)
        def _init():
            o_ref[...] = jnp.zeros_like(o_ref)

        # Min in the native input dtype (bf16 stays bf16 on the VPU on
        # v6e/v7x; v5e upcasts in-vreg), accumulate in f32.
        m = jnp.minimum(x_ref[...], t_ref[...]).astype(jnp.float32)

        def _accumulate(vals):
            # (block_rows, lanes) -> (groups, 8, lanes) is a free sublane
            # split; the axis-0 sum is pure VPU vadds on whole (8,128) vregs
            # and the += targets a full 8-sublane resident output block.
            o_ref[...] += jnp.sum(vals.reshape(groups, 8, lanes), axis=0)[None]

        if not needs_mask:
            _accumulate(m)
        else:
            first_row = blk * block_rows
            is_full = first_row + block_rows <= rows

            @pl.when(is_full)
            def _full_block():
                _accumulate(m)

            @pl.when(jnp.logical_not(is_full))
            def _edge_block():
                # Edge / fully out-of-range block: zero out garbage rows read
                # past the end of the slab (mask uses the UNclamped index).
                row_ids = first_row + jax.lax.broadcasted_iota(
                    jnp.int32, (block_rows, lanes), 0)
                _accumulate(jnp.where(row_ids < rows, m, jnp.float32(0.0)))

    return kernel


def _slab_min_sum(x2, t2, *, num_partials, max_block_rows, vmem_limit_bytes):
    """sum(min(x2, t2)) over a lane-dense (rows, lanes) slab via Pallas."""
    rows, lanes = x2.shape
    # Constant tile byte budget regardless of slab width.
    row_budget = max(8, (max_block_rows * _LANES_REF) // lanes)

    # Pick steps before block_rows so tiles balance against the row count.
    rows_per_part = pl.cdiv(rows, num_partials)
    steps = max(1, pl.cdiv(rows_per_part, row_budget))
    block_rows = min(row_budget, _round_up(pl.cdiv(rows_per_part, steps), 8))

    nblocks = pl.cdiv(rows, block_rows)   # valid blocks in the slab
    last_blk = nblocks - 1
    needs_mask = num_partials * steps * block_rows != rows

    if num_partials == 1:
        grid = (steps,)
        # Clamp so a (fully masked) trailing grid slot never indexes past the
        # slab; correctness comes from the in-kernel mask, not the data.
        in_map = lambda i: (jnp.minimum(i, last_blk), 0)
        out_map = lambda i: (0, 0, 0)
        semantics = ("arbitrary",)
    else:
        grid = (num_partials, steps)
        in_map = lambda p, i: (jnp.minimum(p * steps + i, last_blk), 0)
        out_map = lambda p, i: (p, 0, 0)
        # Real dual-TensorCore sharding on v7x (plain "parallel" does not
        # change core assignment).
        semantics = (pltpu.CORE_PARALLEL, pltpu.ARBITRARY)

    itemsize = x2.dtype.itemsize
    partials = pl.pallas_call(
        _make_kernel(num_partials, steps, block_rows, rows, lanes, needs_mask),
        out_shape=jax.ShapeDtypeStruct((num_partials, 8, lanes), jnp.float32),
        grid_spec=pltpu.PrefetchScalarGridSpec(
            num_scalar_prefetch=0,
            grid=grid,
            in_specs=[
                pl.BlockSpec((block_rows, lanes), in_map),
                pl.BlockSpec((block_rows, lanes), in_map),
            ],
            out_specs=pl.BlockSpec((1, 8, lanes), out_map),
        ),
        compiler_params=pltpu.CompilerParams(
            dimension_semantics=semantics,
            vmem_limit_bytes=vmem_limit_bytes,
        ),
        cost_estimate=pl.CostEstimate(
            flops=2 * rows * lanes,
            transcendentals=0,
            bytes_accessed=2 * rows * lanes * itemsize + num_partials * 8 * lanes * 4,
        ),
    )(x2, t2)
    # Tiny epilogue: collapse sublanes / lanes / partials in plain JAX.
    return jnp.sum(partials, dtype=jnp.float32)


def intersec_loss(x, t):
    """min(x, t).sum(dim=1).mean()  ==  sum(min(x, t)) / (numel / shape[1])."""
    assert x.shape == t.shape and x.ndim >= 2
    n = x.size
    divisor = n // x.shape[1]          # product of all dims except dim 1

    # Native float dtypes stream through the kernel untouched (bf16/f16 halve
    # HBM traffic); anything else falls back to f32 (lossy for wide ints/f64).
    cdt = jnp.promote_types(x.dtype, t.dtype)
    if cdt.name not in ("float32", "bfloat16", "float16"):
        cdt = jnp.float32

    # Small-input bypass: launch + per-step overhead dominates tiny shapes.
    if n < _SMALL_N_BYPASS:
        m = jnp.minimum(x.astype(cdt), t.astype(cdt)).astype(jnp.float32)
        return jnp.sum(m) / jnp.float32(divisor)

    num_partials, max_block_rows, vmem_limit = _device_config()

    xf = x.reshape(-1)                 # contiguous reshape: free bitcast
    tf = t.reshape(-1)
    if xf.dtype != cdt:
        xf = xf.astype(cdt)
    if tf.dtype != cdt:
        tf = tf.astype(cdt)

    # Lane-dense slab: widest width (multiple of 128) dividing n so the
    # reshape stays a zero-copy bitcast. No jnp.pad anywhere.
    lanes = None
    for w in (1024, 512, 256, 128):
        if n % w == 0:
            lanes = w
            break

    if lanes is None:
        # numel not a multiple of 128: sub-lane remainder (<1024 elems) is
        # summed in JAX; the main slab is a prefix slice (the only case that
        # still materializes one copy).
        lanes = _LANES_REF
        rows = n // lanes
        split = rows * lanes
        tail = jnp.sum(jnp.minimum(xf[split:], tf[split:]).astype(jnp.float32))
        x2 = xf[:split].reshape(rows, lanes)
        t2 = tf[:split].reshape(rows, lanes)
    else:
        rows = n // lanes
        tail = jnp.float32(0.0)
        x2 = xf.reshape(rows, lanes)
        t2 = tf.reshape(rows, lanes)

    if num_partials > 1:
        try:
            # block_until_ready so lowering *and* runtime issues of the
            # multi-core (CORE_PARALLEL) variant fall back cleanly.
            main = jax.block_until_ready(_slab_min_sum(
                x2, t2, num_partials=num_partials,
                max_block_rows=max_block_rows, vmem_limit_bytes=vmem_limit))
        except Exception:
            main = _slab_min_sum(x2, t2, num_partials=1,
                                 max_block_rows=max_block_rows,
                                 vmem_limit_bytes=vmem_limit)
    else:
        main = _slab_min_sum(x2, t2, num_partials=1,
                             max_block_rows=max_block_rows,
                             vmem_limit_bytes=vmem_limit)

    return (main + tail) / jnp.float32(divisor)


if __name__ == "__main__":
    key = jax.random.PRNGKey(0)
    ks = jax.random.split(key, 8)

    def ref(a, b):
        return jnp.minimum(a, b).sum(axis=1).mean()

    # Small canonical shapes (JAX bypass path).
    x4 = jax.random.normal(ks[0], (2, 4, 16, 16), dtype=jnp.float32)
    t4 = jax.random.normal(ks[1], (2, 4, 16, 16), dtype=jnp.float32)
    out = jax.block_until_ready(intersec_loss(x4, t4))
    assert jnp.allclose(out, ref(x4, t4), rtol=1e-5, atol=1e-5), (out, ref(x4, t4))

    x2 = jax.random.normal(ks[2], (16, 128), dtype=jnp.float32)
    t2 = jax.random.normal(ks[3], (16, 128), dtype=jnp.float32)
    out = jax.block_until_ready(intersec_loss(x2, t2))
    assert jnp.allclose(out, ref(x2, t2), rtol=1e-5, atol=1e-5), (out, ref(x2, t2))

    # Lane-aligned shape -> Pallas path, unmasked full tiles, zero-copy slab.
    xa = jax.random.normal(ks[4], (8, 16, 128, 128), dtype=jnp.float32)
    ta = jax.random.normal(ks[5], (8, 16, 128, 128), dtype=jnp.float32)
    out = jax.block_until_ready(intersec_loss(xa, ta))
    assert jnp.allclose(out, ref(xa, ta), rtol=2e-4, atol=1e-4), (out, ref(xa, ta))

    # Ragged shape (numel not a multiple of 128) -> in-kernel row mask +
    # JAX lane-tail epilogue.
    xr = jax.random.normal(ks[6], (5, 3, 271, 263), dtype=jnp.float32)
    tr = jax.random.normal(ks[7], (5, 3, 271, 263), dtype=jnp.float32)
    out = jax.block_until_ready(intersec_loss(xr, tr))
    assert jnp.allclose(out, ref(xr, tr), rtol=2e-4, atol=1e-4), (out, ref(xr, tr))

    # bf16 inputs stay native in HBM (half the DMA bytes), f32 accumulation.
    xb, tb = xa.astype(jnp.bfloat16), ta.astype(jnp.bfloat16)
    out = jax.block_until_ready(intersec_loss(xb, tb))
    refb = jnp.minimum(xb, tb).astype(jnp.float32).sum(axis=1).mean()
    assert jnp.allclose(out, refb, rtol=2e-4, atol=1e-3), (out, refb)

    print("KERNEL_OK")
</pallas_src>

<mosaic_0001>
module attributes {stable_mosaic.version = 11 : i64} {
  func.func @kernel(%arg0: i32, %arg1: memref<1024x1024xf32, #tpu.memory_space<vmem>>, %arg2: memref<1024x1024xf32, #tpu.memory_space<vmem>>, %arg3: memref<1x8x1024xf32, #tpu.memory_space<vmem>>) attributes {dimension_semantics = [#tpu.dimension_semantics<arbitrary>], iteration_bounds = array<i64: 2>, scalar_prefetch = 0 : i64, scratch_operands = 0 : i64, tpu.core_type = #tpu.core_type<tc>, window_params = [{transform_indices = @transform_0, window_bounds = array<i64: 1024, 1024>}, {transform_indices = @transform_1, window_bounds = array<i64: 1024, 1024>}, {pipeline_mode = #tpu.pipeline_mode<synchronous>, transform_indices = @transform_2, window_bounds = array<i64: 1, 8, 1024>}]} {
    %c0_i32 = arith.constant 0 : i32
    %0 = arith.cmpi eq, %arg0, %c0_i32 : i32
    %1 = arith.extui %0 : i1 to i32
    %c0_i32_0 = arith.constant 0 : i32
    %2 = arith.cmpi ne, %1, %c0_i32_0 : i32
    scf.if %2 {
      %cst_10 = arith.constant 0.000000e+00 : f32
      %12 = vector.broadcast %cst_10 : f32 to vector<1x8x1024xf32>
      %c0_11 = arith.constant 0 : index
      %c0_12 = arith.constant 0 : index
      %c0_13 = arith.constant 0 : index
      %13 = vector.load %arg3[%c0_11, %c0_12, %c0_13] : memref<1x8x1024xf32, #tpu.memory_space<vmem>>, vector<1x8x1024xf32>
      tpu.vector_store %arg3[%c0_11, %c0_12, %c0_13], %12 {strides = array<i32>} : memref<1x8x1024xf32, #tpu.memory_space<vmem>>, vector<1x8x1024xf32>,
    } else {
    }
    %c0 = arith.constant 0 : index
    %c0_1 = arith.constant 0 : index
    %3 = vector.load %arg1[%c0, %c0_1] : memref<1024x1024xf32, #tpu.memory_space<vmem>>, vector<1024x1024xf32>
    %c0_2 = arith.constant 0 : index
    %c0_3 = arith.constant 0 : index
    %4 = vector.load %arg2[%c0_2, %c0_3] : memref<1024x1024xf32, #tpu.memory_space<vmem>>, vector<1024x1024xf32>
    %5 = arith.minimumf %3, %4 : vector<1024x1024xf32>
    %c0_4 = arith.constant 0 : index
    %c0_5 = arith.constant 0 : index
    %c0_6 = arith.constant 0 : index
    %6 = vector.load %arg3[%c0_4, %c0_5, %c0_6] : memref<1x8x1024xf32, #tpu.memory_space<vmem>>, vector<1x8x1024xf32>
    %7 = vector.shape_cast %5 : vector<1024x1024xf32> to vector<128x8x1024xf32>
    %cst = arith.constant dense<0.000000e+00> : vector<8x1024xf32>
    %8 = vector.multi_reduction <add>, %7, %cst [0] : vector<128x8x1024xf32> to vector<8x1024xf32>
    %9 = vector.shape_cast %8 : vector<8x1024xf32> to vector<1x8x1024xf32>
    %10 = arith.addf %6, %9 : vector<1x8x1024xf32>
    %c0_7 = arith.constant 0 : index
    %c0_8 = arith.constant 0 : index
    %c0_9 = arith.constant 0 : index
    %11 = vector.load %arg3[%c0_7, %c0_8, %c0_9] : memref<1x8x1024xf32, #tpu.memory_space<vmem>>, vector<1x8x1024xf32>
    tpu.vector_store %arg3[%c0_7, %c0_8, %c0_9], %10 {strides = array<i32>} : memref<1x8x1024xf32, #tpu.memory_space<vmem>>, vector<1x8x1024xf32>,
    return
  }
  func.func @transform_0(%arg0: i32) -> (i32, i32) {
    %c1_i32 = arith.constant 1 : i32
    %0 = arith.minsi %arg0, %c1_i32 : i32
    %c0_i32 = arith.constant 0 : i32
    %c0_i32_0 = arith.constant 0 : i32
    return %0, %c0_i32 : i32, i32
  }
  func.func @transform_1(%arg0: i32) -> (i32, i32) {
    %c1_i32 = arith.constant 1 : i32
    %0 = arith.minsi %arg0, %c1_i32 : i32
    %c0_i32 = arith.constant 0 : i32
    %c0_i32_0 = arith.constant 0 : i32
    return %0, %c0_i32 : i32, i32
  }
  func.func @transform_2(%arg0: i32) -> (i32, i32, i32) {
    %c0_i32 = arith.constant 0 : i32
    %c0_i32_0 = arith.constant 0 : i32
    %c0_i32_1 = arith.constant 0 : i32
    %c0_i32_2 = arith.constant 0 : i32
    return %c0_i32, %c0_i32_0, %c0_i32_1 : i32, i32, i32
  }
}

</mosaic_0001>

<llo_original>
// kernel: tpu_custom_call.1
$region0: #{tpu_custom_call.1}
  #allocation0 [shape = 'u32[]', space=smem, size = 0x4, offset = 0x4, fixed_abs, tag = 'smem constant byte address 0x4 - core index']
  #allocation1 [shape = 'u32[72,128]{1,0:T(1,128)}', space=vmem, size = 0x9000, scoped, tag = 'internal scratch']
  %s0 = inlined_call_operand.hbm [shape: f32[2048,1024], index: 0, kind: input, shape index: {}]
  %s1 = inlined_call_operand.hbm [shape: f32[2048,1024], index: 1, kind: input, shape index: {}]
  %s2 = inlined_call_operand.hbm [shape: f32[1,8,1024], index: 2, kind: output, shape index: {}]
  %s3 = sld [smem:[#allocation0]]
  $region53: #{tpu_custom_call.1} parent=0
    _
  %s5 = ssub.s32 1, %s3
  %s6 = scalar_select 0, %s5, %s3
  $region1: #{tpu_custom_call.1} parent=0
    #allocation2 [shape = 'u8[8388608]{0}', space=vmem, size = 0x800000, scoped, tag = 'input window, operand 0']
    #allocation3 [shape = 's32[2]{0}', space=sflag, size = 0x8, scoped, tag = 'scoped memory for tpu_custom_call.1']
    #allocation4 [shape = 's32[2]{0}', space=sflag, size = 0x8, scoped, tag = 'scoped memory for tpu_custom_call.1']
    #allocation5 [shape = 'u8[8388608]{0}', space=vmem, size = 0x800000, scoped, tag = 'input window, operand 1']
    #allocation6 [shape = 's32[2]{0}', space=sflag, size = 0x8, scoped, tag = 'scoped memory for tpu_custom_call.1']
    #allocation7 [shape = 'u8[32768]{0}', space=vmem, size = 0x8000, scoped, tag = 'output window, operand 0, single buffered']
    %7 = vsyncpa [#allocation3], 0
    %s8 = scalar_lea.sflag [#allocation3], 1
    %9 = vsyncpa %s8, 0
    %10 = vsyncpa [#allocation6], 0
    %s11 = scalar_lea.sflag [#allocation6], 1
    %12 = vsyncpa %s11, 0
    %13 = vsyncpa [#allocation4], 0
    loop: start=0, step=1, limit=4
    $region2: #{tpu_custom_call.1} parent=1 // loop_pre_header
      _
    $region3: #{tpu_custom_call.1} parent=1 // loop_header
      %s15 = sphi 0, %s19
      %p16 = scmp.ge.s32.totalorder %s15, 4
      %s29 = sphi 0, %s31
      %s32 = sphi 0, %s29
      %s33 = sphi 0, %s32
      %s49 = sphi 0, %s33
      %s59 = sphi 0, %s61
      %s62 = sphi 0, %s59
      %s63 = sphi 0, %s62
      %s79 = sphi 0, %s63
      %s83 = sphi 0, %s83
      %s85 = sphi 0, %s83
      %s86 = sphi 0, %s85
      %s100 = sphi 0, %s86
    $region4: #{tpu_custom_call.1} parent=1 // loop_header_branch
      %18 = sbr.rel (%p16) target = $region8
    $region5: #{tpu_custom_call.1} parent=1 // loop_body
      %s20 = ssub.s32 %s15, 1
      %s21 = ssub.s32 %s15, 2
      %s22 = sadd.s32 %s15, 1
      %p23 = scmp.lt.s32.totalorder %s15, 1
      %s24 = scalar_select %p23, %s15, 1
      %p25 = scmp.lt.s32.totalorder %s22, 1
      %s26 = scalar_select %p25, %s22, 1
      %s27 = ssub.s32 %s24, %s26
      %p28 = scmp.eq.s32.totalorder %s27, 0
      %s30 = sadd.s32 %s29, 1
      %s31 = scalar_select %p28, %s29, %s30
      %p34 = pneg %p28
      %p35 = scmp.eq.s32.totalorder %s15, 1
      %p36 = por %p34, %p35
      %p37 = scmp.ne.s32.totalorder %s29, %s32
      %p38 = scmp.eq.s32.totalorder %s15, 0
      %p39 = por %p37, %p38
      %p40 = scmp.ne.s32.totalorder %s29, %s32
      %p41 = scmp.eq.s32.totalorder %s20, 1
      %p42 = por %p40, %p41
      %p43 = scmp.ne.s32.totalorder %s32, %s33
      %p44 = scmp.eq.s32.totalorder %s20, 0
      %p45 = por %p43, %p44
      %p46 = scmp.ne.s32.totalorder %s32, %s33
      %p47 = scmp.eq.s32.totalorder %s21, 1
      %p48 = por %p46, %p47
      %p50 = scmp.ne.s32.totalorder %s33, %s49
      %p51 = scmp.eq.s32.totalorder %s21, 0
      %p52 = por %p50, %p51
      %p53 = scmp.lt.s32.totalorder %s15, 1
      %s54 = scalar_select %p53, %s15, 1
      %p55 = scmp.lt.s32.totalorder %s22, 1
      %s56 = scalar_select %p55, %s22, 1
      %s57 = ssub.s32 %s54, %s56
      %p58 = scmp.eq.s32.totalorder %s57, 0
      %s60 = sadd.s32 %s59, 1
      %s61 = scalar_select %p58, %s59, %s60
      %p64 = pneg %p58
      %p65 = scmp.eq.s32.totalorder %s15, 1
      %p66 = por %p64, %p65
      %p67 = scmp.ne.s32.totalorder %s59, %s62
      %p68 = scmp.eq.s32.totalorder %s15, 0
      %p69 = por %p67, %p68
      %p70 = scmp.ne.s32.totalorder %s59, %s62
      %p71 = scmp.eq.s32.totalorder %s20, 1
      %p72 = por %p70, %p71
      %p73 = scmp.ne.s32.totalorder %s62, %s63
      %p74 = scmp.eq.s32.totalorder %s20, 0
      %p75 = por %p73, %p74
      %p76 = scmp.ne.s32.totalorder %s62, %s63
      %p77 = scmp.eq.s32.totalorder %s21, 1
      %p78 = por %p76, %p77
      %p80 = scmp.ne.s32.totalorder %s63, %s79
      %p81 = scmp.eq.s32.totalorder %s21, 0
      %p82 = por %p80, %p81
      %s84 = sadd.s32 %s83, 1
      %p87 = scmp.eq.s32.totalorder %s15, 1
      %p88 = scmp.ne.s32.totalorder %s83, %s85
      %p89 = scmp.eq.s32.totalorder %s15, 0
      %p90 = por %p88, %p89
      %p91 = scmp.ne.s32.totalorder %s83, %s85
      %p92 = scmp.eq.s32.totalorder %s20, 1
      %p93 = por %p91, %p92
      %p94 = scmp.ne.s32.totalorder %s85, %s86
      %p95 = scmp.eq.s32.totalorder %s20, 0
      %p96 = por %p94, %p95
      %p97 = scmp.ne.s32.totalorder %s85, %s86
      %p98 = scmp.eq.s32.totalorder %s21, 1
      %p99 = por %p97, %p98
      %p101 = scmp.ne.s32.totalorder %s86, %s100
      %p102 = scmp.eq.s32.totalorder %s21, 0
      %p103 = por %p101, %p102
      %p104 = scmp.le.s32.totalorder 1, %s15
      %p105 = scmp.lt.s32.totalorder %s15, 3
      %p106 = pnand %p104, %p105
      %p107 = pneg %p106
      // Predicated region
      $region9: #{tpu_custom_call.1} parent=5 // pred_check
        _
      $region10: #{tpu_custom_call.1} parent=5 // pred_check_branch
        %109 = sbr.rel (%p106) target = $region12
      $region11: #{tpu_custom_call.1} parent=5 // pred_region
        %s110 = ssub.s32 %s15, 1
      $region12: #{tpu_custom_call.1} parent=5 // pred_fallthru
        _
      %p111 = scmp.lt.s32.totalorder %s15, 2
      // Predicated region
      $region13: #{tpu_custom_call.1} parent=5 // pred_check
        %p112 = pneg %p111
      $region14: #{tpu_custom_call.1} parent=5 // pred_check_branch
        %114 = sbr.rel (%p112) target = $region16
      $region15: #{tpu_custom_call.1} parent=5 // pred_region
        // Predicated region
        $region17: #{tpu_custom_call.1} parent=15 // pred_check
          %p115 = pneg %p39
        $region18: #{tpu_custom_call.1} parent=15 // pred_check_branch
          %117 = sbr.rel (%p115) target = $region20
        $region19: #{tpu_custom_call.1} parent=15 // pred_region
          %s118 = sand.u32 %s29, 1
          %s119 = scalar_lea.sflag [#allocation3], %s118
          %s120 = sand.u32 %s29, 1
          %s121 = smul.addr %s120, 8192
          %s122 = scalar_lea.vmem [#allocation2], %s121
          %p123 = scmp.lt.s32.totalorder %s15, 1
          %s124 = scalar_select %p123, %s15, 1
          %s125 = smul.u32 128, %s124
          %127 = vsyncadd %s119, 0
          %s128 = smul.addr %s125, 8
          %s129 = smul.addr %s128, 8
          %s130 = scalar_lea.hbm %s0, %s129
          %s131 = sshll.u32 %s130, 4
          %s132 = int_to_ptr.hbm [resolvable:$true] %s131
          %s133 = sshll.u32 %s122, 4
          %s134 = int_to_ptr.vmem [resolvable:$true] %s133
          %139 = dma.hbm_to_vmem [thread:$0]  %s132, 131072, %s134, %s119, 1024, 1024, 64
        $region20: #{tpu_custom_call.1} parent=15 // pred_fallthru
          _
        // Predicated region
        $region21: #{tpu_custom_call.1} parent=15 // pred_check
          %p140 = pneg %p69
        $region22: #{tpu_custom_call.1} parent=15 // pred_check_branch
          %142 = sbr.rel (%p140) target = $region24
        $region23: #{tpu_custom_call.1} parent=15 // pred_region
          %s143 = sand.u32 %s59, 1
          %s144 = scalar_lea.sflag [#allocation6], %s143
          %s145 = sand.u32 %s59, 1
          %s146 = smul.addr %s145, 8192
          %s147 = scalar_lea.vmem [#allocation5], %s146
          %p148 = scmp.lt.s32.totalorder %s15, 1
          %s149 = scalar_select %p148, %s15, 1
          %s150 = smul.u32 128, %s149
          %152 = vsyncadd %s144, 0
          %s153 = smul.addr %s150, 8
          %s154 = smul.addr %s153, 8
          %s155 = scalar_lea.hbm %s1, %s154
          %s156 = sshll.u32 %s155, 4
          %s157 = int_to_ptr.hbm [resolvable:$true] %s156
          %s158 = sshll.u32 %s147, 4
          %s159 = int_to_ptr.vmem [resolvable:$true] %s158
          %164 = dma.hbm_to_vmem [thread:$0]  %s157, 131072, %s159, %s144, 1024, 1024, 64
        $region24: #{tpu_custom_call.1} parent=15 // pred_fallthru
          _
      $region16: #{tpu_custom_call.1} parent=5 // pred_fallthru
        _
      %p165 = scmp.le.s32.totalorder 1, %s15
      %p166 = scmp.lt.s32.totalorder %s15, 3
      %p167 = pnand %p165, %p166
      %p168 = pneg %p167
      // Predicated region
      $region25: #{tpu_custom_call.1} parent=5 // pred_check
        _
      $region26: #{tpu_custom_call.1} parent=5 // pred_check_branch
        %170 = sbr.rel (%p167) target = $region28
      $region27: #{tpu_custom_call.1} parent=5 // pred_region
        %s171 = ssub.s32 %s15, 1
        %s172 = sand.u32 %s32, 1
        %s173 = scalar_lea.sflag [#allocation3], %s172
        %s174 = sand.u32 %s32, 1
        %s175 = smul.addr %s174, 8192
        %s176 = scalar_lea.vmem [#allocation2], %s175
        // Predicated region
        $region29: #{tpu_custom_call.1} parent=27 // pred_check
          %p177 = pneg %p45
        $region30: #{tpu_custom_call.1} parent=27 // pred_check_branch
          %179 = sbr.rel (%p177) target = $region32
        $region31: #{tpu_custom_call.1} parent=27 // pred_region
          %181 = dma.done %s173, 131072
        $region32: #{tpu_custom_call.1} parent=27 // pred_fallthru
          _
        %s182 = sand.u32 %s62, 1
        %s183 = scalar_lea.sflag [#allocation6], %s182
        %s184 = sand.u32 %s62, 1
        %s185 = smul.addr %s184, 8192
        %s186 = scalar_lea.vmem [#allocation5], %s185
        // Predicated region
        $region33: #{tpu_custom_call.1} parent=27 // pred_check
          %p187 = pneg %p75
        $region34: #{tpu_custom_call.1} parent=27 // pred_check_branch
          %189 = sbr.rel (%p187) target = $region36
        $region35: #{tpu_custom_call.1} parent=27 // pred_region
          %191 = dma.done %s183, 131072
        $region36: #{tpu_custom_call.1} parent=27 // pred_fallthru
          _
        %s192 = sand.u32 %s32, 1
        %s193 = scalar_lea.sflag [#allocation3], %s192
        %s194 = sand.u32 %s32, 1
        %s195 = smul.addr %s194, 8192
        %s196 = scalar_lea.vmem [#allocation2], %s195
        %p197 = pneg %p45
        %p198 = pneg %p42
        %s199 = sand.u32 %s62, 1
        %s200 = scalar_lea.sflag [#allocation6], %s199
        %s201 = sand.u32 %s62, 1
        %s202 = smul.addr %s201, 8192
        %s203 = scalar_lea.vmem [#allocation5], %s202
        %p204 = pneg %p75
        %p205 = pneg %p72
        %p206 = pneg %p96
        %p207 = pneg %p93
        %p208 = scmp.lt.s32.totalorder %s20, 1
        %s209 = scalar_select %p208, %s20, 1
        %s210 = smul.u32 128, %s209
        %p211 = scmp.lt.s32.totalorder %s20, 1
        %s212 = scalar_select %p211, %s20, 1
        %s213 = smul.u32 128, %s212
        %p214 = scmp.eq.s32.totalorder %s20, 0
        // Predicated region
        $region37: #{tpu_custom_call.1} parent=27 // pred_check
          %p215 = pneg %p214
        $region38: #{tpu_custom_call.1} parent=27 // pred_check_branch
          %217 = sbr.rel (%p215) target = $region40
        $region39: #{tpu_custom_call.1} parent=27 // pred_region
          %218 = vst [vmem:[#allocation7] sm:$0xff] 0.0
          %219 = vst [vmem:[#allocation7 + $0x8] sm:$0xff] 0.0
          %220 = vst [vmem:[#allocation7 + $0x10] sm:$0xff] 0.0
          %221 = vst [vmem:[#allocation7 + $0x18] sm:$0xff] 0.0
          %222 = vst [vmem:[#allocation7 + $0x20] sm:$0xff] 0.0
          %223 = vst [vmem:[#allocation7 + $0x28] sm:$0xff] 0.0
          %224 = vst [vmem:[#allocation7 + $0x30] sm:$0xff] 0.0
          %225 = vst [vmem:[#allocation7 + $0x38] sm:$0xff] 0.0
        $region40: #{tpu_custom_call.1} parent=27 // pred_fallthru
          _
        %v226 = vld [vmem:[%s176] sm:$0xff]
        %v227 = vld [vmem:[%s176 + $0x8] sm:$0xff]
        %v228 = vld [vmem:[%s176 + $0x10] sm:$0xff]
        %v229 = vld [vmem:[%s176 + $0x18] sm:$0xff]
        %v230 = vld [vmem:[%s176 + $0x20] sm:$0xff]
        %v231 = vld [vmem:[%s176 + $0x28] sm:$0xff]
        %v232 = vld [vmem:[%s176 + $0x30] sm:$0xff]
        %v233 = vld [vmem:[%s176 + $0x38] sm:$0xff]
        %v234 = vld [vmem:[%s176 + $0x40] sm:$0xff]
        %v235 = vld [vmem:[%s176 + $0x48] sm:$0xff]
        %v236 = vld [vmem:[%s176 + $0x50] sm:$0xff]
        %v237 = vld [vmem:[%s176 + $0x58] sm:$0xff]
        %v238 = vld [vmem:[%s176 + $0x60] sm:$0xff]
        %v239 = vld [vmem:[%s176 + $0x68] sm:$0xff]
        %v240 = vld [vmem:[%s176 + $0x70] sm:$0xff]
        %v241 = vld [vmem:[%s176 + $0x78] sm:$0xff]
        %v242 = vld [vmem:[%s176 + $0x80] sm:$0xff]
        %v243 = vld [vmem:[%s176 + $0x88] sm:$0xff]
        %v244 = vld [vmem:[%s176 + $0x90] sm:$0xff]
        %v245 = vld [vmem:[%s176 + $0x98] sm:$0xff]
        %v246 = vld [vmem:[%s176 + $0xa0] sm:$0xff]
        %v247 = vld [vmem:[%s176 + $0xa8] sm:$0xff]
        %v248 = vld [vmem:[%s176 + $0xb0] sm:$0xff]
        %v249 = vld [vmem:[%s176 + $0xb8] sm:$0xff]
        %v250 = vld [vmem:[%s176 + $0xc0] sm:$0xff]
        %v251 = vld [vmem:[%s176 + $0xc8] sm:$0xff]
        %v252 = vld [vmem:[%s176 + $0xd0] sm:$0xff]
        %v253 = vld [vmem:[%s176 + $0xd8] sm:$0xff]
        %v254 = vld [vmem:[%s176 + $0xe0] sm:$0xff]
        %v255 = vld [vmem:[%s176 + $0xe8] sm:$0xff]
        %v256 = vld [vmem:[%s176 + $0xf0] sm:$0xff]
        %v257 = vld [vmem:[%s176 + $0xf8] sm:$0xff]
        %v258 = vld [vmem:[%s176 + $0x100] sm:$0xff]
        %v259 = vld [vmem:[%s176 + $0x108] sm:$0xff]
        %v260 = vld [vmem:[%s176 + $0x110] sm:$0xff]
        %v261 = vld [vmem:[%s176 + $0x118] sm:$0xff]
        %v262 = vld [vmem:[%s176 + $0x120] sm:$0xff]
        %v263 = vld [vmem:[%s176 + $0x128] sm:$0xff]
        %v264 = vld [vmem:[%s176 + $0x130] sm:$0xff]
        %v265 = vld [vmem:[%s176 + $0x138] sm:$0xff]
        %v266 = vld [vmem:[%s176 + $0x140] sm:$0xff]
        %v267 = vld [vmem:[%s176 + $0x148] sm:$0xff]
        %v268 = vld [vmem:[%s176 + $0x150] sm:$0xff]
        %v269 = vld [vmem:[%s176 + $0x158] sm:$0xff]
        %v270 = vld [vmem:[%s176 + $0x160] sm:$0xff]
        %v271 = vld [vmem:[%s176 + $0x168] sm:$0xff]
        %v272 = vld [vmem:[%s176 + $0x170] sm:$0xff]
        %v273 = vld [vmem:[%s176 + $0x178] sm:$0xff]
        %v274 = vld [vmem:[%s176 + $0x180] sm:$0xff]
        %v275 = vld [vmem:[%s176 + $0x188] sm:$0xff]
        %v276 = vld [vmem:[%s176 + $0x190] sm:$0xff]
        %v277 = vld [vmem:[%s176 + $0x198] sm:$0xff]
        %v278 = vld [vmem:[%s176 + $0x1a0] sm:$0xff]
        %v279 = vld [vmem:[%s176 + $0x1a8] sm:$0xff]
        %v280 = vld [vmem:[%s176 + $0x1b0] sm:$0xff]
        %v281 = vld [vmem:[%s176 + $0x1b8] sm:$0xff]
        %v282 = vld [vmem:[%s176 + $0x1c0] sm:$0xff]
        %v283 = vld [vmem:[%s176 + $0x1c8] sm:$0xff]
        %v284 = vld [vmem:[%s176 + $0x1d0] sm:$0xff]
        %v285 = vld [vmem:[%s176 + $0x1d8] sm:$0xff]
        %v286 = vld [vmem:[%s176 + $0x1e0] sm:$0xff]
        %v287 = vld [vmem:[%s176 + $0x1e8] sm:$0xff]
        %v288 = vld [vmem:[%s176 + $0x1f0] sm:$0xff]
        %v289 = vld [vmem:[%s176 + $0x1f8] sm:$0xff]
        %v290 = vld [vmem:[%s176 + $0x200] sm:$0xff]
        %v291 = vld [vmem:[%s176 + $0x208] sm:$0xff]
        %v292 = vld [vmem:[%s176 + $0x210] sm:$0xff]
        %v293 = vld [vmem:[%s176 + $0x218] sm:$0xff]
        %v294 = vld [vmem:[%s176 + $0x220] sm:$0xff]
        %v295 = vld [vmem:[%s176 + $0x228] sm:$0xff]
        %v296 = vld [vmem:[%s176 + $0x230] sm:$0xff]
        %v297 = vld [vmem:[%s176 + $0x238] sm:$0xff]
        %v298 = vld [vmem:[%s176 + $0x240] sm:$0xff]
        %v299 = vld [vmem:[%s176 + $0x248] sm:$0xff]
        %v300 = vld [vmem:[%s176 + $0x250] sm:$0xff]
        %v301 = vld [vmem:[%s176 + $0x258] sm:$0xff]
        %v302 = vld [vmem:[%s176 + $0x260] sm:$0xff]
        %v303 = vld [vmem:[%s176 + $0x268] sm:$0xff]
        %v304 = vld [vmem:[%s176 + $0x270] sm:$0xff]
        %v305 = vld [vmem:[%s176 + $0x278] sm:$0xff]
        %v306 = vld [vmem:[%s176 + $0x280] sm:$0xff]
        %v307 = vld [vmem:[%s176 + $0x288] sm:$0xff]
        %v308 = vld [vmem:[%s176 + $0x290] sm:$0xff]
        %v309 = vld [vmem:[%s176 + $0x298] sm:$0xff]
        %v310 = vld [vmem:[%s176 + $0x2a0] sm:$0xff]
        %v311 = vld [vmem:[%s176 + $0x2a8] sm:$0xff]
        %v312 = vld [vmem:[%s176 + $0x2b0] sm:$0xff]
        %v313 = vld [vmem:[%s176 + $0x2b8] sm:$0xff]
        %v314 = vld [vmem:[%s176 + $0x2c0] sm:$0xff]
        %v315 = vld [vmem:[%s176 + $0x2c8] sm:$0xff]
        %v316 = vld [vmem:[%s176 + $0x2d0] sm:$0xff]
        %v317 = vld [vmem:[%s176 + $0x2d8] sm:$0xff]
        %v318 = vld [vmem:[%s176 + $0x2e0] sm:$0xff]
        %v319 = vld [vmem:[%s176 + $0x2e8] sm:$0xff]
        %v320 = vld [vmem:[%s176 + $0x2f0] sm:$0xff]
        %v321 = vld [vmem:[%s176 + $0x2f8] sm:$0xff]
        %v322 = vld [vmem:[%s176 + $0x300] sm:$0xff]
        %v323 = vld [vmem:[%s176 + $0x308] sm:$0xff]
        %v324 = vld [vmem:[%s176 + $0x310] sm:$0xff]
        %v325 = vld [vmem:[%s176 + $0x318] sm:$0xff]
        %v326 = vld [vmem:[%s176 + $0x320] sm:$0xff]
        %v327 = vld [vmem:[%s176 + $0x328] sm:$0xff]
        %v328 = vld [vmem:[%s176 + $0x330] sm:$0xff]
        %v329 = vld [vmem:[%s176 + $0x338] sm:$0xff]
        %v330 = vld [vmem:[%s176 + $0x340] sm:$0xff]
        %v331 = vld [vmem:[%s176 + $0x348] sm:$0xff]
        %v332 = vld [vmem:[%s176 + $0x350] sm:$0xff]
        %v333 = vld [vmem:[%s176 + $0x358] sm:$0xff]
        %v334 = vld [vmem:[%s176 + $0x360] sm:$0xff]
        %v335 = vld [vmem:[%s176 + $0x368] sm:$0xff]
        %v336 = vld [vmem:[%s176 + $0x370] sm:$0xff]
        %v337 = vld [vmem:[%s176 + $0x378] sm:$0xff]
        %v338 = vld [vmem:[%s176 + $0x380] sm:$0xff]
        %v339 = vld [vmem:[%s176 + $0x388] sm:$0xff]
        %v340 = vld [vmem:[%s176 + $0x390] sm:$0xff]
        %v341 = vld [vmem:[%s176 + $0x398] sm:$0xff]
        %v342 = vld [vmem:[%s176 + $0x3a0] sm:$0xff]
        %v343 = vld [vmem:[%s176 + $0x3a8] sm:$0xff]
        %v344 = vld [vmem:[%s176 + $0x3b0] sm:$0xff]
        %v345 = vld [vmem:[%s176 + $0x3b8] sm:$0xff]
        %v346 = vld [vmem:[%s176 + $0x3c0] sm:$0xff]
        %v347 = vld [vmem:[%s176 + $0x3c8] sm:$0xff]
        %v348 = vld [vmem:[%s176 + $0x3d0] sm:$0xff]
        %v349 = vld [vmem:[%s176 + $0x3d8] sm:$0xff]
        %v350 = vld [vmem:[%s176 + $0x3e0] sm:$0xff]
        %v351 = vld [vmem:[%s176 + $0x3e8] sm:$0xff]
        %v352 = vld [vmem:[%s176 + $0x3f0] sm:$0xff]
        %v353 = vld [vmem:[%s176 + $0x3f8] sm:$0xff]
        %v354 = vld [vmem:[%s176 + $0x400] sm:$0xff]
        %v355 = vld [vmem:[%s176 + $0x408] sm:$0xff]
        %v356 = vld [vmem:[%s176 + $0x410] sm:$0xff]
        %v357 = vld [vmem:[%s176 + $0x418] sm:$0xff]
        %v358 = vld [vmem:[%s176 + $0x420] sm:$0xff]
        %v359 = vld [vmem:[%s176 + $0x428] sm:$0xff]
        %v360 = vld [vmem:[%s176 + $0x430] sm:$0xff]
        %v361 = vld [vmem:[%s176 + $0x438] sm:$0xff]
        %v362 = vld [vmem:[%s176 + $0x440] sm:$0xff]
        %v363 = vld [vmem:[%s176 + $0x448] sm:$0xff]
        %v364 = vld [vmem:[%s176 + $0x450] sm:$0xff]
        %v365 = vld [vmem:[%s176 + $0x458] sm:$0xff]
        %v366 = vld [vmem:[%s176 + $0x460] sm:$0xff]
        %v367 = vld [vmem:[%s176 + $0x468] sm:$0xff]
        %v368 = vld [vmem:[%s176 + $0x470] sm:$0xff]
        %v369 = vld [vmem:[%s176 + $0x478] sm:$0xff]
        %v370 = vld [vmem:[%s176 + $0x480] sm:$0xff]
        %v371 = vld [vmem:[%s176 + $0x488] sm:$0xff]
        %v372 = vld [vmem:[%s176 + $0x490] sm:$0xff]
        %v373 = vld [vmem:[%s176 + $0x498] sm:$0xff]
        %v374 = vld [vmem:[%s176 + $0x4a0] sm:$0xff]
        %v375 = vld [vmem:[%s176 + $0x4a8] sm:$0xff]
        %v376 = vld [vmem:[%s176 + $0x4b0] sm:$0xff]
        %v377 = vld [vmem:[%s176 + $0x4b8] sm:$0xff]
        %v378 = vld [vmem:[%s176 + $0x4c0] sm:$0xff]
        %v379 = vld [vmem:[%s176 + $0x4c8] sm:$0xff]
        %v380 = vld [vmem:[%s176 + $0x4d0] sm:$0xff]
        %v381 = vld [vmem:[%s176 + $0x4d8] sm:$0xff]
        %v382 = vld [vmem:[%s176 + $0x4e0] sm:$0xff]
        %v383 = vld [vmem:[%s176 + $0x4e8] sm:$0xff]
        %v384 = vld [vmem:[%s176 + $0x4f0] sm:$0xff]
        %v385 = vld [vmem:[%s176 + $0x4f8] sm:$0xff]
        %v386 = vld [vmem:[%s176 + $0x500] sm:$0xff]
        %v387 = vld [vmem:[%s176 + $0x508] sm:$0xff]
        %v388 = vld [vmem:[%s176 + $0x510] sm:$0xff]
        %v389 = vld [vmem:[%s176 + $0x518] sm:$0xff]
        %v390 = vld [vmem:[%s176 + $0x520] sm:$0xff]
        %v391 = vld [vmem:[%s176 + $0x528] sm:$0xff]
        %v392 = vld [vmem:[%s176 + $0x530] sm:$0xff]
        %v393 = vld [vmem:[%s176 + $0x538] sm:$0xff]
        %v394 = vld [vmem:[%s176 + $0x540] sm:$0xff]
        %v395 = vld [vmem:[%s176 + $0x548] sm:$0xff]
        %v396 = vld [vmem:[%s176 + $0x550] sm:$0xff]
        %v397 = vld [vmem:[%s176 + $0x558] sm:$0xff]
        %v398 = vld [vmem:[%s176 + $0x560] sm:$0xff]
        %v399 = vld [vmem:[%s176 + $0x568] sm:$0xff]
        %v400 = vld [vmem:[%s176 + $0x570] sm:$0xff]
        %v401 = vld [vmem:[%s176 + $0x578] sm:$0xff]
        %v402 = vld [vmem:[%s176 + $0x580] sm:$0xff]
        %v403 = vld [vmem:[%s176 + $0x588] sm:$0xff]
        %v404 = vld [vmem:[%s176 + $0x590] sm:$0xff]
        %v405 = vld [vmem:[%s176 + $0x598] sm:$0xff]
        %v406 = vld [vmem:[%s176 + $0x5a0] sm:$0xff]
        %v407 = vld [vmem:[%s176 + $0x5a8] sm:$0xff]
        %v408 = vld [vmem:[%s176 + $0x5b0] sm:$0xff]
        %v409 = vld [vmem:[%s176 + $0x5b8] sm:$0xff]
        %v410 = vld [vmem:[%s176 + $0x5c0] sm:$0xff]
        %v411 = vld [vmem:[%s176 + $0x5c8] sm:$0xff]
        %v412 = vld [vmem:[%s176 + $0x5d0] sm:$0xff]
        %v413 = vld [vmem:[%s176 + $0x5d8] sm:$0xff]
        %v414 = vld [vmem:[%s176 + $0x5e0] sm:$0xff]
        %v415 = vld [vmem:[%s176 + $0x5e8] sm:$0xff]
        %v416 = vld [vmem:[%s176 + $0x5f0] sm:$0xff]
        %v417 = vld [vmem:[%s176 + $0x5f8] sm:$0xff]
        %v418 = vld [vmem:[%s176 + $0x600] sm:$0xff]
        %v419 = vld [vmem:[%s176 + $0x608] sm:$0xff]
        %v420 = vld [vmem:[%s176 + $0x610] sm:$0xff]
        %v421 = vld [vmem:[%s176 + $0x618] sm:$0xff]
        %v422 = vld [vmem:[%s176 + $0x620] sm:$0xff]
        %v423 = vld [vmem:[%s176 + $0x628] sm:$0xff]
        %v424 = vld [vmem:[%s176 + $0x630] sm:$0xff]
        %v425 = vld [vmem:[%s176 + $0x638] sm:$0xff]
        %v426 = vld [vmem:[%s176 + $0x640] sm:$0xff]
        %v427 = vld [vmem:[%s176 + $0x648] sm:$0xff]
        %v428 = vld [vmem:[%s176 + $0x650] sm:$0xff]
        %v429 = vld [vmem:[%s176 + $0x658] sm:$0xff]
        %v430 = vld [vmem:[%s176 + $0x660] sm:$0xff]
        %v431 = vld [vmem:[%s176 + $0x668] sm:$0xff]
        %v432 = vld [vmem:[%s176 + $0x670] sm:$0xff]
        %v433 = vld [vmem:[%s176 + $0x678] sm:$0xff]
        %v434 = vld [vmem:[%s176 + $0x680] sm:$0xff]
        %v435 = vld [vmem:[%s176 + $0x688] sm:$0xff]
        %v436 = vld [vmem:[%s176 + $0x690] sm:$0xff]
        %v437 = vld [vmem:[%s176 + $0x698] sm:$0xff]
        %v438 = vld [vmem:[%s176 + $0x6a0] sm:$0xff]
        %v439 = vld [vmem:[%s176 + $0x6a8] sm:$0xff]
        %v440 = vld [vmem:[%s176 + $0x6b0] sm:$0xff]
        %v441 = vld [vmem:[%s176 + $0x6b8] sm:$0xff]
        %v442 = vld [vmem:[%s176 + $0x6c0] sm:$0xff]
        %v443 = vld [vmem:[%s176 + $0x6c8] sm:$0xff]
        %v444 = vld [vmem:[%s176 + $0x6d0] sm:$0xff]
        %v445 = vld [vmem:[%s176 + $0x6d8] sm:$0xff]
        %v446 = vld [vmem:[%s176 + $0x6e0] sm:$0xff]
        %v447 = vld [vmem:[%s176 + $0x6e8] sm:$0xff]
        %v448 = vld [vmem:[%s176 + $0x6f0] sm:$0xff]
        %v449 = vld [vmem:[%s176 + $0x6f8] sm:$0xff]
        %v450 = vld [vmem:[%s176 + $0x700] sm:$0xff]
        %v451 = vld [vmem:[%s176 + $0x708] sm:$0xff]
        %v452 = vld [vmem:[%s176 + $0x710] sm:$0xff]
        %v453 = vld [vmem:[%s176 + $0x718] sm:$0xff]
        %v454 = vld [vmem:[%s176 + $0x720] sm:$0xff]
        %v455 = vld [vmem:[%s176 + $0x728] sm:$0xff]
        %v456 = vld [vmem:[%s176 + $0x730] sm:$0xff]
        %v457 = vld [vmem:[%s176 + $0x738] sm:$0xff]
        %v458 = vld [vmem:[%s176 + $0x740] sm:$0xff]
        %v459 = vld [vmem:[%s176 + $0x748] sm:$0xff]
        %v460 = vld [vmem:[%s176 + $0x750] sm:$0xff]
        %v461 = vld [vmem:[%s176 + $0x758] sm:$0xff]
        %v462 = vld [vmem:[%s176 + $0x760] sm:$0xff]
        %v463 = vld [vmem:[%s176 + $0x768] sm:$0xff]
        %v464 = vld [vmem:[%s176 + $0x770] sm:$0xff]
        %v465 = vld [vmem:[%s176 + $0x778] sm:$0xff]
        %v466 = vld [vmem:[%s176 + $0x780] sm:$0xff]
        %v467 = vld [vmem:[%s176 + $0x788] sm:$0xff]
        %v468 = vld [vmem:[%s176 + $0x790] sm:$0xff]
        %v469 = vld [vmem:[%s176 + $0x798] sm:$0xff]
        %v470 = vld [vmem:[%s176 + $0x7a0] sm:$0xff]
        %v471 = vld [vmem:[%s176 + $0x7a8] sm:$0xff]
        %v472 = vld [vmem:[%s176 + $0x7b0] sm:$0xff]
        %v473 = vld [vmem:[%s176 + $0x7b8] sm:$0xff]
        %v474 = vld [vmem:[%s176 + $0x7c0] sm:$0xff]
        %v475 = vld [vmem:[%s176 + $0x7c8] sm:$0xff]
        %v476 = vld [vmem:[%s176 + $0x7d0] sm:$0xff]
        %v477 = vld [vmem:[%s176 + $0x7d8] sm:$0xff]
        %v478 = vld [vmem:[%s176 + $0x7e0] sm:$0xff]
        %v479 = vld [vmem:[%s176 + $0x7e8] sm:$0xff]
        %v480 = vld [vmem:[%s176 + $0x7f0] sm:$0xff]
        %v481 = vld [vmem:[%s176 + $0x7f8] sm:$0xff]
        %v482 = vld [vmem:[%s176 + $0x800] sm:$0xff]
        %v483 = vld [vmem:[%s176 + $0x808] sm:$0xff]
        %v484 = vld [vmem:[%s176 + $0x810] sm:$0xff]
        %v485 = vld [vmem:[%s176 + $0x818] sm:$0xff]
        %v486 = vld [vmem:[%s176 + $0x820] sm:$0xff]
        %v487 = vld [vmem:[%s176 + $0x828] sm:$0xff]
        %v488 = vld [vmem:[%s176 + $0x830] sm:$0xff]
        %v489 = vld [vmem:[%s176 + $0x838] sm:$0xff]
        %v490 = vld [vmem:[%s176 + $0x840] sm:$0xff]
        %v491 = vld [vmem:[%s176 + $0x848] sm:$0xff]
        %v492 = vld [vmem:[%s176 + $0x850] sm:$0xff]
        %v493 = vld [vmem:[%s176 + $0x858] sm:$0xff]
        %v494 = vld [vmem:[%s176 + $0x860] sm:$0xff]
        %v495 = vld [vmem:[%s176 + $0x868] sm:$0xff]
        %v496 = vld [vmem:[%s176 + $0x870] sm:$0xff]
        %v497 = vld [vmem:[%s176 + $0x878] sm:$0xff]
        %v498 = vld [vmem:[%s176 + $0x880] sm:$0xff]
        %v499 = vld [vmem:[%s176 + $0x888] sm:$0xff]
        %v500 = vld [vmem:[%s176 + $0x890] sm:$0xff]
        %v501 = vld [vmem:[%s176 + $0x898] sm:$0xff]
        %v502 = vld [vmem:[%s176 + $0x8a0] sm:$0xff]
        %v503 = vld [vmem:[%s176 + $0x8a8] sm:$0xff]
        %v504 = vld [vmem:[%s176 + $0x8b0] sm:$0xff]
        %v505 = vld [vmem:[%s176 + $0x8b8] sm:$0xff]
        %v506 = vld [vmem:[%s176 + $0x8c0] sm:$0xff]
        %v507 = vld [vmem:[%s176 + $0x8c8] sm:$0xff]
        %v508 = vld [vmem:[%s176 + $0x8d0] sm:$0xff]
        %v509 = vld [vmem:[%s176 + $0x8d8] sm:$0xff]
        %v510 = vld [vmem:[%s176 + $0x8e0] sm:$0xff]
        %v511 = vld [vmem:[%s176 + $0x8e8] sm:$0xff]
        %v512 = vld [vmem:[%s176 + $0x8f0] sm:$0xff]
        %v513 = vld [vmem:[%s176 + $0x8f8] sm:$0xff]
        %v514 = vld [vmem:[%s176 + $0x900] sm:$0xff]
        %v515 = vld [vmem:[%s176 + $0x908] sm:$0xff]
        %v516 = vld [vmem:[%s176 + $0x910] sm:$0xff]
        %v517 = vld [vmem:[%s176 + $0x918] sm:$0xff]
        %v518 = vld [vmem:[%s176 + $0x920] sm:$0xff]
        %v519 = vld [vmem:[%s176 + $0x928] sm:$0xff]
        %v520 = vld [vmem:[%s176 + $0x930] sm:$0xff]
        %v521 = vld [vmem:[%s176 + $0x938] sm:$0xff]
        %v522 = vld [vmem:[%s176 + $0x940] sm:$0xff]
        %v523 = vld [vmem:[%s176 + $0x948] sm:$0xff]
        %v524 = vld [vmem:[%s176 + $0x950] sm:$0xff]
        %v525 = vld [vmem:[%s176 + $0x958] sm:$0xff]
        %v526 = vld [vmem:[%s176 + $0x960] sm:$0xff]
        %v527 = vld [vmem:[%s176 + $0x968] sm:$0xff]
        %v528 = vld [vmem:[%s176 + $0x970] sm:$0xff]
        %v529 = vld [vmem:[%s176 + $0x978] sm:$0xff]
        %v530 = vld [vmem:[%s176 + $0x980] sm:$0xff]
        %v531 = vld [vmem:[%s176 + $0x988] sm:$0xff]
        %v532 = vld [vmem:[%s176 + $0x990] sm:$0xff]
        %v533 = vld [vmem:[%s176 + $0x998] sm:$0xff]
        %v534 = vld [vmem:[%s176 + $0x9a0] sm:$0xff]
        %v535 = vld [vmem:[%s176 + $0x9a8] sm:$0xff]
        %v536 = vld [vmem:[%s176 + $0x9b0] sm:$0xff]
        %v537 = vld [vmem:[%s176 + $0x9b8] sm:$0xff]
        %v538 = vld [vmem:[%s176 + $0x9c0] sm:$0xff]
        %v539 = vld [vmem:[%s176 + $0x9c8] sm:$0xff]
        %v540 = vld [vmem:[%s176 + $0x9d0] sm:$0xff]
        %v541 = vld [vmem:[%s176 + $0x9d8] sm:$0xff]
        %v542 = vld [vmem:[%s176 + $0x9e0] sm:$0xff]
        %v543 = vld [vmem:[%s176 + $0x9e8] sm:$0xff]
        %v544 = vld [vmem:[%s176 + $0x9f0] sm:$0xff]
        %v545 = vld [vmem:[%s176 + $0x9f8] sm:$0xff]
        %v546 = vld [vmem:[%s176 + $0xa00] sm:$0xff]
        %v547 = vld [vmem:[%s176 + $0xa08] sm:$0xff]
        %v548 = vld [vmem:[%s176 + $0xa10] sm:$0xff]
        %v549 = vld [vmem:[%s176 + $0xa18] sm:$0xff]
        %v550 = vld [vmem:[%s176 + $0xa20] sm:$0xff]
        %v551 = vld [vmem:[%s176 + $0xa28] sm:$0xff]
        %v552 = vld [vmem:[%s176 + $0xa30] sm:$0xff]
        %v553 = vld [vmem:[%s176 + $0xa38] sm:$0xff]
        %v554 = vld [vmem:[%s176 + $0xa40] sm:$0xff]
        %v555 = vld [vmem:[%s176 + $0xa48] sm:$0xff]
        %v556 = vld [vmem:[%s176 + $0xa50] sm:$0xff]
        %v557 = vld [vmem:[%s176 + $0xa58] sm:$0xff]
        %v558 = vld [vmem:[%s176 + $0xa60] sm:$0xff]
        %v559 = vld [vmem:[%s176 + $0xa68] sm:$0xff]
        %v560 = vld [vmem:[%s176 + $0xa70] sm:$0xff]
        %v561 = vld [vmem:[%s176 + $0xa78] sm:$0xff]
        %v562 = vld [vmem:[%s176 + $0xa80] sm:$0xff]
        %v563 = vld [vmem:[%s176 + $0xa88] sm:$0xff]
        %v564 = vld [vmem:[%s176 + $0xa90] sm:$0xff]
        %v565 = vld [vmem:[%s176 + $0xa98] sm:$0xff]
        %v566 = vld [vmem:[%s176 + $0xaa0] sm:$0xff]
        %v567 = vld [vmem:[%s176 + $0xaa8] sm:$0xff]
        %v568 = vld [vmem:[%s176 + $0xab0] sm:$0xff]
        %v569 = vld [vmem:[%s176 + $0xab8] sm:$0xff]
        %v570 = vld [vmem:[%s176 + $0xac0] sm:$0xff]
        %v571 = vld [vmem:[%s176 + $0xac8] sm:$0xff]
        %v572 = vld [vmem:[%s176 + $0xad0] sm:$0xff]
        %v573 = vld [vmem:[%s176 + $0xad8] sm:$0xff]
        %v574 = vld [vmem:[%s176 + $0xae0] sm:$0xff]
        %v575 = vld [vmem:[%s176 + $0xae8] sm:$0xff]
        %v576 = vld [vmem:[%s176 + $0xaf0] sm:$0xff]
        %v577 = vld [vmem:[%s176 + $0xaf8] sm:$0xff]
        %v578 = vld [vmem:[%s176 + $0xb00] sm:$0xff]
        %v579 = vld [vmem:[%s176 + $0xb08] sm:$0xff]
        %v580 = vld [vmem:[%s176 + $0xb10] sm:$0xff]
        %v581 = vld [vmem:[%s176 + $0xb18] sm:$0xff]
        %v582 = vld [vmem:[%s176 + $0xb20] sm:$0xff]
        %v583 = vld [vmem:[%s176 + $0xb28] sm:$0xff]
        %v584 = vld [vmem:[%s176 + $0xb30] sm:$0xff]
        %v585 = vld [vmem:[%s176 + $0xb38] sm:$0xff]
        %v586 = vld [vmem:[%s176 + $0xb40] sm:$0xff]
        %v587 = vld [vmem:[%s176 + $0xb48] sm:$0xff]
        %v588 = vld [vmem:[%s176 + $0xb50] sm:$0xff]
        %v589 = vld [vmem:[%s176 + $0xb58] sm:$0xff]
        %v590 = vld [vmem:[%s176 + $0xb60] sm:$0xff]
        %v591 = vld [vmem:[%s176 + $0xb68] sm:$0xff]
        %v592 = vld [vmem:[%s176 + $0xb70] sm:$0xff]
        %v593 = vld [vmem:[%s176 + $0xb78] sm:$0xff]
        %v594 = vld [vmem:[%s176 + $0xb80] sm:$0xff]
        %v595 = vld [vmem:[%s176 + $0xb88] sm:$0xff]
        %v596 = vld [vmem:[%s176 + $0xb90] sm:$0xff]
        %v597 = vld [vmem:[%s176 + $0xb98] sm:$0xff]
        %v598 = vld [vmem:[%s176 + $0xba0] sm:$0xff]
        %v599 = vld [vmem:[%s176 + $0xba8] sm:$0xff]
        %v600 = vld [vmem:[%s176 + $0xbb0] sm:$0xff]
        %v601 = vld [vmem:[%s176 + $0xbb8] sm:$0xff]
        %v602 = vld [vmem:[%s176 + $0xbc0] sm:$0xff]
        %v603 = vld [vmem:[%s176 + $0xbc8] sm:$0xff]
        %v604 = vld [vmem:[%s176 + $0xbd0] sm:$0xff]
        %v605 = vld [vmem:[%s176 + $0xbd8] sm:$0xff]
        %v606 = vld [vmem:[%s176 + $0xbe0] sm:$0xff]
        %v607 = vld [vmem:[%s176 + $0xbe8] sm:$0xff]
        %v608 = vld [vmem:[%s176 + $0xbf0] sm:$0xff]
        %v609 = vld [vmem:[%s176 + $0xbf8] sm:$0xff]
        %v610 = vld [vmem:[%s176 + $0xc00] sm:$0xff]
        %v611 = vld [vmem:[%s176 + $0xc08] sm:$0xff]
        %v612 = vld [vmem:[%s176 + $0xc10] sm:$0xff]
        %v613 = vld [vmem:[%s176 + $0xc18] sm:$0xff]
        %v614 = vld [vmem:[%s176 + $0xc20] sm:$0xff]
        %v615 = vld [vmem:[%s176 + $0xc28] sm:$0xff]
        %v616 = vld [vmem:[%s176 + $0xc30] sm:$0xff]
        %v617 = vld [vmem:[%s176 + $0xc38] sm:$0xff]
        %v618 = vld [vmem:[%s176 + $0xc40] sm:$0xff]
        %v619 = vld [vmem:[%s176 + $0xc48] sm:$0xff]
        %v620 = vld [vmem:[%s176 + $0xc50] sm:$0xff]
        %v621 = vld [vmem:[%s176 + $0xc58] sm:$0xff]
        %v622 = vld [vmem:[%s176 + $0xc60] sm:$0xff]
        %v623 = vld [vmem:[%s176 + $0xc68] sm:$0xff]
        %v624 = vld [vmem:[%s176 + $0xc70] sm:$0xff]
        %v625 = vld [vmem:[%s176 + $0xc78] sm:$0xff]
        %v626 = vld [vmem:[%s176 + $0xc80] sm:$0xff]
        %v627 = vld [vmem:[%s176 + $0xc88] sm:$0xff]
        %v628 = vld [vmem:[%s176 + $0xc90] sm:$0xff]
        %v629 = vld [vmem:[%s176 + $0xc98] sm:$0xff]
        %v630 = vld [vmem:[%s176 + $0xca0] sm:$0xff]
        %v631 = vld [vmem:[%s176 + $0xca8] sm:$0xff]
        %v632 = vld [vmem:[%s176 + $0xcb0] sm:$0xff]
        %v633 = vld [vmem:[%s176 + $0xcb8] sm:$0xff]
        %v634 = vld [vmem:[%s176 + $0xcc0] sm:$0xff]
        %v635 = vld [vmem:[%s176 + $0xcc8] sm:$0xff]
        %v636 = vld [vmem:[%s176 + $0xcd0] sm:$0xff]
        %v637 = vld [vmem:[%s176 + $0xcd8] sm:$0xff]
        %v638 = vld [vmem:[%s176 + $0xce0] sm:$0xff]
        %v639 = vld [vmem:[%s176 + $0xce8] sm:$0xff]
        %v640 = vld [vmem:[%s176 + $0xcf0] sm:$0xff]
        %v641 = vld [vmem:[%s176 + $0xcf8] sm:$0xff]
        %v642 = vld [vmem:[%s176 + $0xd00] sm:$0xff]
        %v643 = vld [vmem:[%s176 + $0xd08] sm:$0xff]
        %v644 = vld [vmem:[%s176 + $0xd10] sm:$0xff]
        %v645 = vld [vmem:[%s176 + $0xd18] sm:$0xff]
        %v646 = vld [vmem:[%s176 + $0xd20] sm:$0xff]
        %v647 = vld [vmem:[%s176 + $0xd28] sm:$0xff]
        %v648 = vld [vmem:[%s176 + $0xd30] sm:$0xff]
        %v649 = vld [vmem:[%s176 + $0xd38] sm:$0xff]
        %v650 = vld [vmem:[%s176 + $0xd40] sm:$0xff]
        %v651 = vld [vmem:[%s176 + $0xd48] sm:$0xff]
        %v652 = vld [vmem:[%s176 + $0xd50] sm:$0xff]
        %v653 = vld [vmem:[%s176 + $0xd58] sm:$0xff]
        %v654 = vld [vmem:[%s176 + $0xd60] sm:$0xff]
        %v655 = vld [vmem:[%s176 + $0xd68] sm:$0xff]
        %v656 = vld [vmem:[%s176 + $0xd70] sm:$0xff]
        %v657 = vld [vmem:[%s176 + $0xd78] sm:$0xff]
        %v658 = vld [vmem:[%s176 + $0xd80] sm:$0xff]
        %v659 = vld [vmem:[%s176 + $0xd88] sm:$0xff]
        %v660 = vld [vmem:[%s176 + $0xd90] sm:$0xff]
        %v661 = vld [vmem:[%s176 + $0xd98] sm:$0xff]
        %v662 = vld [vmem:[%s176 + $0xda0] sm:$0xff]
        %v663 = vld [vmem:[%s176 + $0xda8] sm:$0xff]
        %v664 = vld [vmem:[%s176 + $0xdb0] sm:$0xff]
        %v665 = vld [vmem:[%s176 + $0xdb8] sm:$0xff]
        %v666 = vld [vmem:[%s176 + $0xdc0] sm:$0xff]
        %v667 = vld [vmem:[%s176 + $0xdc8] sm:$0xff]
        %v668 = vld [vmem:[%s176 + $0xdd0] sm:$0xff]
        %v669 = vld [vmem:[%s176 + $0xdd8] sm:$0xff]
        %v670 = vld [vmem:[%s176 + $0xde0] sm:$0xff]
        %v671 = vld [vmem:[%s176 + $0xde8] sm:$0xff]
        %v672 = vld [vmem:[%s176 + $0xdf0] sm:$0xff]
        %v673 = vld [vmem:[%s176 + $0xdf8] sm:$0xff]
        %v674 = vld [vmem:[%s176 + $0xe00] sm:$0xff]
        %v675 = vld [vmem:[%s176 + $0xe08] sm:$0xff]
        %v676 = vld [vmem:[%s176 + $0xe10] sm:$0xff]
        %v677 = vld [vmem:[%s176 + $0xe18] sm:$0xff]
        %v678 = vld [vmem:[%s176 + $0xe20] sm:$0xff]
        %v679 = vld [vmem:[%s176 + $0xe28] sm:$0xff]
        %v680 = vld [vmem:[%s176 + $0xe30] sm:$0xff]
        %v681 = vld [vmem:[%s176 + $0xe38] sm:$0xff]
        %v682 = vld [vmem:[%s176 + $0xe40] sm:$0xff]
        %v683 = vld [vmem:[%s176 + $0xe48] sm:$0xff]
        %v684 = vld [vmem:[%s176 + $0xe50] sm:$0xff]
        %v685 = vld [vmem:[%s176 + $0xe58] sm:$0xff]
        %v686 = vld [vmem:[%s176 + $0xe60] sm:$0xff]
        %v687 = vld [vmem:[%s176 + $0xe68] sm:$0xff]
        %v688 = vld [vmem:[%s176 + $0xe70] sm:$0xff]
        %v689 = vld [vmem:[%s176 + $0xe78] sm:$0xff]
        %v690 = vld [vmem:[%s176 + $0xe80] sm:$0xff]
        %v691 = vld [vmem:[%s176 + $0xe88] sm:$0xff]
        %v692 = vld [vmem:[%s176 + $0xe90] sm:$0xff]
        %v693 = vld [vmem:[%s176 + $0xe98] sm:$0xff]
        %v694 = vld [vmem:[%s176 + $0xea0] sm:$0xff]
        %v695 = vld [vmem:[%s176 + $0xea8] sm:$0xff]
        %v696 = vld [vmem:[%s176 + $0xeb0] sm:$0xff]
        %v697 = vld [vmem:[%s176 + $0xeb8] sm:$0xff]
        %v698 = vld [vmem:[%s176 + $0xec0] sm:$0xff]
        %v699 = vld [vmem:[%s176 + $0xec8] sm:$0xff]
        %v700 = vld [vmem:[%s176 + $0xed0] sm:$0xff]
        %v701 = vld [vmem:[%s176 + $0xed8] sm:$0xff]
        %v702 = vld [vmem:[%s176 + $0xee0] sm:$0xff]
        %v703 = vld [vmem:[%s176 + $0xee8] sm:$0xff]
        %v704 = vld [vmem:[%s176 + $0xef0] sm:$0xff]
        %v705 = vld [vmem:[%s176 + $0xef8] sm:$0xff]
        %v706 = vld [vmem:[%s176 + $0xf00] sm:$0xff]
        %v707 = vld [vmem:[%s176 + $0xf08] sm:$0xff]
        %v708 = vld [vmem:[%s176 + $0xf10] sm:$0xff]
        %v709 = vld [vmem:[%s176 + $0xf18] sm:$0xff]
        %v710 = vld [vmem:[%s176 + $0xf20] sm:$0xff]
        %v711 = vld [vmem:[%s176 + $0xf28] sm:$0xff]
        %v712 = vld [vmem:[%s176 + $0xf30] sm:$0xff]
        %v713 = vld [vmem:[%s176 + $0xf38] sm:$0xff]
        %v714 = vld [vmem:[%s176 + $0xf40] sm:$0xff]
        %v715 = vld [vmem:[%s176 + $0xf48] sm:$0xff]
        %v716 = vld [vmem:[%s176 + $0xf50] sm:$0xff]
        %v717 = vld [vmem:[%s176 + $0xf58] sm:$0xff]
        %v718 = vld [vmem:[%s176 + $0xf60] sm:$0xff]
        %v719 = vld [vmem:[%s176 + $0xf68] sm:$0xff]
        %v720 = vld [vmem:[%s176 + $0xf70] sm:$0xff]
        %v721 = vld [vmem:[%s176 + $0xf78] sm:$0xff]
        %v722 = vld [vmem:[%s176 + $0xf80] sm:$0xff]
        %v723 = vld [vmem:[%s176 + $0xf88] sm:$0xff]
        %v724 = vld [vmem:[%s176 + $0xf90] sm:$0xff]
        %v725 = vld [vmem:[%s176 + $0xf98] sm:$0xff]
        %v726 = vld [vmem:[%s176 + $0xfa0] sm:$0xff]
        %v727 = vld [vmem:[%s176 + $0xfa8] sm:$0xff]
        %v728 = vld [vmem:[%s176 + $0xfb0] sm:$0xff]
        %v729 = vld [vmem:[%s176 + $0xfb8] sm:$0xff]
        %v730 = vld [vmem:[%s176 + $0xfc0] sm:$0xff]
        %v731 = vld [vmem:[%s176 + $0xfc8] sm:$0xff]
        %v732 = vld [vmem:[%s176 + $0xfd0] sm:$0xff]
        %v733 = vld [vmem:[%s176 + $0xfd8] sm:$0xff]
        %v734 = vld [vmem:[%s176 + $0xfe0] sm:$0xff]
        %v735 = vld [vmem:[%s176 + $0xfe8] sm:$0xff]
        %v736 = vld [vmem:[%s176 + $0xff0] sm:$0xff]
        %v737 = vld [vmem:[%s176 + $0xff8] sm:$0xff]
        %v738 = vld [vmem:[%s176 + $0x1000] sm:$0xff]
        %v739 = vld [vmem:[%s176 + $0x1008] sm:$0xff]
        %v740 = vld [vmem:[%s176 + $0x1010] sm:$0xff]
        %v741 = vld [vmem:[%s176 + $0x1018] sm:$0xff]
        %v742 = vld [vmem:[%s176 + $0x1020] sm:$0xff]
        %v743 = vld [vmem:[%s176 + $0x1028] sm:$0xff]
        %v744 = vld [vmem:[%s176 + $0x1030] sm:$0xff]
        %v745 = vld [vmem:[%s176 + $0x1038] sm:$0xff]
        %v746 = vld [vmem:[%s176 + $0x1040] sm:$0xff]
        %v747 = vld [vmem:[%s176 + $0x1048] sm:$0xff]
        %v748 = vld [vmem:[%s176 + $0x1050] sm:$0xff]
        %v749 = vld [vmem:[%s176 + $0x1058] sm:$0xff]
        %v750 = vld [vmem:[%s176 + $0x1060] sm:$0xff]
        %v751 = vld [vmem:[%s176 + $0x1068] sm:$0xff]
        %v752 = vld [vmem:[%s176 + $0x1070] sm:$0xff]
        %v753 = vld [vmem:[%s176 + $0x1078] sm:$0xff]
        %v754 = vld [vmem:[%s176 + $0x1080] sm:$0xff]
        %v755 = vld [vmem:[%s176 + $0x1088] sm:$0xff]
        %v756 = vld [vmem:[%s176 + $0x1090] sm:$0xff]
        %v757 = vld [vmem:[%s176 + $0x1098] sm:$0xff]
        %v758 = vld [vmem:[%s176 + $0x10a0] sm:$0xff]
        %v759 = vld [vmem:[%s176 + $0x10a8] sm:$0xff]
        %v760 = vld [vmem:[%s176 + $0x10b0] sm:$0xff]
        %v761 = vld [vmem:[%s176 + $0x10b8] sm:$0xff]
        %v762 = vld [vmem:[%s176 + $0x10c0] sm:$0xff]
        %v763 = vld [vmem:[%s176 + $0x10c8] sm:$0xff]
        %v764 = vld [vmem:[%s176 + $0x10d0] sm:$0xff]
        %v765 = vld [vmem:[%s176 + $0x10d8] sm:$0xff]
        %v766 = vld [vmem:[%s176 + $0x10e0] sm:$0xff]
        %v767 = vld [vmem:[%s176 + $0x10e8] sm:$0xff]
        %v768 = vld [vmem:[%s176 + $0x10f0] sm:$0xff]
        %v769 = vld [vmem:[%s176 + $0x10f8] sm:$0xff]
        %v770 = vld [vmem:[%s176 + $0x1100] sm:$0xff]
        %v771 = vld [vmem:[%s176 + $0x1108] sm:$0xff]
        %v772 = vld [vmem:[%s176 + $0x1110] sm:$0xff]
        %v773 = vld [vmem:[%s176 + $0x1118] sm:$0xff]
        %v774 = vld [vmem:[%s176 + $0x1120] sm:$0xff]
        %v775 = vld [vmem:[%s176 + $0x1128] sm:$0xff]
        %v776 = vld [vmem:[%s176 + $0x1130] sm:$0xff]
        %v777 = vld [vmem:[%s176 + $0x1138] sm:$0xff]
        %v778 = vld [vmem:[%s176 + $0x1140] sm:$0xff]
        %v779 = vld [vmem:[%s176 + $0x1148] sm:$0xff]
        %v780 = vld [vmem:[%s176 + $0x1150] sm:$0xff]
        %v781 = vld [vmem:[%s176 + $0x1158] sm:$0xff]
        %v782 = vld [vmem:[%s176 + $0x1160] sm:$0xff]
        %v783 = vld [vmem:[%s176 + $0x1168] sm:$0xff]
        %v784 = vld [vmem:[%s176 + $0x1170] sm:$0xff]
        %v785 = vld [vmem:[%s176 + $0x1178] sm:$0xff]
        %v786 = vld [vmem:[%s176 + $0x1180] sm:$0xff]
        %v787 = vld [vmem:[%s176 + $0x1188] sm:$0xff]
        %v788 = vld [vmem:[%s176 + $0x1190] sm:$0xff]
        %v789 = vld [vmem:[%s176 + $0x1198] sm:$0xff]
        %v790 = vld [vmem:[%s176 + $0x11a0] sm:$0xff]
        %v791 = vld [vmem:[%s176 + $0x11a8] sm:$0xff]
        %v792 = vld [vmem:[%s176 + $0x11b0] sm:$0xff]
        %v793 = vld [vmem:[%s176 + $0x11b8] sm:$0xff]
        %v794 = vld [vmem:[%s176 + $0x11c0] sm:$0xff]
        %v795 = vld [vmem:[%s176 + $0x11c8] sm:$0xff]
        %v796 = vld [vmem:[%s176 + $0x11d0] sm:$0xff]
        %v797 = vld [vmem:[%s176 + $0x11d8] sm:$0xff]
        %v798 = vld [vmem:[%s176 + $0x11e0] sm:$0xff]
        %v799 = vld [vmem:[%s176 + $0x11e8] sm:$0xff]
        %v800 = vld [vmem:[%s176 + $0x11f0] sm:$0xff]
        %v801 = vld [vmem:[%s176 + $0x11f8] sm:$0xff]
        %v802 = vld [vmem:[%s176 + $0x1200] sm:$0xff]
        %v803 = vld [vmem:[%s176 + $0x1208] sm:$0xff]
        %v804 = vld [vmem:[%s176 + $0x1210] sm:$0xff]
        %v805 = vld [vmem:[%s176 + $0x1218] sm:$0xff]
        %v806 = vld [vmem:[%s176 + $0x1220] sm:$0xff]
        %v807 = vld [vmem:[%s176 + $0x1228] sm:$0xff]
        %v808 = vld [vmem:[%s176 + $0x1230] sm:$0xff]
        %v809 = vld [vmem:[%s176 + $0x1238] sm:$0xff]
        %v810 = vld [vmem:[%s176 + $0x1240] sm:$0xff]
        %v811 = vld [vmem:[%s176 + $0x1248] sm:$0xff]
        %v812 = vld [vmem:[%s176 + $0x1250] sm:$0xff]
        %v813 = vld [vmem:[%s176 + $0x1258] sm:$0xff]
        %v814 = vld [vmem:[%s176 + $0x1260] sm:$0xff]
        %v815 = vld [vmem:[%s176 + $0x1268] sm:$0xff]
        %v816 = vld [vmem:[%s176 + $0x1270] sm:$0xff]
        %v817 = vld [vmem:[%s176 + $0x1278] sm:$0xff]
        %v818 = vld [vmem:[%s176 + $0x1280] sm:$0xff]
        %v819 = vld [vmem:[%s176 + $0x1288] sm:$0xff]
        %v820 = vld [vmem:[%s176 + $0x1290] sm:$0xff]
        %v821 = vld [vmem:[%s176 + $0x1298] sm:$0xff]
        %v822 = vld [vmem:[%s176 + $0x12a0] sm:$0xff]
        %v823 = vld [vmem:[%s176 + $0x12a8] sm:$0xff]
        %v824 = vld [vmem:[%s176 + $0x12b0] sm:$0xff]
        %v825 = vld [vmem:[%s176 + $0x12b8] sm:$0xff]
        %v826 = vld [vmem:[%s176 + $0x12c0] sm:$0xff]
        %v827 = vld [vmem:[%s176 + $0x12c8] sm:$0xff]
        %v828 = vld [vmem:[%s176 + $0x12d0] sm:$0xff]
        %v829 = vld [vmem:[%s176 + $0x12d8] sm:$0xff]
        %v830 = vld [vmem:[%s176 + $0x12e0] sm:$0xff]
        %v831 = vld [vmem:[%s176 + $0x12e8] sm:$0xff]
        %v832 = vld [vmem:[%s176 + $0x12f0] sm:$0xff]
        %v833 = vld [vmem:[%s176 + $0x12f8] sm:$0xff]
        %v834 = vld [vmem:[%s176 + $0x1300] sm:$0xff]
        %v835 = vld [vmem:[%s176 + $0x1308] sm:$0xff]
        %v836 = vld [vmem:[%s176 + $0x1310] sm:$0xff]
        %v837 = vld [vmem:[%s176 + $0x1318] sm:$0xff]
        %v838 = vld [vmem:[%s176 + $0x1320] sm:$0xff]
        %v839 = vld [vmem:[%s176 + $0x1328] sm:$0xff]
        %v840 = vld [vmem:[%s176 + $0x1330] sm:$0xff]
        %v841 = vld [vmem:[%s176 + $0x1338] sm:$0xff]
        %v842 = vld [vmem:[%s176 + $0x1340] sm:$0xff]
        %v843 = vld [vmem:[%s176 + $0x1348] sm:$0xff]
        %v844 = vld [vmem:[%s176 + $0x1350] sm:$0xff]
        %v845 = vld [vmem:[%s176 + $0x1358] sm:$0xff]
        %v846 = vld [vmem:[%s176 + $0x1360] sm:$0xff]
        %v847 = vld [vmem:[%s176 + $0x1368] sm:$0xff]
        %v848 = vld [vmem:[%s176 + $0x1370] sm:$0xff]
        %v849 = vld [vmem:[%s176 + $0x1378] sm:$0xff]
        %v850 = vld [vmem:[%s176 + $0x1380] sm:$0xff]
        %v851 = vld [vmem:[%s176 + $0x1388] sm:$0xff]
        %v852 = vld [vmem:[%s176 + $0x1390] sm:$0xff]
        %v853 = vld [vmem:[%s176 + $0x1398] sm:$0xff]
        %v854 = vld [vmem:[%s176 + $0x13a0] sm:$0xff]
        %v855 = vld [vmem:[%s176 + $0x13a8] sm:$0xff]
        %v856 = vld [vmem:[%s176 + $0x13b0] sm:$0xff]
        %v857 = vld [vmem:[%s176 + $0x13b8] sm:$0xff]
        %v858 = vld [vmem:[%s176 + $0x13c0] sm:$0xff]
        %v859 = vld [vmem:[%s176 + $0x13c8] sm:$0xff]
        %v860 = vld [vmem:[%s176 + $0x13d0] sm:$0xff]
        %v861 = vld [vmem:[%s176 + $0x13d8] sm:$0xff]
        %v862 = vld [vmem:[%s176 + $0x13e0] sm:$0xff]
        %v863 = vld [vmem:[%s176 + $0x13e8] sm:$0xff]
        %v864 = vld [vmem:[%s176 + $0x13f0] sm:$0xff]
        %v865 = vld [vmem:[%s176 + $0x13f8] sm:$0xff]
        %v866 = vld [vmem:[%s176 + $0x1400] sm:$0xff]
        %v867 = vld [vmem:[%s176 + $0x1408] sm:$0xff]
        %v868 = vld [vmem:[%s176 + $0x1410] sm:$0xff]
        %v869 = vld [vmem:[%s176 + $0x1418] sm:$0xff]
        %v870 = vld [vmem:[%s176 + $0x1420] sm:$0xff]
        %v871 = vld [vmem:[%s176 + $0x1428] sm:$0xff]
        %v872 = vld [vmem:[%s176 + $0x1430] sm:$0xff]
        %v873 = vld [vmem:[%s176 + $0x1438] sm:$0xff]
        %v874 = vld [vmem:[%s176 + $0x1440] sm:$0xff]
        %v875 = vld [vmem:[%s176 + $0x1448] sm:$0xff]
        %v876 = vld [vmem:[%s176 + $0x1450] sm:$0xff]
        %v877 = vld [vmem:[%s176 + $0x1458] sm:$0xff]
        %v878 = vld [vmem:[%s176 + $0x1460] sm:$0xff]
        %v879 = vld [vmem:[%s176 + $0x1468] sm:$0xff]
        %v880 = vld [vmem:[%s176 + $0x1470] sm:$0xff]
        %v881 = vld [vmem:[%s176 + $0x1478] sm:$0xff]
        %v882 = vld [vmem:[%s176 + $0x1480] sm:$0xff]
        %v883 = vld [vmem:[%s176 + $0x1488] sm:$0xff]
        %v884 = vld [vmem:[%s176 + $0x1490] sm:$0xff]
        %v885 = vld [vmem:[%s176 + $0x1498] sm:$0xff]
        %v886 = vld [vmem:[%s176 + $0x14a0] sm:$0xff]
        %v887 = vld [vmem:[%s176 + $0x14a8] sm:$0xff]
        %v888 = vld [vmem:[%s176 + $0x14b0] sm:$0xff]
        %v889 = vld [vmem:[%s176 + $0x14b8] sm:$0xff]
        %v890 = vld [vmem:[%s176 + $0x14c0] sm:$0xff]
        %v891 = vld [vmem:[%s176 + $0x14c8] sm:$0xff]
        %v892 = vld [vmem:[%s176 + $0x14d0] sm:$0xff]
        %v893 = vld [vmem:[%s176 + $0x14d8] sm:$0xff]
        %v894 = vld [vmem:[%s176 + $0x14e0] sm:$0xff]
        %v895 = vld [vmem:[%s176 + $0x14e8] sm:$0xff]
        %v896 = vld [vmem:[%s176 + $0x14f0] sm:$0xff]
        %v897 = vld [vmem:[%s176 + $0x14f8] sm:$0xff]
        %v898 = vld [vmem:[%s176 + $0x1500] sm:$0xff]
        %v899 = vld [vmem:[%s176 + $0x1508] sm:$0xff]
        %v900 = vld [vmem:[%s176 + $0x1510] sm:$0xff]
        %v901 = vld [vmem:[%s176 + $0x1518] sm:$0xff]
        %v902 = vld [vmem:[%s176 + $0x1520] sm:$0xff]
        %v903 = vld [vmem:[%s176 + $0x1528] sm:$0xff]
        %v904 = vld [vmem:[%s176 + $0x1530] sm:$0xff]
        %v905 = vld [vmem:[%s176 + $0x1538] sm:$0xff]
        %v906 = vld [vmem:[%s176 + $0x1540] sm:$0xff]
        %v907 = vld [vmem:[%s176 + $0x1548] sm:$0xff]
        %v908 = vld [vmem:[%s176 + $0x1550] sm:$0xff]
        %v909 = vld [vmem:[%s176 + $0x1558] sm:$0xff]
        %v910 = vld [vmem:[%s176 + $0x1560] sm:$0xff]
        %v911 = vld [vmem:[%s176 + $0x1568] sm:$0xff]
        %v912 = vld [vmem:[%s176 + $0x1570] sm:$0xff]
        %v913 = vld [vmem:[%s176 + $0x1578] sm:$0xff]
        %v914 = vld [vmem:[%s176 + $0x1580] sm:$0xff]
        %v915 = vld [vmem:[%s176 + $0x1588] sm:$0xff]
        %v916 = vld [vmem:[%s176 + $0x1590] sm:$0xff]
        %v917 = vld [vmem:[%s176 + $0x1598] sm:$0xff]
        %v918 = vld [vmem:[%s176 + $0x15a0] sm:$0xff]
        %v919 = vld [vmem:[%s176 + $0x15a8] sm:$0xff]
        %v920 = vld [vmem:[%s176 + $0x15b0] sm:$0xff]
        %v921 = vld [vmem:[%s176 + $0x15b8] sm:$0xff]
        %v922 = vld [vmem:[%s176 + $0x15c0] sm:$0xff]
        %v923 = vld [vmem:[%s176 + $0x15c8] sm:$0xff]
        %v924 = vld [vmem:[%s176 + $0x15d0] sm:$0xff]
        %v925 = vld [vmem:[%s176 + $0x15d8] sm:$0xff]
        %v926 = vld [vmem:[%s176 + $0x15e0] sm:$0xff]
        %v927 = vld [vmem:[%s176 + $0x15e8] sm:$0xff]
        %v928 = vld [vmem:[%s176 + $0x15f0] sm:$0xff]
        %v929 = vld [vmem:[%s176 + $0x15f8] sm:$0xff]
        %v930 = vld [vmem:[%s176 + $0x1600] sm:$0xff]
        %v931 = vld [vmem:[%s176 + $0x1608] sm:$0xff]
        %v932 = vld [vmem:[%s176 + $0x1610] sm:$0xff]
        %v933 = vld [vmem:[%s176 + $0x1618] sm:$0xff]
        %v934 = vld [vmem:[%s176 + $0x1620] sm:$0xff]
        %v935 = vld [vmem:[%s176 + $0x1628] sm:$0xff]
        %v936 = vld [vmem:[%s176 + $0x1630] sm:$0xff]
        %v937 = vld [vmem:[%s176 + $0x1638] sm:$0xff]
        %v938 = vld [vmem:[%s176 + $0x1640] sm:$0xff]
        %v939 = vld [vmem:[%s176 + $0x1648] sm:$0xff]
        %v940 = vld [vmem:[%s176 + $0x1650] sm:$0xff]
        %v941 = vld [vmem:[%s176 + $0x1658] sm:$0xff]
        %v942 = vld [vmem:[%s176 + $0x1660] sm:$0xff]
        %v943 = vld [vmem:[%s176 + $0x1668] sm:$0xff]
        %v944 = vld [vmem:[%s176 + $0x1670] sm:$0xff]
        %v945 = vld [vmem:[%s176 + $0x1678] sm:$0xff]
        %v946 = vld [vmem:[%s176 + $0x1680] sm:$0xff]
        %v947 = vld [vmem:[%s176 + $0x1688] sm:$0xff]
        %v948 = vld [vmem:[%s176 + $0x1690] sm:$0xff]
        %v949 = vld [vmem:[%s176 + $0x1698] sm:$0xff]
        %v950 = vld [vmem:[%s176 + $0x16a0] sm:$0xff]
        %v951 = vld [vmem:[%s176 + $0x16a8] sm:$0xff]
        %v952 = vld [vmem:[%s176 + $0x16b0] sm:$0xff]
        %v953 = vld [vmem:[%s176 + $0x16b8] sm:$0xff]
        %v954 = vld [vmem:[%s176 + $0x16c0] sm:$0xff]
        %v955 = vld [vmem:[%s176 + $0x16c8] sm:$0xff]
        %v956 = vld [vmem:[%s176 + $0x16d0] sm:$0xff]
        %v957 = vld [vmem:[%s176 + $0x16d8] sm:$0xff]
        %v958 = vld [vmem:[%s176 + $0x16e0] sm:$0xff]
        %v959 = vld [vmem:[%s176 + $0x16e8] sm:$0xff]
        %v960 = vld [vmem:[%s176 + $0x16f0] sm:$0xff]
        %v961 = vld [vmem:[%s176 + $0x16f8] sm:$0xff]
        %v962 = vld [vmem:[%s176 + $0x1700] sm:$0xff]
        %v963 = vld [vmem:[%s176 + $0x1708] sm:$0xff]
        %v964 = vld [vmem:[%s176 + $0x1710] sm:$0xff]
        %v965 = vld [vmem:[%s176 + $0x1718] sm:$0xff]
        %v966 = vld [vmem:[%s176 + $0x1720] sm:$0xff]
        %v967 = vld [vmem:[%s176 + $0x1728] sm:$0xff]
        %v968 = vld [vmem:[%s176 + $0x1730] sm:$0xff]
        %v969 = vld [vmem:[%s176 + $0x1738] sm:$0xff]
        %v970 = vld [vmem:[%s176 + $0x1740] sm:$0xff]
        %v971 = vld [vmem:[%s176 + $0x1748] sm:$0xff]
        %v972 = vld [vmem:[%s176 + $0x1750] sm:$0xff]
        %v973 = vld [vmem:[%s176 + $0x1758] sm:$0xff]
        %v974 = vld [vmem:[%s176 + $0x1760] sm:$0xff]
        %v975 = vld [vmem:[%s176 + $0x1768] sm:$0xff]
        %v976 = vld [vmem:[%s176 + $0x1770] sm:$0xff]
        %v977 = vld [vmem:[%s176 + $0x1778] sm:$0xff]
        %v978 = vld [vmem:[%s176 + $0x1780] sm:$0xff]
        %v979 = vld [vmem:[%s176 + $0x1788] sm:$0xff]
        %v980 = vld [vmem:[%s176 + $0x1790] sm:$0xff]
        %v981 = vld [vmem:[%s176 + $0x1798] sm:$0xff]
        %v982 = vld [vmem:[%s176 + $0x17a0] sm:$0xff]
        %v983 = vld [vmem:[%s176 + $0x17a8] sm:$0xff]
        %v984 = vld [vmem:[%s176 + $0x17b0] sm:$0xff]
        %v985 = vld [vmem:[%s176 + $0x17b8] sm:$0xff]
        %v986 = vld [vmem:[%s176 + $0x17c0] sm:$0xff]
        %v987 = vld [vmem:[%s176 + $0x17c8] sm:$0xff]
        %v988 = vld [vmem:[%s176 + $0x17d0] sm:$0xff]
        %v989 = vld [vmem:[%s176 + $0x17d8] sm:$0xff]
        %v990 = vld [vmem:[%s176 + $0x17e0] sm:$0xff]
        %v991 = vld [vmem:[%s176 + $0x17e8] sm:$0xff]
        %v992 = vld [vmem:[%s176 + $0x17f0] sm:$0xff]
        %v993 = vld [vmem:[%s176 + $0x17f8] sm:$0xff]
        %v994 = vld [vmem:[%s176 + $0x1800] sm:$0xff]
        %v995 = vld [vmem:[%s176 + $0x1808] sm:$0xff]
        %v996 = vld [vmem:[%s176 + $0x1810] sm:$0xff]
        %v997 = vld [vmem:[%s176 + $0x1818] sm:$0xff]
        %v998 = vld [vmem:[%s176 + $0x1820] sm:$0xff]
        %v999 = vld [vmem:[%s176 + $0x1828] sm:$0xff]
        %v1000 = vld [vmem:[%s176 + $0x1830] sm:$0xff]
        %v1001 = vld [vmem:[%s176 + $0x1838] sm:$0xff]
        %v1002 = vld [vmem:[%s176 + $0x1840] sm:$0xff]
        %v1003 = vld [vmem:[%s176 + $0x1848] sm:$0xff]
        %v1004 = vld [vmem:[%s176 + $0x1850] sm:$0xff]
        %v1005 = vld [vmem:[%s176 + $0x1858] sm:$0xff]
        %v1006 = vld [vmem:[%s176 + $0x1860] sm:$0xff]
        %v1007 = vld [vmem:[%s176 + $0x1868] sm:$0xff]
        %v1008 = vld [vmem:[%s176 + $0x1870] sm:$0xff]
        %v1009 = vld [vmem:[%s176 + $0x1878] sm:$0xff]
        %v1010 = vld [vmem:[%s176 + $0x1880] sm:$0xff]
        %v1011 = vld [vmem:[%s176 + $0x1888] sm:$0xff]
        %v1012 = vld [vmem:[%s176 + $0x1890] sm:$0xff]
        %v1013 = vld [vmem:[%s176 + $0x1898] sm:$0xff]
        %v1014 = vld [vmem:[%s176 + $0x18a0] sm:$0xff]
        %v1015 = vld [vmem:[%s176 + $0x18a8] sm:$0xff]
        %v1016 = vld [vmem:[%s176 + $0x18b0] sm:$0xff]
        %v1017 = vld [vmem:[%s176 + $0x18b8] sm:$0xff]
        %v1018 = vld [vmem:[%s176 + $0x18c0] sm:$0xff]
        %v1019 = vld [vmem:[%s176 + $0x18c8] sm:$0xff]
        %v1020 = vld [vmem:[%s176 + $0x18d0] sm:$0xff]
        %v1021 = vld [vmem:[%s176 + $0x18d8] sm:$0xff]
        %v1022 = vld [vmem:[%s176 + $0x18e0] sm:$0xff]
        %v1023 = vld [vmem:[%s176 + $0x18e8] sm:$0xff]
        %v1024 = vld [vmem:[%s176 + $0x18f0] sm:$0xff]
        %v1025 = vld [vmem:[%s176 + $0x18f8] sm:$0xff]
        %v1026 = vld [vmem:[%s176 + $0x1900] sm:$0xff]
        %v1027 = vld [vmem:[%s176 + $0x1908] sm:$0xff]
        %v1028 = vld [vmem:[%s176 + $0x1910] sm:$0xff]
        %v1029 = vld [vmem:[%s176 + $0x1918] sm:$0xff]
        %v1030 = vld [vmem:[%s176 + $0x1920] sm:$0xff]
        %v1031 = vld [vmem:[%s176 + $0x1928] sm:$0xff]
        %v1032 = vld [vmem:[%s176 + $0x1930] sm:$0xff]
        %v1033 = vld [vmem:[%s176 + $0x1938] sm:$0xff]
        %v1034 = vld [vmem:[%s176 + $0x1940] sm:$0xff]
        %v1035 = vld [vmem:[%s176 + $0x1948] sm:$0xff]
        %v1036 = vld [vmem:[%s176 + $0x1950] sm:$0xff]
        %v1037 = vld [vmem:[%s176 + $0x1958] sm:$0xff]
        %v1038 = vld [vmem:[%s176 + $0x1960] sm:$0xff]
        %v1039 = vld [vmem:[%s176 + $0x1968] sm:$0xff]
        %v1040 = vld [vmem:[%s176 + $0x1970] sm:$0xff]
        %v1041 = vld [vmem:[%s176 + $0x1978] sm:$0xff]
        %v1042 = vld [vmem:[%s176 + $0x1980] sm:$0xff]
        %v1043 = vld [vmem:[%s176 + $0x1988] sm:$0xff]
        %v1044 = vld [vmem:[%s176 + $0x1990] sm:$0xff]
        %v1045 = vld [vmem:[%s176 + $0x1998] sm:$0xff]
        %v1046 = vld [vmem:[%s176 + $0x19a0] sm:$0xff]
        %v1047 = vld [vmem:[%s176 + $0x19a8] sm:$0xff]
        %v1048 = vld [vmem:[%s176 + $0x19b0] sm:$0xff]
        %v1049 = vld [vmem:[%s176 + $0x19b8] sm:$0xff]
        %v1050 = vld [vmem:[%s176 + $0x19c0] sm:$0xff]
        %v1051 = vld [vmem:[%s176 + $0x19c8] sm:$0xff]
        %v1052 = vld [vmem:[%s176 + $0x19d0] sm:$0xff]
        %v1053 = vld [vmem:[%s176 + $0x19d8] sm:$0xff]
        %v1054 = vld [vmem:[%s176 + $0x19e0] sm:$0xff]
        %v1055 = vld [vmem:[%s176 + $0x19e8] sm:$0xff]
        %v1056 = vld [vmem:[%s176 + $0x19f0] sm:$0xff]
        %v1057 = vld [vmem:[%s176 + $0x19f8] sm:$0xff]
        %v1058 = vld [vmem:[%s176 + $0x1a00] sm:$0xff]
        %v1059 = vld [vmem:[%s176 + $0x1a08] sm:$0xff]
        %v1060 = vld [vmem:[%s176 + $0x1a10] sm:$0xff]
        %v1061 = vld [vmem:[%s176 + $0x1a18] sm:$0xff]
        %v1062 = vld [vmem:[%s176 + $0x1a20] sm:$0xff]
        %v1063 = vld [vmem:[%s176 + $0x1a28] sm:$0xff]
        %v1064 = vld [vmem:[%s176 + $0x1a30] sm:$0xff]
        %v1065 = vld [vmem:[%s176 + $0x1a38] sm:$0xff]
        %v1066 = vld [vmem:[%s176 + $0x1a40] sm:$0xff]
        %v1067 = vld [vmem:[%s176 + $0x1a48] sm:$0xff]
        %v1068 = vld [vmem:[%s176 + $0x1a50] sm:$0xff]
        %v1069 = vld [vmem:[%s176 + $0x1a58] sm:$0xff]
        %v1070 = vld [vmem:[%s176 + $0x1a60] sm:$0xff]
        %v1071 = vld [vmem:[%s176 + $0x1a68] sm:$0xff]
        %v1072 = vld [vmem:[%s176 + $0x1a70] sm:$0xff]
        %v1073 = vld [vmem:[%s176 + $0x1a78] sm:$0xff]
        %v1074 = vld [vmem:[%s176 + $0x1a80] sm:$0xff]
        %v1075 = vld [vmem:[%s176 + $0x1a88] sm:$0xff]
        %v1076 = vld [vmem:[%s176 + $0x1a90] sm:$0xff]
        %v1077 = vld [vmem:[%s176 + $0x1a98] sm:$0xff]
        %v1078 = vld [vmem:[%s176 + $0x1aa0] sm:$0xff]
        %v1079 = vld [vmem:[%s176 + $0x1aa8] sm:$0xff]
        %v1080 = vld [vmem:[%s176 + $0x1ab0] sm:$0xff]
        %v1081 = vld [vmem:[%s176 + $0x1ab8] sm:$0xff]
        %v1082 = vld [vmem:[%s176 + $0x1ac0] sm:$0xff]
        %v1083 = vld [vmem:[%s176 + $0x1ac8] sm:$0xff]
        %v1084 = vld [vmem:[%s176 + $0x1ad0] sm:$0xff]
        %v1085 = vld [vmem:[%s176 + $0x1ad8] sm:$0xff]
        %v1086 = vld [vmem:[%s176 + $0x1ae0] sm:$0xff]
        %v1087 = vld [vmem:[%s176 + $0x1ae8] sm:$0xff]
        %v1088 = vld [vmem:[%s176 + $0x1af0] sm:$0xff]
        %v1089 = vld [vmem:[%s176 + $0x1af8] sm:$0xff]
        %v1090 = vld [vmem:[%s176 + $0x1b00] sm:$0xff]
        %v1091 = vld [vmem:[%s176 + $0x1b08] sm:$0xff]
        %v1092 = vld [vmem:[%s176 + $0x1b10] sm:$0xff]
        %v1093 = vld [vmem:[%s176 + $0x1b18] sm:$0xff]
        %v1094 = vld [vmem:[%s176 + $0x1b20] sm:$0xff]
        %v1095 = vld [vmem:[%s176 + $0x1b28] sm:$0xff]
        %v1096 = vld [vmem:[%s176 + $0x1b30] sm:$0xff]
        %v1097 = vld [vmem:[%s176 + $0x1b38] sm:$0xff]
        %v1098 = vld [vmem:[%s176 + $0x1b40] sm:$0xff]
        %v1099 = vld [vmem:[%s176 + $0x1b48] sm:$0xff]
        %v1100 = vld [vmem:[%s176 + $0x1b50] sm:$0xff]
        %v1101 = vld [vmem:[%s176 + $0x1b58] sm:$0xff]
        %v1102 = vld [vmem:[%s176 + $0x1b60] sm:$0xff]
        %v1103 = vld [vmem:[%s176 + $0x1b68] sm:$0xff]
        %v1104 = vld [vmem:[%s176 + $0x1b70] sm:$0xff]
        %v1105 = vld [vmem:[%s176 + $0x1b78] sm:$0xff]
        %v1106 = vld [vmem:[%s176 + $0x1b80] sm:$0xff]
        %v1107 = vld [vmem:[%s176 + $0x1b88] sm:$0xff]
        %v1108 = vld [vmem:[%s176 + $0x1b90] sm:$0xff]
        %v1109 = vld [vmem:[%s176 + $0x1b98] sm:$0xff]
        %v1110 = vld [vmem:[%s176 + $0x1ba0] sm:$0xff]
        %v1111 = vld [vmem:[%s176 + $0x1ba8] sm:$0xff]
        %v1112 = vld [vmem:[%s176 + $0x1bb0] sm:$0xff]
        %v1113 = vld [vmem:[%s176 + $0x1bb8] sm:$0xff]
        %v1114 = vld [vmem:[%s176 + $0x1bc0] sm:$0xff]
        %v1115 = vld [vmem:[%s176 + $0x1bc8] sm:$0xff]
        %v1116 = vld [vmem:[%s176 + $0x1bd0] sm:$0xff]
        %v1117 = vld [vmem:[%s176 + $0x1bd8] sm:$0xff]
        %v1118 = vld [vmem:[%s176 + $0x1be0] sm:$0xff]
        %v1119 = vld [vmem:[%s176 + $0x1be8] sm:$0xff]
        %v1120 = vld [vmem:[%s176 + $0x1bf0] sm:$0xff]
        %v1121 = vld [vmem:[%s176 + $0x1bf8] sm:$0xff]
        %v1122 = vld [vmem:[%s176 + $0x1c00] sm:$0xff]
        %v1123 = vld [vmem:[%s176 + $0x1c08] sm:$0xff]
        %v1124 = vld [vmem:[%s176 + $0x1c10] sm:$0xff]
        %v1125 = vld [vmem:[%s176 + $0x1c18] sm:$0xff]
        %v1126 = vld [vmem:[%s176 + $0x1c20] sm:$0xff]
        %v1127 = vld [vmem:[%s176 + $0x1c28] sm:$0xff]
        %v1128 = vld [vmem:[%s176 + $0x1c30] sm:$0xff]
        %v1129 = vld [vmem:[%s176 + $0x1c38] sm:$0xff]
        %v1130 = vld [vmem:[%s176 + $0x1c40] sm:$0xff]
        %v1131 = vld [vmem:[%s176 + $0x1c48] sm:$0xff]
        %v1132 = vld [vmem:[%s176 + $0x1c50] sm:$0xff]
        %v1133 = vld [vmem:[%s176 + $0x1c58] sm:$0xff]
        %v1134 = vld [vmem:[%s176 + $0x1c60] sm:$0xff]
        %v1135 = vld [vmem:[%s176 + $0x1c68] sm:$0xff]
        %v1136 = vld [vmem:[%s176 + $0x1c70] sm:$0xff]
        %v1137 = vld [vmem:[%s176 + $0x1c78] sm:$0xff]
        %v1138 = vld [vmem:[%s176 + $0x1c80] sm:$0xff]
        %v1139 = vld [vmem:[%s176 + $0x1c88] sm:$0xff]
        %v1140 = vld [vmem:[%s176 + $0x1c90] sm:$0xff]
        %v1141 = vld [vmem:[%s176 + $0x1c98] sm:$0xff]
        %v1142 = vld [vmem:[%s176 + $0x1ca0] sm:$0xff]
        %v1143 = vld [vmem:[%s176 + $0x1ca8] sm:$0xff]
        %v1144 = vld [vmem:[%s176 + $0x1cb0] sm:$0xff]
        %v1145 = vld [vmem:[%s176 + $0x1cb8] sm:$0xff]
        %v1146 = vld [vmem:[%s176 + $0x1cc0] sm:$0xff]
        %v1147 = vld [vmem:[%s176 + $0x1cc8] sm:$0xff]
        %v1148 = vld [vmem:[%s176 + $0x1cd0] sm:$0xff]
        %v1149 = vld [vmem:[%s176 + $0x1cd8] sm:$0xff]
        %v1150 = vld [vmem:[%s176 + $0x1ce0] sm:$0xff]
        %v1151 = vld [vmem:[%s176 + $0x1ce8] sm:$0xff]
        %v1152 = vld [vmem:[%s176 + $0x1cf0] sm:$0xff]
        %v1153 = vld [vmem:[%s176 + $0x1cf8] sm:$0xff]
        %v1154 = vld [vmem:[%s176 + $0x1d00] sm:$0xff]
        %v1155 = vld [vmem:[%s176 + $0x1d08] sm:$0xff]
        %v1156 = vld [vmem:[%s176 + $0x1d10] sm:$0xff]
        %v1157 = vld [vmem:[%s176 + $0x1d18] sm:$0xff]
        %v1158 = vld [vmem:[%s176 + $0x1d20] sm:$0xff]
        %v1159 = vld [vmem:[%s176 + $0x1d28] sm:$0xff]
        %v1160 = vld [vmem:[%s176 + $0x1d30] sm:$0xff]
        %v1161 = vld [vmem:[%s176 + $0x1d38] sm:$0xff]
        %v1162 = vld [vmem:[%s176 + $0x1d40] sm:$0xff]
        %v1163 = vld [vmem:[%s176 + $0x1d48] sm:$0xff]
        %v1164 = vld [vmem:[%s176 + $0x1d50] sm:$0xff]
        %v1165 = vld [vmem:[%s176 + $0x1d58] sm:$0xff]
        %v1166 = vld [vmem:[%s176 + $0x1d60] sm:$0xff]
        %v1167 = vld [vmem:[%s176 + $0x1d68] sm:$0xff]
        %v1168 = vld [vmem:[%s176 + $0x1d70] sm:$0xff]
        %v1169 = vld [vmem:[%s176 + $0x1d78] sm:$0xff]
        %v1170 = vld [vmem:[%s176 + $0x1d80] sm:$0xff]
        %v1171 = vld [vmem:[%s176 + $0x1d88] sm:$0xff]
        %v1172 = vld [vmem:[%s176 + $0x1d90] sm:$0xff]
        %v1173 = vld [vmem:[%s176 + $0x1d98] sm:$0xff]
        %v1174 = vld [vmem:[%s176 + $0x1da0] sm:$0xff]
        %v1175 = vld [vmem:[%s176 + $0x1da8] sm:$0xff]
        %v1176 = vld [vmem:[%s176 + $0x1db0] sm:$0xff]
        %v1177 = vld [vmem:[%s176 + $0x1db8] sm:$0xff]
        %v1178 = vld [vmem:[%s176 + $0x1dc0] sm:$0xff]
        %v1179 = vld [vmem:[%s176 + $0x1dc8] sm:$0xff]
        %v1180 = vld [vmem:[%s176 + $0x1dd0] sm:$0xff]
        %v1181 = vld [vmem:[%s176 + $0x1dd8] sm:$0xff]
        %v1182 = vld [vmem:[%s176 + $0x1de0] sm:$0xff]
        %v1183 = vld [vmem:[%s176 + $0x1de8] sm:$0xff]
        %v1184 = vld [vmem:[%s176 + $0x1df0] sm:$0xff]
        %v1185 = vld [vmem:[%s176 + $0x1df8] sm:$0xff]
        %v1186 = vld [vmem:[%s176 + $0x1e00] sm:$0xff]
        %v1187 = vld [vmem:[%s176 + $0x1e08] sm:$0xff]
        %v1188 = vld [vmem:[%s176 + $0x1e10] sm:$0xff]
        %v1189 = vld [vmem:[%s176 + $0x1e18] sm:$0xff]
        %v1190 = vld [vmem:[%s176 + $0x1e20] sm:$0xff]
        %v1191 = vld [vmem:[%s176 + $0x1e28] sm:$0xff]
        %v1192 = vld [vmem:[%s176 + $0x1e30] sm:$0xff]
        %v1193 = vld [vmem:[%s176 + $0x1e38] sm:$0xff]
        %v1194 = vld [vmem:[%s176 + $0x1e40] sm:$0xff]
        %v1195 = vld [vmem:[%s176 + $0x1e48] sm:$0xff]
        %v1196 = vld [vmem:[%s176 + $0x1e50] sm:$0xff]
        %v1197 = vld [vmem:[%s176 + $0x1e58] sm:$0xff]
        %v1198 = vld [vmem:[%s176 + $0x1e60] sm:$0xff]
        %v1199 = vld [vmem:[%s176 + $0x1e68] sm:$0xff]
        %v1200 = vld [vmem:[%s176 + $0x1e70] sm:$0xff]
        %v1201 = vld [vmem:[%s176 + $0x1e78] sm:$0xff]
        %v1202 = vld [vmem:[%s176 + $0x1e80] sm:$0xff]
        %v1203 = vld [vmem:[%s176 + $0x1e88] sm:$0xff]
        %v1204 = vld [vmem:[%s176 + $0x1e90] sm:$0xff]
        %v1205 = vld [vmem:[%s176 + $0x1e98] sm:$0xff]
        %v1206 = vld [vmem:[%s176 + $0x1ea0] sm:$0xff]
        %v1207 = vld [vmem:[%s176 + $0x1ea8] sm:$0xff]
        %v1208 = vld [vmem:[%s176 + $0x1eb0] sm:$0xff]
        %v1209 = vld [vmem:[%s176 + $0x1eb8] sm:$0xff]
        %v1210 = vld [vmem:[%s176 + $0x1ec0] sm:$0xff]
        %v1211 = vld [vmem:[%s176 + $0x1ec8] sm:$0xff]
        %v1212 = vld [vmem:[%s176 + $0x1ed0] sm:$0xff]
        %v1213 = vld [vmem:[%s176 + $0x1ed8] sm:$0xff]
        %v1214 = vld [vmem:[%s176 + $0x1ee0] sm:$0xff]
        %v1215 = vld [vmem:[%s176 + $0x1ee8] sm:$0xff]
        %v1216 = vld [vmem:[%s176 + $0x1ef0] sm:$0xff]
        %v1217 = vld [vmem:[%s176 + $0x1ef8] sm:$0xff]
        %v1218 = vld [vmem:[%s176 + $0x1f00] sm:$0xff]
        %v1219 = vld [vmem:[%s176 + $0x1f08] sm:$0xff]
        %v1220 = vld [vmem:[%s176 + $0x1f10] sm:$0xff]
        %v1221 = vld [vmem:[%s176 + $0x1f18] sm:$0xff]
        %v1222 = vld [vmem:[%s176 + $0x1f20] sm:$0xff]
        %v1223 = vld [vmem:[%s176 + $0x1f28] sm:$0xff]
        %v1224 = vld [vmem:[%s176 + $0x1f30] sm:$0xff]
        %v1225 = vld [vmem:[%s176 + $0x1f38] sm:$0xff]
        %v1226 = vld [vmem:[%s176 + $0x1f40] sm:$0xff]
        %v1227 = vld [vmem:[%s176 + $0x1f48] sm:$0xff]
        %v1228 = vld [vmem:[%s176 + $0x1f50] sm:$0xff]
        %v1229 = vld [vmem:[%s176 + $0x1f58] sm:$0xff]
        %v1230 = vld [vmem:[%s176 + $0x1f60] sm:$0xff]
        %v1231 = vld [vmem:[%s176 + $0x1f68] sm:$0xff]
        %v1232 = vld [vmem:[%s176 + $0x1f70] sm:$0xff]
        %v1233 = vld [vmem:[%s176 + $0x1f78] sm:$0xff]
        %v1234 = vld [vmem:[%s176 + $0x1f80] sm:$0xff]
        %v1235 = vld [vmem:[%s176 + $0x1f88] sm:$0xff]
        %v1236 = vld [vmem:[%s176 + $0x1f90] sm:$0xff]
        %v1237 = vld [vmem:[%s176 + $0x1f98] sm:$0xff]
        %v1238 = vld [vmem:[%s176 + $0x1fa0] sm:$0xff]
        %v1239 = vld [vmem:[%s176 + $0x1fa8] sm:$0xff]
        %v1240 = vld [vmem:[%s176 + $0x1fb0] sm:$0xff]
        %v1241 = vld [vmem:[%s176 + $0x1fb8] sm:$0xff]
        %v1242 = vld [vmem:[%s176 + $0x1fc0] sm:$0xff]
        %v1243 = vld [vmem:[%s176 + $0x1fc8] sm:$0xff]
        %v1244 = vld [vmem:[%s176 + $0x1fd0] sm:$0xff]
        %v1245 = vld [vmem:[%s176 + $0x1fd8] sm:$0xff]
        %v1246 = vld [vmem:[%s176 + $0x1fe0] sm:$0xff]
        %v1247 = vld [vmem:[%s176 + $0x1fe8] sm:$0xff]
        %v1248 = vld [vmem:[%s176 + $0x1ff0] sm:$0xff]
        %v1249 = vld [vmem:[%s176 + $0x1ff8] sm:$0xff]
        %v1250 = vld [vmem:[%s186] sm:$0xff]
        %v1251 = vld [vmem:[%s186 + $0x8] sm:$0xff]
        %v1252 = vld [vmem:[%s186 + $0x10] sm:$0xff]
        %v1253 = vld [vmem:[%s186 + $0x18] sm:$0xff]
        %v1254 = vld [vmem:[%s186 + $0x20] sm:$0xff]
        %v1255 = vld [vmem:[%s186 + $0x28] sm:$0xff]
        %v1256 = vld [vmem:[%s186 + $0x30] sm:$0xff]
        %v1257 = vld [vmem:[%s186 + $0x38] sm:$0xff]
        %v1258 = vld [vmem:[%s186 + $0x40] sm:$0xff]
        %v1259 = vld [vmem:[%s186 + $0x48] sm:$0xff]
        %v1260 = vld [vmem:[%s186 + $0x50] sm:$0xff]
        %v1261 = vld [vmem:[%s186 + $0x58] sm:$0xff]
        %v1262 = vld [vmem:[%s186 + $0x60] sm:$0xff]
        %v1263 = vld [vmem:[%s186 + $0x68] sm:$0xff]
        %v1264 = vld [vmem:[%s186 + $0x70] sm:$0xff]
        %v1265 = vld [vmem:[%s186 + $0x78] sm:$0xff]
        %v1266 = vld [vmem:[%s186 + $0x80] sm:$0xff]
        %v1267 = vld [vmem:[%s186 + $0x88] sm:$0xff]
        %v1268 = vld [vmem:[%s186 + $0x90] sm:$0xff]
        %v1269 = vld [vmem:[%s186 + $0x98] sm:$0xff]
        %v1270 = vld [vmem:[%s186 + $0xa0] sm:$0xff]
        %v1271 = vld [vmem:[%s186 + $0xa8] sm:$0xff]
        %v1272 = vld [vmem:[%s186 + $0xb0] sm:$0xff]
        %v1273 = vld [vmem:[%s186 + $0xb8] sm:$0xff]
        %v1274 = vld [vmem:[%s186 + $0xc0] sm:$0xff]
        %v1275 = vld [vmem:[%s186 + $0xc8] sm:$0xff]
        %v1276 = vld [vmem:[%s186 + $0xd0] sm:$0xff]
        %v1277 = vld [vmem:[%s186 + $0xd8] sm:$0xff]
        %v1278 = vld [vmem:[%s186 + $0xe0] sm:$0xff]
        %v1279 = vld [vmem:[%s186 + $0xe8] sm:$0xff]
        %v1280 = vld [vmem:[%s186 + $0xf0] sm:$0xff]
        %v1281 = vld [vmem:[%s186 + $0xf8] sm:$0xff]
        %v1282 = vld [vmem:[%s186 + $0x100] sm:$0xff]
        %v1283 = vld [vmem:[%s186 + $0x108] sm:$0xff]
        %v1284 = vld [vmem:[%s186 + $0x110] sm:$0xff]
        %v1285 = vld [vmem:[%s186 + $0x118] sm:$0xff]
        %v1286 = vld [vmem:[%s186 + $0x120] sm:$0xff]
        %v1287 = vld [vmem:[%s186 + $0x128] sm:$0xff]
        %v1288 = vld [vmem:[%s186 + $0x130] sm:$0xff]
        %v1289 = vld [vmem:[%s186 + $0x138] sm:$0xff]
        %v1290 = vld [vmem:[%s186 + $0x140] sm:$0xff]
        %v1291 = vld [vmem:[%s186 + $0x148] sm:$0xff]
        %v1292 = vld [vmem:[%s186 + $0x150] sm:$0xff]
        %v1293 = vld [vmem:[%s186 + $0x158] sm:$0xff]
        %v1294 = vld [vmem:[%s186 + $0x160] sm:$0xff]
        %v1295 = vld [vmem:[%s186 + $0x168] sm:$0xff]
        %v1296 = vld [vmem:[%s186 + $0x170] sm:$0xff]
        %v1297 = vld [vmem:[%s186 + $0x178] sm:$0xff]
        %v1298 = vld [vmem:[%s186 + $0x180] sm:$0xff]
        %v1299 = vld [vmem:[%s186 + $0x188] sm:$0xff]
        %v1300 = vld [vmem:[%s186 + $0x190] sm:$0xff]
        %v1301 = vld [vmem:[%s186 + $0x198] sm:$0xff]
        %v1302 = vld [vmem:[%s186 + $0x1a0] sm:$0xff]
        %v1303 = vld [vmem:[%s186 + $0x1a8] sm:$0xff]
        %v1304 = vld [vmem:[%s186 + $0x1b0] sm:$0xff]
        %v1305 = vld [vmem:[%s186 + $0x1b8] sm:$0xff]
        %v1306 = vld [vmem:[%s186 + $0x1c0] sm:$0xff]
        %v1307 = vld [vmem:[%s186 + $0x1c8] sm:$0xff]
        %v1308 = vld [vmem:[%s186 + $0x1d0] sm:$0xff]
        %v1309 = vld [vmem:[%s186 + $0x1d8] sm:$0xff]
        %v1310 = vld [vmem:[%s186 + $0x1e0] sm:$0xff]
        %v1311 = vld [vmem:[%s186 + $0x1e8] sm:$0xff]
        %v1312 = vld [vmem:[%s186 + $0x1f0] sm:$0xff]
        %v1313 = vld [vmem:[%s186 + $0x1f8] sm:$0xff]
        %v1314 = vld [vmem:[%s186 + $0x200] sm:$0xff]
        %v1315 = vld [vmem:[%s186 + $0x208] sm:$0xff]
        %v1316 = vld [vmem:[%s186 + $0x210] sm:$0xff]
        %v1317 = vld [vmem:[%s186 + $0x218] sm:$0xff]
        %v1318 = vld [vmem:[%s186 + $0x220] sm:$0xff]
        %v1319 = vld [vmem:[%s186 + $0x228] sm:$0xff]
        %v1320 = vld [vmem:[%s186 + $0x230] sm:$0xff]
        %v1321 = vld [vmem:[%s186 + $0x238] sm:$0xff]
        %v1322 = vld [vmem:[%s186 + $0x240] sm:$0xff]
        %v1323 = vld [vmem:[%s186 + $0x248] sm:$0xff]
        %v1324 = vld [vmem:[%s186 + $0x250] sm:$0xff]
        %v1325 = vld [vmem:[%s186 + $0x258] sm:$0xff]
        %v1326 = vld [vmem:[%s186 + $0x260] sm:$0xff]
        %v1327 = vld [vmem:[%s186 + $0x268] sm:$0xff]
        %v1328 = vld [vmem:[%s186 + $0x270] sm:$0xff]
        %v1329 = vld [vmem:[%s186 + $0x278] sm:$0xff]
        %v1330 = vld [vmem:[%s186 + $0x280] sm:$0xff]
        %v1331 = vld [vmem:[%s186 + $0x288] sm:$0xff]
        %v1332 = vld [vmem:[%s186 + $0x290] sm:$0xff]
        %v1333 = vld [vmem:[%s186 + $0x298] sm:$0xff]
        %v1334 = vld [vmem:[%s186 + $0x2a0] sm:$0xff]
        %v1335 = vld [vmem:[%s186 + $0x2a8] sm:$0xff]
        %v1336 = vld [vmem:[%s186 + $0x2b0] sm:$0xff]
        %v1337 = vld [vmem:[%s186 + $0x2b8] sm:$0xff]
        %v1338 = vld [vmem:[%s186 + $0x2c0] sm:$0xff]
        %v1339 = vld [vmem:[%s186 + $0x2c8] sm:$0xff]
        %v1340 = vld [vmem:[%s186 + $0x2d0] sm:$0xff]
        %v1341 = vld [vmem:[%s186 + $0x2d8] sm:$0xff]
        %v1342 = vld [vmem:[%s186 + $0x2e0] sm:$0xff]
        %v1343 = vld [vmem:[%s186 + $0x2e8] sm:$0xff]
        %v1344 = vld [vmem:[%s186 + $0x2f0] sm:$0xff]
        %v1345 = vld [vmem:[%s186 + $0x2f8] sm:$0xff]
        %v1346 = vld [vmem:[%s186 + $0x300] sm:$0xff]
        %v1347 = vld [vmem:[%s186 + $0x308] sm:$0xff]
        %v1348 = vld [vmem:[%s186 + $0x310] sm:$0xff]
        %v1349 = vld [vmem:[%s186 + $0x318] sm:$0xff]
        %v1350 = vld [vmem:[%s186 + $0x320] sm:$0xff]
        %v1351 = vld [vmem:[%s186 + $0x328] sm:$0xff]
        %v1352 = vld [vmem:[%s186 + $0x330] sm:$0xff]
        %v1353 = vld [vmem:[%s186 + $0x338] sm:$0xff]
        %v1354 = vld [vmem:[%s186 + $0x340] sm:$0xff]
        %v1355 = vld [vmem:[%s186 + $0x348] sm:$0xff]
        %v1356 = vld [vmem:[%s186 + $0x350] sm:$0xff]
        %v1357 = vld [vmem:[%s186 + $0x358] sm:$0xff]
        %v1358 = vld [vmem:[%s186 + $0x360] sm:$0xff]
        %v1359 = vld [vmem:[%s186 + $0x368] sm:$0xff]
        %v1360 = vld [vmem:[%s186 + $0x370] sm:$0xff]
        %v1361 = vld [vmem:[%s186 + $0x378] sm:$0xff]
        %v1362 = vld [vmem:[%s186 + $0x380] sm:$0xff]
        %v1363 = vld [vmem:[%s186 + $0x388] sm:$0xff]
        %v1364 = vld [vmem:[%s186 + $0x390] sm:$0xff]
        %v1365 = vld [vmem:[%s186 + $0x398] sm:$0xff]
        %v1366 = vld [vmem:[%s186 + $0x3a0] sm:$0xff]
        %v1367 = vld [vmem:[%s186 + $0x3a8] sm:$0xff]
        %v1368 = vld [vmem:[%s186 + $0x3b0] sm:$0xff]
        %v1369 = vld [vmem:[%s186 + $0x3b8] sm:$0xff]
        %v1370 = vld [vmem:[%s186 + $0x3c0] sm:$0xff]
        %v1371 = vld [vmem:[%s186 + $0x3c8] sm:$0xff]
        %v1372 = vld [vmem:[%s186 + $0x3d0] sm:$0xff]
        %v1373 = vld [vmem:[%s186 + $0x3d8] sm:$0xff]
        %v1374 = vld [vmem:[%s186 + $0x3e0] sm:$0xff]
        %v1375 = vld [vmem:[%s186 + $0x3e8] sm:$0xff]
        %v1376 = vld [vmem:[%s186 + $0x3f0] sm:$0xff]
        %v1377 = vld [vmem:[%s186 + $0x3f8] sm:$0xff]
        %v1378 = vld [vmem:[%s186 + $0x400] sm:$0xff]
        %v1379 = vld [vmem:[%s186 + $0x408] sm:$0xff]
        %v1380 = vld [vmem:[%s186 + $0x410] sm:$0xff]
        %v1381 = vld [vmem:[%s186 + $0x418] sm:$0xff]
        %v1382 = vld [vmem:[%s186 + $0x420] sm:$0xff]
        %v1383 = vld [vmem:[%s186 + $0x428] sm:$0xff]
        %v1384 = vld [vmem:[%s186 + $0x430] sm:$0xff]
        %v1385 = vld [vmem:[%s186 + $0x438] sm:$0xff]
        %v1386 = vld [vmem:[%s186 + $0x440] sm:$0xff]
        %v1387 = vld [vmem:[%s186 + $0x448] sm:$0xff]
        %v1388 = vld [vmem:[%s186 + $0x450] sm:$0xff]
        %v1389 = vld [vmem:[%s186 + $0x458] sm:$0xff]
        %v1390 = vld [vmem:[%s186 + $0x460] sm:$0xff]
        %v1391 = vld [vmem:[%s186 + $0x468] sm:$0xff]
        %v1392 = vld [vmem:[%s186 + $0x470] sm:$0xff]
        %v1393 = vld [vmem:[%s186 + $0x478] sm:$0xff]
        %v1394 = vld [vmem:[%s186 + $0x480] sm:$0xff]
        %v1395 = vld [vmem:[%s186 + $0x488] sm:$0xff]
        %v1396 = vld [vmem:[%s186 + $0x490] sm:$0xff]
        %v1397 = vld [vmem:[%s186 + $0x498] sm:$0xff]
        %v1398 = vld [vmem:[%s186 + $0x4a0] sm:$0xff]
        %v1399 = vld [vmem:[%s186 + $0x4a8] sm:$0xff]
        %v1400 = vld [vmem:[%s186 + $0x4b0] sm:$0xff]
        %v1401 = vld [vmem:[%s186 + $0x4b8] sm:$0xff]
        %v1402 = vld [vmem:[%s186 + $0x4c0] sm:$0xff]
        %v1403 = vld [vmem:[%s186 + $0x4c8] sm:$0xff]
        %v1404 = vld [vmem:[%s186 + $0x4d0] sm:$0xff]
        %v1405 = vld [vmem:[%s186 + $0x4d8] sm:$0xff]
        %v1406 = vld [vmem:[%s186 + $0x4e0] sm:$0xff]
        %v1407 = vld [vmem:[%s186 + $0x4e8] sm:$0xff]
        %v1408 = vld [vmem:[%s186 + $0x4f0] sm:$0xff]
        %v1409 = vld [vmem:[%s186 + $0x4f8] sm:$0xff]
        %v1410 = vld [vmem:[%s186 + $0x500] sm:$0xff]
        %v1411 = vld [vmem:[%s186 + $0x508] sm:$0xff]
        %v1412 = vld [vmem:[%s186 + $0x510] sm:$0xff]
        %v1413 = vld [vmem:[%s186 + $0x518] sm:$0xff]
        %v1414 = vld [vmem:[%s186 + $0x520] sm:$0xff]
        %v1415 = vld [vmem:[%s186 + $0x528] sm:$0xff]
        %v1416 = vld [vmem:[%s186 + $0x530] sm:$0xff]
        %v1417 = vld [vmem:[%s186 + $0x538] sm:$0xff]
        %v1418 = vld [vmem:[%s186 + $0x540] sm:$0xff]
        %v1419 = vld [vmem:[%s186 + $0x548] sm:$0xff]
        %v1420 = vld [vmem:[%s186 + $0x550] sm:$0xff]
        %v1421 = vld [vmem:[%s186 + $0x558] sm:$0xff]
        %v1422 = vld [vmem:[%s186 + $0x560] sm:$0xff]
        %v1423 = vld [vmem:[%s186 + $0x568] sm:$0xff]
        %v1424 = vld [vmem:[%s186 + $0x570] sm:$0xff]
        %v1425 = vld [vmem:[%s186 + $0x578] sm:$0xff]
        %v1426 = vld [vmem:[%s186 + $0x580] sm:$0xff]
        %v1427 = vld [vmem:[%s186 + $0x588] sm:$0xff]
        %v1428 = vld [vmem:[%s186 + $0x590] sm:$0xff]
        %v1429 = vld [vmem:[%s186 + $0x598] sm:$0xff]
        %v1430 = vld [vmem:[%s186 + $0x5a0] sm:$0xff]
        %v1431 = vld [vmem:[%s186 + $0x5a8] sm:$0xff]
        %v1432 = vld [vmem:[%s186 + $0x5b0] sm:$0xff]
        %v1433 = vld [vmem:[%s186 + $0x5b8] sm:$0xff]
        %v1434 = vld [vmem:[%s186 + $0x5c0] sm:$0xff]
        %v1435 = vld [vmem:[%s186 + $0x5c8] sm:$0xff]
        %v1436 = vld [vmem:[%s186 + $0x5d0] sm:$0xff]
        %v1437 = vld [vmem:[%s186 + $0x5d8] sm:$0xff]
        %v1438 = vld [vmem:[%s186 + $0x5e0] sm:$0xff]
        %v1439 = vld [vmem:[%s186 + $0x5e8] sm:$0xff]
        %v1440 = vld [vmem:[%s186 + $0x5f0] sm:$0xff]
        %v1441 = vld [vmem:[%s186 + $0x5f8] sm:$0xff]
        %v1442 = vld [vmem:[%s186 + $0x600] sm:$0xff]
        %v1443 = vld [vmem:[%s186 + $0x608] sm:$0xff]
        %v1444 = vld [vmem:[%s186 + $0x610] sm:$0xff]
        %v1445 = vld [vmem:[%s186 + $0x618] sm:$0xff]
        %v1446 = vld [vmem:[%s186 + $0x620] sm:$0xff]
        %v1447 = vld [vmem:[%s186 + $0x628] sm:$0xff]
        %v1448 = vld [vmem:[%s186 + $0x630] sm:$0xff]
        %v1449 = vld [vmem:[%s186 + $0x638] sm:$0xff]
        %v1450 = vld [vmem:[%s186 + $0x640] sm:$0xff]
        %v1451 = vld [vmem:[%s186 + $0x648] sm:$0xff]
        %v1452 = vld [vmem:[%s186 + $0x650] sm:$0xff]
        %v1453 = vld [vmem:[%s186 + $0x658] sm:$0xff]
        %v1454 = vld [vmem:[%s186 + $0x660] sm:$0xff]
        %v1455 = vld [vmem:[%s186 + $0x668] sm:$0xff]
        %v1456 = vld [vmem:[%s186 + $0x670] sm:$0xff]
        %v1457 = vld [vmem:[%s186 + $0x678] sm:$0xff]
        %v1458 = vld [vmem:[%s186 + $0x680] sm:$0xff]
        %v1459 = vld [vmem:[%s186 + $0x688] sm:$0xff]
        %v1460 = vld [vmem:[%s186 + $0x690] sm:$0xff]
        %v1461 = vld [vmem:[%s186 + $0x698] sm:$0xff]
        %v1462 = vld [vmem:[%s186 + $0x6a0] sm:$0xff]
        %v1463 = vld [vmem:[%s186 + $0x6a8] sm:$0xff]
        %v1464 = vld [vmem:[%s186 + $0x6b0] sm:$0xff]
        %v1465 = vld [vmem:[%s186 + $0x6b8] sm:$0xff]
        %v1466 = vld [vmem:[%s186 + $0x6c0] sm:$0xff]
        %v1467 = vld [vmem:[%s186 + $0x6c8] sm:$0xff]
        %v1468 = vld [vmem:[%s186 + $0x6d0] sm:$0xff]
        %v1469 = vld [vmem:[%s186 + $0x6d8] sm:$0xff]
        %v1470 = vld [vmem:[%s186 + $0x6e0] sm:$0xff]
        %v1471 = vld [vmem:[%s186 + $0x6e8] sm:$0xff]
        %v1472 = vld [vmem:[%s186 + $0x6f0] sm:$0xff]
        %v1473 = vld [vmem:[%s186 + $0x6f8] sm:$0xff]
        %v1474 = vld [vmem:[%s186 + $0x700] sm:$0xff]
        %v1475 = vld [vmem:[%s186 + $0x708] sm:$0xff]
        %v1476 = vld [vmem:[%s186 + $0x710] sm:$0xff]
        %v1477 = vld [vmem:[%s186 + $0x718] sm:$0xff]
        %v1478 = vld [vmem:[%s186 + $0x720] sm:$0xff]
        %v1479 = vld [vmem:[%s186 + $0x728] sm:$0xff]
        %v1480 = vld [vmem:[%s186 + $0x730] sm:$0xff]
        %v1481 = vld [vmem:[%s186 + $0x738] sm:$0xff]
        %v1482 = vld [vmem:[%s186 + $0x740] sm:$0xff]
        %v1483 = vld [vmem:[%s186 + $0x748] sm:$0xff]
        %v1484 = vld [vmem:[%s186 + $0x750] sm:$0xff]
        %v1485 = vld [vmem:[%s186 + $0x758] sm:$0xff]
        %v1486 = vld [vmem:[%s186 + $0x760] sm:$0xff]
        %v1487 = vld [vmem:[%s186 + $0x768] sm:$0xff]
        %v1488 = vld [vmem:[%s186 + $0x770] sm:$0xff]
        %v1489 = vld [vmem:[%s186 + $0x778] sm:$0xff]
        %v1490 = vld [vmem:[%s186 + $0x780] sm:$0xff]
        %v1491 = vld [vmem:[%s186 + $0x788] sm:$0xff]
        %v1492 = vld [vmem:[%s186 + $0x790] sm:$0xff]
        %v1493 = vld [vmem:[%s186 + $0x798] sm:$0xff]
        %v1494 = vld [vmem:[%s186 + $0x7a0] sm:$0xff]
        %v1495 = vld [vmem:[%s186 + $0x7a8] sm:$0xff]
        %v1496 = vld [vmem:[%s186 + $0x7b0] sm:$0xff]
        %v1497 = vld [vmem:[%s186 + $0x7b8] sm:$0xff]
        %v1498 = vld [vmem:[%s186 + $0x7c0] sm:$0xff]
        %v1499 = vld [vmem:[%s186 + $0x7c8] sm:$0xff]
        %v1500 = vld [vmem:[%s186 + $0x7d0] sm:$0xff]
        %v1501 = vld [vmem:[%s186 + $0x7d8] sm:$0xff]
        %v1502 = vld [vmem:[%s186 + $0x7e0] sm:$0xff]
        %v1503 = vld [vmem:[%s186 + $0x7e8] sm:$0xff]
        %v1504 = vld [vmem:[%s186 + $0x7f0] sm:$0xff]
        %v1505 = vld [vmem:[%s186 + $0x7f8] sm:$0xff]
        %v1506 = vld [vmem:[%s186 + $0x800] sm:$0xff]
        %v1507 = vld [vmem:[%s186 + $0x808] sm:$0xff]
        %v1508 = vld [vmem:[%s186 + $0x810] sm:$0xff]
        %v1509 = vld [vmem:[%s186 + $0x818] sm:$0xff]
        %v1510 = vld [vmem:[%s186 + $0x820] sm:$0xff]
        %v1511 = vld [vmem:[%s186 + $0x828] sm:$0xff]
        %v1512 = vld [vmem:[%s186 + $0x830] sm:$0xff]
        %v1513 = vld [vmem:[%s186 + $0x838] sm:$0xff]
        %v1514 = vld [vmem:[%s186 + $0x840] sm:$0xff]
        %v1515 = vld [vmem:[%s186 + $0x848] sm:$0xff]
        %v1516 = vld [vmem:[%s186 + $0x850] sm:$0xff]
        %v1517 = vld [vmem:[%s186 + $0x858] sm:$0xff]
        %v1518 = vld [vmem:[%s186 + $0x860] sm:$0xff]
        %v1519 = vld [vmem:[%s186 + $0x868] sm:$0xff]
        %v1520 = vld [vmem:[%s186 + $0x870] sm:$0xff]
        %v1521 = vld [vmem:[%s186 + $0x878] sm:$0xff]
        %v1522 = vld [vmem:[%s186 + $0x880] sm:$0xff]
        %v1523 = vld [vmem:[%s186 + $0x888] sm:$0xff]
        %v1524 = vld [vmem:[%s186 + $0x890] sm:$0xff]
        %v1525 = vld [vmem:[%s186 + $0x898] sm:$0xff]
        %v1526 = vld [vmem:[%s186 + $0x8a0] sm:$0xff]
        %v1527 = vld [vmem:[%s186 + $0x8a8] sm:$0xff]
        %v1528 = vld [vmem:[%s186 + $0x8b0] sm:$0xff]
        %v1529 = vld [vmem:[%s186 + $0x8b8] sm:$0xff]
        %v1530 = vld [vmem:[%s186 + $0x8c0] sm:$0xff]
        %v1531 = vld [vmem:[%s186 + $0x8c8] sm:$0xff]
        %v1532 = vld [vmem:[%s186 + $0x8d0] sm:$0xff]
        %v1533 = vld [vmem:[%s186 + $0x8d8] sm:$0xff]
        %v1534 = vld [vmem:[%s186 + $0x8e0] sm:$0xff]
        %v1535 = vld [vmem:[%s186 + $0x8e8] sm:$0xff]
        %v1536 = vld [vmem:[%s186 + $0x8f0] sm:$0xff]
        %v1537 = vld [vmem:[%s186 + $0x8f8] sm:$0xff]
        %v1538 = vld [vmem:[%s186 + $0x900] sm:$0xff]
        %v1539 = vld [vmem:[%s186 + $0x908] sm:$0xff]
        %v1540 = vld [vmem:[%s186 + $0x910] sm:$0xff]
        %v1541 = vld [vmem:[%s186 + $0x918] sm:$0xff]
        %v1542 = vld [vmem:[%s186 + $0x920] sm:$0xff]
        %v1543 = vld [vmem:[%s186 + $0x928] sm:$0xff]
        %v1544 = vld [vmem:[%s186 + $0x930] sm:$0xff]
        %v1545 = vld [vmem:[%s186 + $0x938] sm:$0xff]
        %v1546 = vld [vmem:[%s186 + $0x940] sm:$0xff]
        %v1547 = vld [vmem:[%s186 + $0x948] sm:$0xff]
        %v1548 = vld [vmem:[%s186 + $0x950] sm:$0xff]
        %v1549 = vld [vmem:[%s186 + $0x958] sm:$0xff]
        %v1550 = vld [vmem:[%s186 + $0x960] sm:$0xff]
        %v1551 = vld [vmem:[%s186 + $0x968] sm:$0xff]
        %v1552 = vld [vmem:[%s186 + $0x970] sm:$0xff]
        %v1553 = vld [vmem:[%s186 + $0x978] sm:$0xff]
        %v1554 = vld [vmem:[%s186 + $0x980] sm:$0xff]
        %v1555 = vld [vmem:[%s186 + $0x988] sm:$0xff]
        %v1556 = vld [vmem:[%s186 + $0x990] sm:$0xff]
        %v1557 = vld [vmem:[%s186 + $0x998] sm:$0xff]
        %v1558 = vld [vmem:[%s186 + $0x9a0] sm:$0xff]
        %v1559 = vld [vmem:[%s186 + $0x9a8] sm:$0xff]
        %v1560 = vld [vmem:[%s186 + $0x9b0] sm:$0xff]
        %v1561 = vld [vmem:[%s186 + $0x9b8] sm:$0xff]
        %v1562 = vld [vmem:[%s186 + $0x9c0] sm:$0xff]
        %v1563 = vld [vmem:[%s186 + $0x9c8] sm:$0xff]
        %v1564 = vld [vmem:[%s186 + $0x9d0] sm:$0xff]
        %v1565 = vld [vmem:[%s186 + $0x9d8] sm:$0xff]
        %v1566 = vld [vmem:[%s186 + $0x9e0] sm:$0xff]
        %v1567 = vld [vmem:[%s186 + $0x9e8] sm:$0xff]
        %v1568 = vld [vmem:[%s186 + $0x9f0] sm:$0xff]
        %v1569 = vld [vmem:[%s186 + $0x9f8] sm:$0xff]
        %v1570 = vld [vmem:[%s186 + $0xa00] sm:$0xff]
        %v1571 = vld [vmem:[%s186 + $0xa08] sm:$0xff]
        %v1572 = vld [vmem:[%s186 + $0xa10] sm:$0xff]
        %v1573 = vld [vmem:[%s186 + $0xa18] sm:$0xff]
        %v1574 = vld [vmem:[%s186 + $0xa20] sm:$0xff]
        %v1575 = vld [vmem:[%s186 + $0xa28] sm:$0xff]
        %v1576 = vld [vmem:[%s186 + $0xa30] sm:$0xff]
        %v1577 = vld [vmem:[%s186 + $0xa38] sm:$0xff]
        %v1578 = vld [vmem:[%s186 + $0xa40] sm:$0xff]
        %v1579 = vld [vmem:[%s186 + $0xa48] sm:$0xff]
        %v1580 = vld [vmem:[%s186 + $0xa50] sm:$0xff]
        %v1581 = vld [vmem:[%s186 + $0xa58] sm:$0xff]
        %v1582 = vld [vmem:[%s186 + $0xa60] sm:$0xff]
        %v1583 = vld [vmem:[%s186 + $0xa68] sm:$0xff]
        %v1584 = vld [vmem:[%s186 + $0xa70] sm:$0xff]
        %v1585 = vld [vmem:[%s186 + $0xa78] sm:$0xff]
        %v1586 = vld [vmem:[%s186 + $0xa80] sm:$0xff]
        %v1587 = vld [vmem:[%s186 + $0xa88] sm:$0xff]
        %v1588 = vld [vmem:[%s186 + $0xa90] sm:$0xff]
        %v1589 = vld [vmem:[%s186 + $0xa98] sm:$0xff]
        %v1590 = vld [vmem:[%s186 + $0xaa0] sm:$0xff]
        %v1591 = vld [vmem:[%s186 + $0xaa8] sm:$0xff]
        %v1592 = vld [vmem:[%s186 + $0xab0] sm:$0xff]
        %v1593 = vld [vmem:[%s186 + $0xab8] sm:$0xff]
        %v1594 = vld [vmem:[%s186 + $0xac0] sm:$0xff]
        %v1595 = vld [vmem:[%s186 + $0xac8] sm:$0xff]
        %v1596 = vld [vmem:[%s186 + $0xad0] sm:$0xff]
        %v1597 = vld [vmem:[%s186 + $0xad8] sm:$0xff]
        %v1598 = vld [vmem:[%s186 + $0xae0] sm:$0xff]
        %v1599 = vld [vmem:[%s186 + $0xae8] sm:$0xff]
        %v1600 = vld [vmem:[%s186 + $0xaf0] sm:$0xff]
        %v1601 = vld [vmem:[%s186 + $0xaf8] sm:$0xff]
        %v1602 = vld [vmem:[%s186 + $0xb00] sm:$0xff]
        %v1603 = vld [vmem:[%s186 + $0xb08] sm:$0xff]
        %v1604 = vld [vmem:[%s186 + $0xb10] sm:$0xff]
        %v1605 = vld [vmem:[%s186 + $0xb18] sm:$0xff]
        %v1606 = vld [vmem:[%s186 + $0xb20] sm:$0xff]
        %v1607 = vld [vmem:[%s186 + $0xb28] sm:$0xff]
        %v1608 = vld [vmem:[%s186 + $0xb30] sm:$0xff]
        %v1609 = vld [vmem:[%s186 + $0xb38] sm:$0xff]
        %v1610 = vld [vmem:[%s186 + $0xb40] sm:$0xff]
        %v1611 = vld [vmem:[%s186 + $0xb48] sm:$0xff]
        %v1612 = vld [vmem:[%s186 + $0xb50] sm:$0xff]
        %v1613 = vld [vmem:[%s186 + $0xb58] sm:$0xff]
        %v1614 = vld [vmem:[%s186 + $0xb60] sm:$0xff]
        %v1615 = vld [vmem:[%s186 + $0xb68] sm:$0xff]
        %v1616 = vld [vmem:[%s186 + $0xb70] sm:$0xff]
        %v1617 = vld [vmem:[%s186 + $0xb78] sm:$0xff]
        %v1618 = vld [vmem:[%s186 + $0xb80] sm:$0xff]
        %v1619 = vld [vmem:[%s186 + $0xb88] sm:$0xff]
        %v1620 = vld [vmem:[%s186 + $0xb90] sm:$0xff]
        %v1621 = vld [vmem:[%s186 + $0xb98] sm:$0xff]
        %v1622 = vld [vmem:[%s186 + $0xba0] sm:$0xff]
        %v1623 = vld [vmem:[%s186 + $0xba8] sm:$0xff]
        %v1624 = vld [vmem:[%s186 + $0xbb0] sm:$0xff]
        %v1625 = vld [vmem:[%s186 + $0xbb8] sm:$0xff]
        %v1626 = vld [vmem:[%s186 + $0xbc0] sm:$0xff]
        %v1627 = vld [vmem:[%s186 + $0xbc8] sm:$0xff]
        %v1628 = vld [vmem:[%s186 + $0xbd0] sm:$0xff]
        %v1629 = vld [vmem:[%s186 + $0xbd8] sm:$0xff]
        %v1630 = vld [vmem:[%s186 + $0xbe0] sm:$0xff]
        %v1631 = vld [vmem:[%s186 + $0xbe8] sm:$0xff]
        %v1632 = vld [vmem:[%s186 + $0xbf0] sm:$0xff]
        %v1633 = vld [vmem:[%s186 + $0xbf8] sm:$0xff]
        %v1634 = vld [vmem:[%s186 + $0xc00] sm:$0xff]
        %v1635 = vld [vmem:[%s186 + $0xc08] sm:$0xff]
        %v1636 = vld [vmem:[%s186 + $0xc10] sm:$0xff]
        %v1637 = vld [vmem:[%s186 + $0xc18] sm:$0xff]
        %v1638 = vld [vmem:[%s186 + $0xc20] sm:$0xff]
        %v1639 = vld [vmem:[%s186 + $0xc28] sm:$0xff]
        %v1640 = vld [vmem:[%s186 + $0xc30] sm:$0xff]
        %v1641 = vld [vmem:[%s186 + $0xc38] sm:$0xff]
        %v1642 = vld [vmem:[%s186 + $0xc40] sm:$0xff]
        %v1643 = vld [vmem:[%s186 + $0xc48] sm:$0xff]
        %v1644 = vld [vmem:[%s186 + $0xc50] sm:$0xff]
        %v1645 = vld [vmem:[%s186 + $0xc58] sm:$0xff]
        %v1646 = vld [vmem:[%s186 + $0xc60] sm:$0xff]
        %v1647 = vld [vmem:[%s186 + $0xc68] sm:$0xff]
        %v1648 = vld [vmem:[%s186 + $0xc70] sm:$0xff]
        %v1649 = vld [vmem:[%s186 + $0xc78] sm:$0xff]
        %v1650 = vld [vmem:[%s186 + $0xc80] sm:$0xff]
        %v1651 = vld [vmem:[%s186 + $0xc88] sm:$0xff]
        %v1652 = vld [vmem:[%s186 + $0xc90] sm:$0xff]
        %v1653 = vld [vmem:[%s186 + $0xc98] sm:$0xff]
        %v1654 = vld [vmem:[%s186 + $0xca0] sm:$0xff]
        %v1655 = vld [vmem:[%s186 + $0xca8] sm:$0xff]
        %v1656 = vld [vmem:[%s186 + $0xcb0] sm:$0xff]
        %v1657 = vld [vmem:[%s186 + $0xcb8] sm:$0xff]
        %v1658 = vld [vmem:[%s186 + $0xcc0] sm:$0xff]
        %v1659 = vld [vmem:[%s186 + $0xcc8] sm:$0xff]
        %v1660 = vld [vmem:[%s186 + $0xcd0] sm:$0xff]
        %v1661 = vld [vmem:[%s186 + $0xcd8] sm:$0xff]
        %v1662 = vld [vmem:[%s186 + $0xce0] sm:$0xff]
        %v1663 = vld [vmem:[%s186 + $0xce8] sm:$0xff]
        %v1664 = vld [vmem:[%s186 + $0xcf0] sm:$0xff]
        %v1665 = vld [vmem:[%s186 + $0xcf8] sm:$0xff]
        %v1666 = vld [vmem:[%s186 + $0xd00] sm:$0xff]
        %v1667 = vld [vmem:[%s186 + $0xd08] sm:$0xff]
        %v1668 = vld [vmem:[%s186 + $0xd10] sm:$0xff]
        %v1669 = vld [vmem:[%s186 + $0xd18] sm:$0xff]
        %v1670 = vld [vmem:[%s186 + $0xd20] sm:$0xff]
        %v1671 = vld [vmem:[%s186 + $0xd28] sm:$0xff]
        %v1672 = vld [vmem:[%s186 + $0xd30] sm:$0xff]
        %v1673 = vld [vmem:[%s186 + $0xd38] sm:$0xff]
        %v1674 = vld [vmem:[%s186 + $0xd40] sm:$0xff]
        %v1675 = vld [vmem:[%s186 + $0xd48] sm:$0xff]
        %v1676 = vld [vmem:[%s186 + $0xd50] sm:$0xff]
        %v1677 = vld [vmem:[%s186 + $0xd58] sm:$0xff]
        %v1678 = vld [vmem:[%s186 + $0xd60] sm:$0xff]
        %v1679 = vld [vmem:[%s186 + $0xd68] sm:$0xff]
        %v1680 = vld [vmem:[%s186 + $0xd70] sm:$0xff]
        %v1681 = vld [vmem:[%s186 + $0xd78] sm:$0xff]
        %v1682 = vld [vmem:[%s186 + $0xd80] sm:$0xff]
        %v1683 = vld [vmem:[%s186 + $0xd88] sm:$0xff]
        %v1684 = vld [vmem:[%s186 + $0xd90] sm:$0xff]
        %v1685 = vld [vmem:[%s186 + $0xd98] sm:$0xff]
        %v1686 = vld [vmem:[%s186 + $0xda0] sm:$0xff]
        %v1687 = vld [vmem:[%s186 + $0xda8] sm:$0xff]
        %v1688 = vld [vmem:[%s186 + $0xdb0] sm:$0xff]
        %v1689 = vld [vmem:[%s186 + $0xdb8] sm:$0xff]
        %v1690 = vld [vmem:[%s186 + $0xdc0] sm:$0xff]
        %v1691 = vld [vmem:[%s186 + $0xdc8] sm:$0xff]
        %v1692 = vld [vmem:[%s186 + $0xdd0] sm:$0xff]
        %v1693 = vld [vmem:[%s186 + $0xdd8] sm:$0xff]
        %v1694 = vld [vmem:[%s186 + $0xde0] sm:$0xff]
        %v1695 = vld [vmem:[%s186 + $0xde8] sm:$0xff]
        %v1696 = vld [vmem:[%s186 + $0xdf0] sm:$0xff]
        %v1697 = vld [vmem:[%s186 + $0xdf8] sm:$0xff]
        %v1698 = vld [vmem:[%s186 + $0xe00] sm:$0xff]
        %v1699 = vld [vmem:[%s186 + $0xe08] sm:$0xff]
        %v1700 = vld [vmem:[%s186 + $0xe10] sm:$0xff]
        %v1701 = vld [vmem:[%s186 + $0xe18] sm:$0xff]
        %v1702 = vld [vmem:[%s186 + $0xe20] sm:$0xff]
        %v1703 = vld [vmem:[%s186 + $0xe28] sm:$0xff]
        %v1704 = vld [vmem:[%s186 + $0xe30] sm:$0xff]
        %v1705 = vld [vmem:[%s186 + $0xe38] sm:$0xff]
        %v1706 = vld [vmem:[%s186 + $0xe40] sm:$0xff]
        %v1707 = vld [vmem:[%s186 + $0xe48] sm:$0xff]
        %v1708 = vld [vmem:[%s186 + $0xe50] sm:$0xff]
        %v1709 = vld [vmem:[%s186 + $0xe58] sm:$0xff]
        %v1710 = vld [vmem:[%s186 + $0xe60] sm:$0xff]
        %v1711 = vld [vmem:[%s186 + $0xe68] sm:$0xff]
        %v1712 = vld [vmem:[%s186 + $0xe70] sm:$0xff]
        %v1713 = vld [vmem:[%s186 + $0xe78] sm:$0xff]
        %v1714 = vld [vmem:[%s186 + $0xe80] sm:$0xff]
        %v1715 = vld [vmem:[%s186 + $0xe88] sm:$0xff]
        %v1716 = vld [vmem:[%s186 + $0xe90] sm:$0xff]
        %v1717 = vld [vmem:[%s186 + $0xe98] sm:$0xff]
        %v1718 = vld [vmem:[%s186 + $0xea0] sm:$0xff]
        %v1719 = vld [vmem:[%s186 + $0xea8] sm:$0xff]
        %v1720 = vld [vmem:[%s186 + $0xeb0] sm:$0xff]
        %v1721 = vld [vmem:[%s186 + $0xeb8] sm:$0xff]
        %v1722 = vld [vmem:[%s186 + $0xec0] sm:$0xff]
        %v1723 = vld [vmem:[%s186 + $0xec8] sm:$0xff]
        %v1724 = vld [vmem:[%s186 + $0xed0] sm:$0xff]
        %v1725 = vld [vmem:[%s186 + $0xed8] sm:$0xff]
        %v1726 = vld [vmem:[%s186 + $0xee0] sm:$0xff]
        %v1727 = vld [vmem:[%s186 + $0xee8] sm:$0xff]
        %v1728 = vld [vmem:[%s186 + $0xef0] sm:$0xff]
        %v1729 = vld [vmem:[%s186 + $0xef8] sm:$0xff]
        %v1730 = vld [vmem:[%s186 + $0xf00] sm:$0xff]
        %v1731 = vld [vmem:[%s186 + $0xf08] sm:$0xff]
        %v1732 = vld [vmem:[%s186 + $0xf10] sm:$0xff]
        %v1733 = vld [vmem:[%s186 + $0xf18] sm:$0xff]
        %v1734 = vld [vmem:[%s186 + $0xf20] sm:$0xff]
        %v1735 = vld [vmem:[%s186 + $0xf28] sm:$0xff]
        %v1736 = vld [vmem:[%s186 + $0xf30] sm:$0xff]
        %v1737 = vld [vmem:[%s186 + $0xf38] sm:$0xff]
        %v1738 = vld [vmem:[%s186 + $0xf40] sm:$0xff]
        %v1739 = vld [vmem:[%s186 + $0xf48] sm:$0xff]
        %v1740 = vld [vmem:[%s186 + $0xf50] sm:$0xff]
        %v1741 = vld [vmem:[%s186 + $0xf58] sm:$0xff]
        %v1742 = vld [vmem:[%s186 + $0xf60] sm:$0xff]
        %v1743 = vld [vmem:[%s186 + $0xf68] sm:$0xff]
        %v1744 = vld [vmem:[%s186 + $0xf70] sm:$0xff]
        %v1745 = vld [vmem:[%s186 + $0xf78] sm:$0xff]
        %v1746 = vld [vmem:[%s186 + $0xf80] sm:$0xff]
        %v1747 = vld [vmem:[%s186 + $0xf88] sm:$0xff]
        %v1748 = vld [vmem:[%s186 + $0xf90] sm:$0xff]
        %v1749 = vld [vmem:[%s186 + $0xf98] sm:$0xff]
        %v1750 = vld [vmem:[%s186 + $0xfa0] sm:$0xff]
        %v1751 = vld [vmem:[%s186 + $0xfa8] sm:$0xff]
        %v1752 = vld [vmem:[%s186 + $0xfb0] sm:$0xff]
        %v1753 = vld [vmem:[%s186 + $0xfb8] sm:$0xff]
        %v1754 = vld [vmem:[%s186 + $0xfc0] sm:$0xff]
        %v1755 = vld [vmem:[%s186 + $0xfc8] sm:$0xff]
        %v1756 = vld [vmem:[%s186 + $0xfd0] sm:$0xff]
        %v1757 = vld [vmem:[%s186 + $0xfd8] sm:$0xff]
        %v1758 = vld [vmem:[%s186 + $0xfe0] sm:$0xff]
        %v1759 = vld [vmem:[%s186 + $0xfe8] sm:$0xff]
        %v1760 = vld [vmem:[%s186 + $0xff0] sm:$0xff]
        %v1761 = vld [vmem:[%s186 + $0xff8] sm:$0xff]
        %v1762 = vld [vmem:[%s186 + $0x1000] sm:$0xff]
        %v1763 = vld [vmem:[%s186 + $0x1008] sm:$0xff]
        %v1764 = vld [vmem:[%s186 + $0x1010] sm:$0xff]
        %v1765 = vld [vmem:[%s186 + $0x1018] sm:$0xff]
        %v1766 = vld [vmem:[%s186 + $0x1020] sm:$0xff]
        %v1767 = vld [vmem:[%s186 + $0x1028] sm:$0xff]
        %v1768 = vld [vmem:[%s186 + $0x1030] sm:$0xff]
        %v1769 = vld [vmem:[%s186 + $0x1038] sm:$0xff]
        %v1770 = vld [vmem:[%s186 + $0x1040] sm:$0xff]
        %v1771 = vld [vmem:[%s186 + $0x1048] sm:$0xff]
        %v1772 = vld [vmem:[%s186 + $0x1050] sm:$0xff]
        %v1773 = vld [vmem:[%s186 + $0x1058] sm:$0xff]
        %v1774 = vld [vmem:[%s186 + $0x1060] sm:$0xff]
        %v1775 = vld [vmem:[%s186 + $0x1068] sm:$0xff]
        %v1776 = vld [vmem:[%s186 + $0x1070] sm:$0xff]
        %v1777 = vld [vmem:[%s186 + $0x1078] sm:$0xff]
        %v1778 = vld [vmem:[%s186 + $0x1080] sm:$0xff]
        %v1779 = vld [vmem:[%s186 + $0x1088] sm:$0xff]
        %v1780 = vld [vmem:[%s186 + $0x1090] sm:$0xff]
        %v1781 = vld [vmem:[%s186 + $0x1098] sm:$0xff]
        %v1782 = vld [vmem:[%s186 + $0x10a0] sm:$0xff]
        %v1783 = vld [vmem:[%s186 + $0x10a8] sm:$0xff]
        %v1784 = vld [vmem:[%s186 + $0x10b0] sm:$0xff]
        %v1785 = vld [vmem:[%s186 + $0x10b8] sm:$0xff]
        %v1786 = vld [vmem:[%s186 + $0x10c0] sm:$0xff]
        %v1787 = vld [vmem:[%s186 + $0x10c8] sm:$0xff]
        %v1788 = vld [vmem:[%s186 + $0x10d0] sm:$0xff]
        %v1789 = vld [vmem:[%s186 + $0x10d8] sm:$0xff]
        %v1790 = vld [vmem:[%s186 + $0x10e0] sm:$0xff]
        %v1791 = vld [vmem:[%s186 + $0x10e8] sm:$0xff]
        %v1792 = vld [vmem:[%s186 + $0x10f0] sm:$0xff]
        %v1793 = vld [vmem:[%s186 + $0x10f8] sm:$0xff]
        %v1794 = vld [vmem:[%s186 + $0x1100] sm:$0xff]
        %v1795 = vld [vmem:[%s186 + $0x1108] sm:$0xff]
        %v1796 = vld [vmem:[%s186 + $0x1110] sm:$0xff]
        %v1797 = vld [vmem:[%s186 + $0x1118] sm:$0xff]
        %v1798 = vld [vmem:[%s186 + $0x1120] sm:$0xff]
        %v1799 = vld [vmem:[%s186 + $0x1128] sm:$0xff]
        %v1800 = vld [vmem:[%s186 + $0x1130] sm:$0xff]
        %v1801 = vld [vmem:[%s186 + $0x1138] sm:$0xff]
        %v1802 = vld [vmem:[%s186 + $0x1140] sm:$0xff]
        %v1803 = vld [vmem:[%s186 + $0x1148] sm:$0xff]
        %v1804 = vld [vmem:[%s186 + $0x1150] sm:$0xff]
        %v1805 = vld [vmem:[%s186 + $0x1158] sm:$0xff]
        %v1806 = vld [vmem:[%s186 + $0x1160] sm:$0xff]
        %v1807 = vld [vmem:[%s186 + $0x1168] sm:$0xff]
        %v1808 = vld [vmem:[%s186 + $0x1170] sm:$0xff]
        %v1809 = vld [vmem:[%s186 + $0x1178] sm:$0xff]
        %v1810 = vld [vmem:[%s186 + $0x1180] sm:$0xff]
        %v1811 = vld [vmem:[%s186 + $0x1188] sm:$0xff]
        %v1812 = vld [vmem:[%s186 + $0x1190] sm:$0xff]
        %v1813 = vld [vmem:[%s186 + $0x1198] sm:$0xff]
        %v1814 = vld [vmem:[%s186 + $0x11a0] sm:$0xff]
        %v1815 = vld [vmem:[%s186 + $0x11a8] sm:$0xff]
        %v1816 = vld [vmem:[%s186 + $0x11b0] sm:$0xff]
        %v1817 = vld [vmem:[%s186 + $0x11b8] sm:$0xff]
        %v1818 = vld [vmem:[%s186 + $0x11c0] sm:$0xff]
        %v1819 = vld [vmem:[%s186 + $0x11c8] sm:$0xff]
        %v1820 = vld [vmem:[%s186 + $0x11d0] sm:$0xff]
        %v1821 = vld [vmem:[%s186 + $0x11d8] sm:$0xff]
        %v1822 = vld [vmem:[%s186 + $0x11e0] sm:$0xff]
        %v1823 = vld [vmem:[%s186 + $0x11e8] sm:$0xff]
        %v1824 = vld [vmem:[%s186 + $0x11f0] sm:$0xff]
        %v1825 = vld [vmem:[%s186 + $0x11f8] sm:$0xff]
        %v1826 = vld [vmem:[%s186 + $0x1200] sm:$0xff]
        %v1827 = vld [vmem:[%s186 + $0x1208] sm:$0xff]
        %v1828 = vld [vmem:[%s186 + $0x1210] sm:$0xff]
        %v1829 = vld [vmem:[%s186 + $0x1218] sm:$0xff]
        %v1830 = vld [vmem:[%s186 + $0x1220] sm:$0xff]
        %v1831 = vld [vmem:[%s186 + $0x1228] sm:$0xff]
        %v1832 = vld [vmem:[%s186 + $0x1230] sm:$0xff]
        %v1833 = vld [vmem:[%s186 + $0x1238] sm:$0xff]
        %v1834 = vld [vmem:[%s186 + $0x1240] sm:$0xff]
        %v1835 = vld [vmem:[%s186 + $0x1248] sm:$0xff]
        %v1836 = vld [vmem:[%s186 + $0x1250] sm:$0xff]
        %v1837 = vld [vmem:[%s186 + $0x1258] sm:$0xff]
        %v1838 = vld [vmem:[%s186 + $0x1260] sm:$0xff]
        %v1839 = vld [vmem:[%s186 + $0x1268] sm:$0xff]
        %v1840 = vld [vmem:[%s186 + $0x1270] sm:$0xff]
        %v1841 = vld [vmem:[%s186 + $0x1278] sm:$0xff]
        %v1842 = vld [vmem:[%s186 + $0x1280] sm:$0xff]
        %v1843 = vld [vmem:[%s186 + $0x1288] sm:$0xff]
        %v1844 = vld [vmem:[%s186 + $0x1290] sm:$0xff]
        %v1845 = vld [vmem:[%s186 + $0x1298] sm:$0xff]
        %v1846 = vld [vmem:[%s186 + $0x12a0] sm:$0xff]
        %v1847 = vld [vmem:[%s186 + $0x12a8] sm:$0xff]
        %v1848 = vld [vmem:[%s186 + $0x12b0] sm:$0xff]
        %v1849 = vld [vmem:[%s186 + $0x12b8] sm:$0xff]
        %v1850 = vld [vmem:[%s186 + $0x12c0] sm:$0xff]
        %v1851 = vld [vmem:[%s186 + $0x12c8] sm:$0xff]
        %v1852 = vld [vmem:[%s186 + $0x12d0] sm:$0xff]
        %v1853 = vld [vmem:[%s186 + $0x12d8] sm:$0xff]
        %v1854 = vld [vmem:[%s186 + $0x12e0] sm:$0xff]
        %v1855 = vld [vmem:[%s186 + $0x12e8] sm:$0xff]
        %v1856 = vld [vmem:[%s186 + $0x12f0] sm:$0xff]
        %v1857 = vld [vmem:[%s186 + $0x12f8] sm:$0xff]
        %v1858 = vld [vmem:[%s186 + $0x1300] sm:$0xff]
        %v1859 = vld [vmem:[%s186 + $0x1308] sm:$0xff]
        %v1860 = vld [vmem:[%s186 + $0x1310] sm:$0xff]
        %v1861 = vld [vmem:[%s186 + $0x1318] sm:$0xff]
        %v1862 = vld [vmem:[%s186 + $0x1320] sm:$0xff]
        %v1863 = vld [vmem:[%s186 + $0x1328] sm:$0xff]
        %v1864 = vld [vmem:[%s186 + $0x1330] sm:$0xff]
        %v1865 = vld [vmem:[%s186 + $0x1338] sm:$0xff]
        %v1866 = vld [vmem:[%s186 + $0x1340] sm:$0xff]
        %v1867 = vld [vmem:[%s186 + $0x1348] sm:$0xff]
        %v1868 = vld [vmem:[%s186 + $0x1350] sm:$0xff]
        %v1869 = vld [vmem:[%s186 + $0x1358] sm:$0xff]
        %v1870 = vld [vmem:[%s186 + $0x1360] sm:$0xff]
        %v1871 = vld [vmem:[%s186 + $0x1368] sm:$0xff]
        %v1872 = vld [vmem:[%s186 + $0x1370] sm:$0xff]
        %v1873 = vld [vmem:[%s186 + $0x1378] sm:$0xff]
        %v1874 = vld [vmem:[%s186 + $0x1380] sm:$0xff]
        %v1875 = vld [vmem:[%s186 + $0x1388] sm:$0xff]
        %v1876 = vld [vmem:[%s186 + $0x1390] sm:$0xff]
        %v1877 = vld [vmem:[%s186 + $0x1398] sm:$0xff]
        %v1878 = vld [vmem:[%s186 + $0x13a0] sm:$0xff]
        %v1879 = vld [vmem:[%s186 + $0x13a8] sm:$0xff]
        %v1880 = vld [vmem:[%s186 + $0x13b0] sm:$0xff]
        %v1881 = vld [vmem:[%s186 + $0x13b8] sm:$0xff]
        %v1882 = vld [vmem:[%s186 + $0x13c0] sm:$0xff]
        %v1883 = vld [vmem:[%s186 + $0x13c8] sm:$0xff]
        %v1884 = vld [vmem:[%s186 + $0x13d0] sm:$0xff]
        %v1885 = vld [vmem:[%s186 + $0x13d8] sm:$0xff]
        %v1886 = vld [vmem:[%s186 + $0x13e0] sm:$0xff]
        %v1887 = vld [vmem:[%s186 + $0x13e8] sm:$0xff]
        %v1888 = vld [vmem:[%s186 + $0x13f0] sm:$0xff]
        %v1889 = vld [vmem:[%s186 + $0x13f8] sm:$0xff]
        %v1890 = vld [vmem:[%s186 + $0x1400] sm:$0xff]
        %v1891 = vld [vmem:[%s186 + $0x1408] sm:$0xff]
        %v1892 = vld [vmem:[%s186 + $0x1410] sm:$0xff]
        %v1893 = vld [vmem:[%s186 + $0x1418] sm:$0xff]
        %v1894 = vld [vmem:[%s186 + $0x1420] sm:$0xff]
        %v1895 = vld [vmem:[%s186 + $0x1428] sm:$0xff]
        %v1896 = vld [vmem:[%s186 + $0x1430] sm:$0xff]
        %v1897 = vld [vmem:[%s186 + $0x1438] sm:$0xff]
        %v1898 = vld [vmem:[%s186 + $0x1440] sm:$0xff]
        %v1899 = vld [vmem:[%s186 + $0x1448] sm:$0xff]
        %v1900 = vld [vmem:[%s186 + $0x1450] sm:$0xff]
        %v1901 = vld [vmem:[%s186 + $0x1458] sm:$0xff]
        %v1902 = vld [vmem:[%s186 + $0x1460] sm:$0xff]
        %v1903 = vld [vmem:[%s186 + $0x1468] sm:$0xff]
        %v1904 = vld [vmem:[%s186 + $0x1470] sm:$0xff]
        %v1905 = vld [vmem:[%s186 + $0x1478] sm:$0xff]
        %v1906 = vld [vmem:[%s186 + $0x1480] sm:$0xff]
        %v1907 = vld [vmem:[%s186 + $0x1488] sm:$0xff]
        %v1908 = vld [vmem:[%s186 + $0x1490] sm:$0xff]
        %v1909 = vld [vmem:[%s186 + $0x1498] sm:$0xff]
        %v1910 = vld [vmem:[%s186 + $0x14a0] sm:$0xff]
        %v1911 = vld [vmem:[%s186 + $0x14a8] sm:$0xff]
        %v1912 = vld [vmem:[%s186 + $0x14b0] sm:$0xff]
        %v1913 = vld [vmem:[%s186 + $0x14b8] sm:$0xff]
        %v1914 = vld [vmem:[%s186 + $0x14c0] sm:$0xff]
        %v1915 = vld [vmem:[%s186 + $0x14c8] sm:$0xff]
        %v1916 = vld [vmem:[%s186 + $0x14d0] sm:$0xff]
        %v1917 = vld [vmem:[%s186 + $0x14d8] sm:$0xff]
        %v1918 = vld [vmem:[%s186 + $0x14e0] sm:$0xff]
        %v1919 = vld [vmem:[%s186 + $0x14e8] sm:$0xff]
        %v1920 = vld [vmem:[%s186 + $0x14f0] sm:$0xff]
        %v1921 = vld [vmem:[%s186 + $0x14f8] sm:$0xff]
        %v1922 = vld [vmem:[%s186 + $0x1500] sm:$0xff]
        %v1923 = vld [vmem:[%s186 + $0x1508] sm:$0xff]
        %v1924 = vld [vmem:[%s186 + $0x1510] sm:$0xff]
        %v1925 = vld [vmem:[%s186 + $0x1518] sm:$0xff]
        %v1926 = vld [vmem:[%s186 + $0x1520] sm:$0xff]
        %v1927 = vld [vmem:[%s186 + $0x1528] sm:$0xff]
        %v1928 = vld [vmem:[%s186 + $0x1530] sm:$0xff]
        %v1929 = vld [vmem:[%s186 + $0x1538] sm:$0xff]
        %v1930 = vld [vmem:[%s186 + $0x1540] sm:$0xff]
        %v1931 = vld [vmem:[%s186 + $0x1548] sm:$0xff]
        %v1932 = vld [vmem:[%s186 + $0x1550] sm:$0xff]
        %v1933 = vld [vmem:[%s186 + $0x1558] sm:$0xff]
        %v1934 = vld [vmem:[%s186 + $0x1560] sm:$0xff]
        %v1935 = vld [vmem:[%s186 + $0x1568] sm:$0xff]
        %v1936 = vld [vmem:[%s186 + $0x1570] sm:$0xff]
        %v1937 = vld [vmem:[%s186 + $0x1578] sm:$0xff]
        %v1938 = vld [vmem:[%s186 + $0x1580] sm:$0xff]
        %v1939 = vld [vmem:[%s186 + $0x1588] sm:$0xff]
        %v1940 = vld [vmem:[%s186 + $0x1590] sm:$0xff]
        %v1941 = vld [vmem:[%s186 + $0x1598] sm:$0xff]
        %v1942 = vld [vmem:[%s186 + $0x15a0] sm:$0xff]
        %v1943 = vld [vmem:[%s186 + $0x15a8] sm:$0xff]
        %v1944 = vld [vmem:[%s186 + $0x15b0] sm:$0xff]
        %v1945 = vld [vmem:[%s186 + $0x15b8] sm:$0xff]
        %v1946 = vld [vmem:[%s186 + $0x15c0] sm:$0xff]
        %v1947 = vld [vmem:[%s186 + $0x15c8] sm:$0xff]
        %v1948 = vld [vmem:[%s186 + $0x15d0] sm:$0xff]
        %v1949 = vld [vmem:[%s186 + $0x15d8] sm:$0xff]
        %v1950 = vld [vmem:[%s186 + $0x15e0] sm:$0xff]
        %v1951 = vld [vmem:[%s186 + $0x15e8] sm:$0xff]
        %v1952 = vld [vmem:[%s186 + $0x15f0] sm:$0xff]
        %v1953 = vld [vmem:[%s186 + $0x15f8] sm:$0xff]
        %v1954 = vld [vmem:[%s186 + $0x1600] sm:$0xff]
        %v1955 = vld [vmem:[%s186 + $0x1608] sm:$0xff]
        %v1956 = vld [vmem:[%s186 + $0x1610] sm:$0xff]
        %v1957 = vld [vmem:[%s186 + $0x1618] sm:$0xff]
        %v1958 = vld [vmem:[%s186 + $0x1620] sm:$0xff]
        %v1959 = vld [vmem:[%s186 + $0x1628] sm:$0xff]
        %v1960 = vld [vmem:[%s186 + $0x1630] sm:$0xff]
        %v1961 = vld [vmem:[%s186 + $0x1638] sm:$0xff]
        %v1962 = vld [vmem:[%s186 + $0x1640] sm:$0xff]
        %v1963 = vld [vmem:[%s186 + $0x1648] sm:$0xff]
        %v1964 = vld [vmem:[%s186 + $0x1650] sm:$0xff]
        %v1965 = vld [vmem:[%s186 + $0x1658] sm:$0xff]
        %v1966 = vld [vmem:[%s186 + $0x1660] sm:$0xff]
        %v1967 = vld [vmem:[%s186 + $0x1668] sm:$0xff]
        %v1968 = vld [vmem:[%s186 + $0x1670] sm:$0xff]
        %v1969 = vld [vmem:[%s186 + $0x1678] sm:$0xff]
        %v1970 = vld [vmem:[%s186 + $0x1680] sm:$0xff]
        %v1971 = vld [vmem:[%s186 + $0x1688] sm:$0xff]
        %v1972 = vld [vmem:[%s186 + $0x1690] sm:$0xff]
        %v1973 = vld [vmem:[%s186 + $0x1698] sm:$0xff]
        %v1974 = vld [vmem:[%s186 + $0x16a0] sm:$0xff]
        %v1975 = vld [vmem:[%s186 + $0x16a8] sm:$0xff]
        %v1976 = vld [vmem:[%s186 + $0x16b0] sm:$0xff]
        %v1977 = vld [vmem:[%s186 + $0x16b8] sm:$0xff]
        %v1978 = vld [vmem:[%s186 + $0x16c0] sm:$0xff]
        %v1979 = vld [vmem:[%s186 + $0x16c8] sm:$0xff]
        %v1980 = vld [vmem:[%s186 + $0x16d0] sm:$0xff]
        %v1981 = vld [vmem:[%s186 + $0x16d8] sm:$0xff]
        %v1982 = vld [vmem:[%s186 + $0x16e0] sm:$0xff]
        %v1983 = vld [vmem:[%s186 + $0x16e8] sm:$0xff]
        %v1984 = vld [vmem:[%s186 + $0x16f0] sm:$0xff]
        %v1985 = vld [vmem:[%s186 + $0x16f8] sm:$0xff]
        %v1986 = vld [vmem:[%s186 + $0x1700] sm:$0xff]
        %v1987 = vld [vmem:[%s186 + $0x1708] sm:$0xff]
        %v1988 = vld [vmem:[%s186 + $0x1710] sm:$0xff]
        %v1989 = vld [vmem:[%s186 + $0x1718] sm:$0xff]
        %v1990 = vld [vmem:[%s186 + $0x1720] sm:$0xff]
        %v1991 = vld [vmem:[%s186 + $0x1728] sm:$0xff]
        %v1992 = vld [vmem:[%s186 + $0x1730] sm:$0xff]
        %v1993 = vld [vmem:[%s186 + $0x1738] sm:$0xff]
        %v1994 = vld [vmem:[%s186 + $0x1740] sm:$0xff]
        %v1995 = vld [vmem:[%s186 + $0x1748] sm:$0xff]
        %v1996 = vld [vmem:[%s186 + $0x1750] sm:$0xff]
        %v1997 = vld [vmem:[%s186 + $0x1758] sm:$0xff]
        %v1998 = vld [vmem:[%s186 + $0x1760] sm:$0xff]
        %v1999 = vld [vmem:[%s186 + $0x1768] sm:$0xff]
        %v2000 = vld [vmem:[%s186 + $0x1770] sm:$0xff]
        %v2001 = vld [vmem:[%s186 + $0x1778] sm:$0xff]
        %v2002 = vld [vmem:[%s186 + $0x1780] sm:$0xff]
        %v2003 = vld [vmem:[%s186 + $0x1788] sm:$0xff]
        %v2004 = vld [vmem:[%s186 + $0x1790] sm:$0xff]
        %v2005 = vld [vmem:[%s186 + $0x1798] sm:$0xff]
        %v2006 = vld [vmem:[%s186 + $0x17a0] sm:$0xff]
        %v2007 = vld [vmem:[%s186 + $0x17a8] sm:$0xff]
        %v2008 = vld [vmem:[%s186 + $0x17b0] sm:$0xff]
        %v2009 = vld [vmem:[%s186 + $0x17b8] sm:$0xff]
        %v2010 = vld [vmem:[%s186 + $0x17c0] sm:$0xff]
        %v2011 = vld [vmem:[%s186 + $0x17c8] sm:$0xff]
        %v2012 = vld [vmem:[%s186 + $0x17d0] sm:$0xff]
        %v2013 = vld [vmem:[%s186 + $0x17d8] sm:$0xff]
        %v2014 = vld [vmem:[%s186 + $0x17e0] sm:$0xff]
        %v2015 = vld [vmem:[%s186 + $0x17e8] sm:$0xff]
        %v2016 = vld [vmem:[%s186 + $0x17f0] sm:$0xff]
        %v2017 = vld [vmem:[%s186 + $0x17f8] sm:$0xff]
        %v2018 = vld [vmem:[%s186 + $0x1800] sm:$0xff]
        %v2019 = vld [vmem:[%s186 + $0x1808] sm:$0xff]
        %v2020 = vld [vmem:[%s186 + $0x1810] sm:$0xff]
        %v2021 = vld [vmem:[%s186 + $0x1818] sm:$0xff]
        %v2022 = vld [vmem:[%s186 + $0x1820] sm:$0xff]
        %v2023 = vld [vmem:[%s186 + $0x1828] sm:$0xff]
        %v2024 = vld [vmem:[%s186 + $0x1830] sm:$0xff]
        %v2025 = vld [vmem:[%s186 + $0x1838] sm:$0xff]
        %v2026 = vld [vmem:[%s186 + $0x1840] sm:$0xff]
        %v2027 = vld [vmem:[%s186 + $0x1848] sm:$0xff]
        %v2028 = vld [vmem:[%s186 + $0x1850] sm:$0xff]
        %v2029 = vld [vmem:[%s186 + $0x1858] sm:$0xff]
        %v2030 = vld [vmem:[%s186 + $0x1860] sm:$0xff]
        %v2031 = vld [vmem:[%s186 + $0x1868] sm:$0xff]
        %v2032 = vld [vmem:[%s186 + $0x1870] sm:$0xff]
        %v2033 = vld [vmem:[%s186 + $0x1878] sm:$0xff]
        %v2034 = vld [vmem:[%s186 + $0x1880] sm:$0xff]
        %v2035 = vld [vmem:[%s186 + $0x1888] sm:$0xff]
        %v2036 = vld [vmem:[%s186 + $0x1890] sm:$0xff]
        %v2037 = vld [vmem:[%s186 + $0x1898] sm:$0xff]
        %v2038 = vld [vmem:[%s186 + $0x18a0] sm:$0xff]
        %v2039 = vld [vmem:[%s186 + $0x18a8] sm:$0xff]
        %v2040 = vld [vmem:[%s186 + $0x18b0] sm:$0xff]
        %v2041 = vld [vmem:[%s186 + $0x18b8] sm:$0xff]
        %v2042 = vld [vmem:[%s186 + $0x18c0] sm:$0xff]
        %v2043 = vld [vmem:[%s186 + $0x18c8] sm:$0xff]
        %v2044 = vld [vmem:[%s186 + $0x18d0] sm:$0xff]
        %v2045 = vld [vmem:[%s186 + $0x18d8] sm:$0xff]
        %v2046 = vld [vmem:[%s186 + $0x18e0] sm:$0xff]
        %v2047 = vld [vmem:[%s186 + $0x18e8] sm:$0xff]
        %v2048 = vld [vmem:[%s186 + $0x18f0] sm:$0xff]
        %v2049 = vld [vmem:[%s186 + $0x18f8] sm:$0xff]
        %v2050 = vld [vmem:[%s186 + $0x1900] sm:$0xff]
        %v2051 = vld [vmem:[%s186 + $0x1908] sm:$0xff]
        %v2052 = vld [vmem:[%s186 + $0x1910] sm:$0xff]
        %v2053 = vld [vmem:[%s186 + $0x1918] sm:$0xff]
        %v2054 = vld [vmem:[%s186 + $0x1920] sm:$0xff]
        %v2055 = vld [vmem:[%s186 + $0x1928] sm:$0xff]
        %v2056 = vld [vmem:[%s186 + $0x1930] sm:$0xff]
        %v2057 = vld [vmem:[%s186 + $0x1938] sm:$0xff]
        %v2058 = vld [vmem:[%s186 + $0x1940] sm:$0xff]
        %v2059 = vld [vmem:[%s186 + $0x1948] sm:$0xff]
        %v2060 = vld [vmem:[%s186 + $0x1950] sm:$0xff]
        %v2061 = vld [vmem:[%s186 + $0x1958] sm:$0xff]
        %v2062 = vld [vmem:[%s186 + $0x1960] sm:$0xff]
        %v2063 = vld [vmem:[%s186 + $0x1968] sm:$0xff]
        %v2064 = vld [vmem:[%s186 + $0x1970] sm:$0xff]
        %v2065 = vld [vmem:[%s186 + $0x1978] sm:$0xff]
        %v2066 = vld [vmem:[%s186 + $0x1980] sm:$0xff]
        %v2067 = vld [vmem:[%s186 + $0x1988] sm:$0xff]
        %v2068 = vld [vmem:[%s186 + $0x1990] sm:$0xff]
        %v2069 = vld [vmem:[%s186 + $0x1998] sm:$0xff]
        %v2070 = vld [vmem:[%s186 + $0x19a0] sm:$0xff]
        %v2071 = vld [vmem:[%s186 + $0x19a8] sm:$0xff]
        %v2072 = vld [vmem:[%s186 + $0x19b0] sm:$0xff]
        %v2073 = vld [vmem:[%s186 + $0x19b8] sm:$0xff]
        %v2074 = vld [vmem:[%s186 + $0x19c0] sm:$0xff]
        %v2075 = vld [vmem:[%s186 + $0x19c8] sm:$0xff]
        %v2076 = vld [vmem:[%s186 + $0x19d0] sm:$0xff]
        %v2077 = vld [vmem:[%s186 + $0x19d8] sm:$0xff]
        %v2078 = vld [vmem:[%s186 + $0x19e0] sm:$0xff]
        %v2079 = vld [vmem:[%s186 + $0x19e8] sm:$0xff]
        %v2080 = vld [vmem:[%s186 + $0x19f0] sm:$0xff]
        %v2081 = vld [vmem:[%s186 + $0x19f8] sm:$0xff]
        %v2082 = vld [vmem:[%s186 + $0x1a00] sm:$0xff]
        %v2083 = vld [vmem:[%s186 + $0x1a08] sm:$0xff]
        %v2084 = vld [vmem:[%s186 + $0x1a10] sm:$0xff]
        %v2085 = vld [vmem:[%s186 + $0x1a18] sm:$0xff]
        %v2086 = vld [vmem:[%s186 + $0x1a20] sm:$0xff]
        %v2087 = vld [vmem:[%s186 + $0x1a28] sm:$0xff]
        %v2088 = vld [vmem:[%s186 + $0x1a30] sm:$0xff]
        %v2089 = vld [vmem:[%s186 + $0x1a38] sm:$0xff]
        %v2090 = vld [vmem:[%s186 + $0x1a40] sm:$0xff]
        %v2091 = vld [vmem:[%s186 + $0x1a48] sm:$0xff]
        %v2092 = vld [vmem:[%s186 + $0x1a50] sm:$0xff]
        %v2093 = vld [vmem:[%s186 + $0x1a58] sm:$0xff]
        %v2094 = vld [vmem:[%s186 + $0x1a60] sm:$0xff]
        %v2095 = vld [vmem:[%s186 + $0x1a68] sm:$0xff]
        %v2096 = vld [vmem:[%s186 + $0x1a70] sm:$0xff]
        %v2097 = vld [vmem:[%s186 + $0x1a78] sm:$0xff]
        %v2098 = vld [vmem:[%s186 + $0x1a80] sm:$0xff]
        %v2099 = vld [vmem:[%s186 + $0x1a88] sm:$0xff]
        %v2100 = vld [vmem:[%s186 + $0x1a90] sm:$0xff]
        %v2101 = vld [vmem:[%s186 + $0x1a98] sm:$0xff]
        %v2102 = vld [vmem:[%s186 + $0x1aa0] sm:$0xff]
        %v2103 = vld [vmem:[%s186 + $0x1aa8] sm:$0xff]
        %v2104 = vld [vmem:[%s186 + $0x1ab0] sm:$0xff]
        %v2105 = vld [vmem:[%s186 + $0x1ab8] sm:$0xff]
        %v2106 = vld [vmem:[%s186 + $0x1ac0] sm:$0xff]
        %v2107 = vld [vmem:[%s186 + $0x1ac8] sm:$0xff]
        %v2108 = vld [vmem:[%s186 + $0x1ad0] sm:$0xff]
        %v2109 = vld [vmem:[%s186 + $0x1ad8] sm:$0xff]
        %v2110 = vld [vmem:[%s186 + $0x1ae0] sm:$0xff]
        %v2111 = vld [vmem:[%s186 + $0x1ae8] sm:$0xff]
        %v2112 = vld [vmem:[%s186 + $0x1af0] sm:$0xff]
        %v2113 = vld [vmem:[%s186 + $0x1af8] sm:$0xff]
        %v2114 = vld [vmem:[%s186 + $0x1b00] sm:$0xff]
        %v2115 = vld [vmem:[%s186 + $0x1b08] sm:$0xff]
        %v2116 = vld [vmem:[%s186 + $0x1b10] sm:$0xff]
        %v2117 = vld [vmem:[%s186 + $0x1b18] sm:$0xff]
        %v2118 = vld [vmem:[%s186 + $0x1b20] sm:$0xff]
        %v2119 = vld [vmem:[%s186 + $0x1b28] sm:$0xff]
        %v2120 = vld [vmem:[%s186 + $0x1b30] sm:$0xff]
        %v2121 = vld [vmem:[%s186 + $0x1b38] sm:$0xff]
        %v2122 = vld [vmem:[%s186 + $0x1b40] sm:$0xff]
        %v2123 = vld [vmem:[%s186 + $0x1b48] sm:$0xff]
        %v2124 = vld [vmem:[%s186 + $0x1b50] sm:$0xff]
        %v2125 = vld [vmem:[%s186 + $0x1b58] sm:$0xff]
        %v2126 = vld [vmem:[%s186 + $0x1b60] sm:$0xff]
        %v2127 = vld [vmem:[%s186 + $0x1b68] sm:$0xff]
        %v2128 = vld [vmem:[%s186 + $0x1b70] sm:$0xff]
        %v2129 = vld [vmem:[%s186 + $0x1b78] sm:$0xff]
        %v2130 = vld [vmem:[%s186 + $0x1b80] sm:$0xff]
        %v2131 = vld [vmem:[%s186 + $0x1b88] sm:$0xff]
        %v2132 = vld [vmem:[%s186 + $0x1b90] sm:$0xff]
        %v2133 = vld [vmem:[%s186 + $0x1b98] sm:$0xff]
        %v2134 = vld [vmem:[%s186 + $0x1ba0] sm:$0xff]
        %v2135 = vld [vmem:[%s186 + $0x1ba8] sm:$0xff]
        %v2136 = vld [vmem:[%s186 + $0x1bb0] sm:$0xff]
        %v2137 = vld [vmem:[%s186 + $0x1bb8] sm:$0xff]
        %v2138 = vld [vmem:[%s186 + $0x1bc0] sm:$0xff]
        %v2139 = vld [vmem:[%s186 + $0x1bc8] sm:$0xff]
        %v2140 = vld [vmem:[%s186 + $0x1bd0] sm:$0xff]
        %v2141 = vld [vmem:[%s186 + $0x1bd8] sm:$0xff]
        %v2142 = vld [vmem:[%s186 + $0x1be0] sm:$0xff]
        %v2143 = vld [vmem:[%s186 + $0x1be8] sm:$0xff]
        %v2144 = vld [vmem:[%s186 + $0x1bf0] sm:$0xff]
        %v2145 = vld [vmem:[%s186 + $0x1bf8] sm:$0xff]
        %v2146 = vld [vmem:[%s186 + $0x1c00] sm:$0xff]
        %v2147 = vld [vmem:[%s186 + $0x1c08] sm:$0xff]
        %v2148 = vld [vmem:[%s186 + $0x1c10] sm:$0xff]
        %v2149 = vld [vmem:[%s186 + $0x1c18] sm:$0xff]
        %v2150 = vld [vmem:[%s186 + $0x1c20] sm:$0xff]
        %v2151 = vld [vmem:[%s186 + $0x1c28] sm:$0xff]
        %v2152 = vld [vmem:[%s186 + $0x1c30] sm:$0xff]
        %v2153 = vld [vmem:[%s186 + $0x1c38] sm:$0xff]
        %v2154 = vld [vmem:[%s186 + $0x1c40] sm:$0xff]
        %v2155 = vld [vmem:[%s186 + $0x1c48] sm:$0xff]
        %v2156 = vld [vmem:[%s186 + $0x1c50] sm:$0xff]
        %v2157 = vld [vmem:[%s186 + $0x1c58] sm:$0xff]
        %v2158 = vld [vmem:[%s186 + $0x1c60] sm:$0xff]
        %v2159 = vld [vmem:[%s186 + $0x1c68] sm:$0xff]
        %v2160 = vld [vmem:[%s186 + $0x1c70] sm:$0xff]
        %v2161 = vld [vmem:[%s186 + $0x1c78] sm:$0xff]
        %v2162 = vld [vmem:[%s186 + $0x1c80] sm:$0xff]
        %v2163 = vld [vmem:[%s186 + $0x1c88] sm:$0xff]
        %v2164 = vld [vmem:[%s186 + $0x1c90] sm:$0xff]
        %v2165 = vld [vmem:[%s186 + $0x1c98] sm:$0xff]
        %v2166 = vld [vmem:[%s186 + $0x1ca0] sm:$0xff]
        %v2167 = vld [vmem:[%s186 + $0x1ca8] sm:$0xff]
        %v2168 = vld [vmem:[%s186 + $0x1cb0] sm:$0xff]
        %v2169 = vld [vmem:[%s186 + $0x1cb8] sm:$0xff]
        %v2170 = vld [vmem:[%s186 + $0x1cc0] sm:$0xff]
        %v2171 = vld [vmem:[%s186 + $0x1cc8] sm:$0xff]
        %v2172 = vld [vmem:[%s186 + $0x1cd0] sm:$0xff]
        %v2173 = vld [vmem:[%s186 + $0x1cd8] sm:$0xff]
        %v2174 = vld [vmem:[%s186 + $0x1ce0] sm:$0xff]
        %v2175 = vld [vmem:[%s186 + $0x1ce8] sm:$0xff]
        %v2176 = vld [vmem:[%s186 + $0x1cf0] sm:$0xff]
        %v2177 = vld [vmem:[%s186 + $0x1cf8] sm:$0xff]
        %v2178 = vld [vmem:[%s186 + $0x1d00] sm:$0xff]
        %v2179 = vld [vmem:[%s186 + $0x1d08] sm:$0xff]
        %v2180 = vld [vmem:[%s186 + $0x1d10] sm:$0xff]
        %v2181 = vld [vmem:[%s186 + $0x1d18] sm:$0xff]
        %v2182 = vld [vmem:[%s186 + $0x1d20] sm:$0xff]
        %v2183 = vld [vmem:[%s186 + $0x1d28] sm:$0xff]
        %v2184 = vld [vmem:[%s186 + $0x1d30] sm:$0xff]
        %v2185 = vld [vmem:[%s186 + $0x1d38] sm:$0xff]
        %v2186 = vld [vmem:[%s186 + $0x1d40] sm:$0xff]
        %v2187 = vld [vmem:[%s186 + $0x1d48] sm:$0xff]
        %v2188 = vld [vmem:[%s186 + $0x1d50] sm:$0xff]
        %v2189 = vld [vmem:[%s186 + $0x1d58] sm:$0xff]
        %v2190 = vld [vmem:[%s186 + $0x1d60] sm:$0xff]
        %v2191 = vld [vmem:[%s186 + $0x1d68] sm:$0xff]
        %v2192 = vld [vmem:[%s186 + $0x1d70] sm:$0xff]
        %v2193 = vld [vmem:[%s186 + $0x1d78] sm:$0xff]
        %v2194 = vld [vmem:[%s186 + $0x1d80] sm:$0xff]
        %v2195 = vld [vmem:[%s186 + $0x1d88] sm:$0xff]
        %v2196 = vld [vmem:[%s186 + $0x1d90] sm:$0xff]
        %v2197 = vld [vmem:[%s186 + $0x1d98] sm:$0xff]
        %v2198 = vld [vmem:[%s186 + $0x1da0] sm:$0xff]
        %v2199 = vld [vmem:[%s186 + $0x1da8] sm:$0xff]
        %v2200 = vld [vmem:[%s186 + $0x1db0] sm:$0xff]
        %v2201 = vld [vmem:[%s186 + $0x1db8] sm:$0xff]
        %v2202 = vld [vmem:[%s186 + $0x1dc0] sm:$0xff]
        %v2203 = vld [vmem:[%s186 + $0x1dc8] sm:$0xff]
        %v2204 = vld [vmem:[%s186 + $0x1dd0] sm:$0xff]
        %v2205 = vld [vmem:[%s186 + $0x1dd8] sm:$0xff]
        %v2206 = vld [vmem:[%s186 + $0x1de0] sm:$0xff]
        %v2207 = vld [vmem:[%s186 + $0x1de8] sm:$0xff]
        %v2208 = vld [vmem:[%s186 + $0x1df0] sm:$0xff]
        %v2209 = vld [vmem:[%s186 + $0x1df8] sm:$0xff]
        %v2210 = vld [vmem:[%s186 + $0x1e00] sm:$0xff]
        %v2211 = vld [vmem:[%s186 + $0x1e08] sm:$0xff]
        %v2212 = vld [vmem:[%s186 + $0x1e10] sm:$0xff]
        %v2213 = vld [vmem:[%s186 + $0x1e18] sm:$0xff]
        %v2214 = vld [vmem:[%s186 + $0x1e20] sm:$0xff]
        %v2215 = vld [vmem:[%s186 + $0x1e28] sm:$0xff]
        %v2216 = vld [vmem:[%s186 + $0x1e30] sm:$0xff]
        %v2217 = vld [vmem:[%s186 + $0x1e38] sm:$0xff]
        %v2218 = vld [vmem:[%s186 + $0x1e40] sm:$0xff]
        %v2219 = vld [vmem:[%s186 + $0x1e48] sm:$0xff]
        %v2220 = vld [vmem:[%s186 + $0x1e50] sm:$0xff]
        %v2221 = vld [vmem:[%s186 + $0x1e58] sm:$0xff]
        %v2222 = vld [vmem:[%s186 + $0x1e60] sm:$0xff]
        %v2223 = vld [vmem:[%s186 + $0x1e68] sm:$0xff]
        %v2224 = vld [vmem:[%s186 + $0x1e70] sm:$0xff]
        %v2225 = vld [vmem:[%s186 + $0x1e78] sm:$0xff]
        %v2226 = vld [vmem:[%s186 + $0x1e80] sm:$0xff]
        %v2227 = vld [vmem:[%s186 + $0x1e88] sm:$0xff]
        %v2228 = vld [vmem:[%s186 + $0x1e90] sm:$0xff]
        %v2229 = vld [vmem:[%s186 + $0x1e98] sm:$0xff]
        %v2230 = vld [vmem:[%s186 + $0x1ea0] sm:$0xff]
        %v2231 = vld [vmem:[%s186 + $0x1ea8] sm:$0xff]
        %v2232 = vld [vmem:[%s186 + $0x1eb0] sm:$0xff]
        %v2233 = vld [vmem:[%s186 + $0x1eb8] sm:$0xff]
        %v2234 = vld [vmem:[%s186 + $0x1ec0] sm:$0xff]
        %v2235 = vld [vmem:[%s186 + $0x1ec8] sm:$0xff]
        %v2236 = vld [vmem:[%s186 + $0x1ed0] sm:$0xff]
        %v2237 = vld [vmem:[%s186 + $0x1ed8] sm:$0xff]
        %v2238 = vld [vmem:[%s186 + $0x1ee0] sm:$0xff]
        %v2239 = vld [vmem:[%s186 + $0x1ee8] sm:$0xff]
        %v2240 = vld [vmem:[%s186 + $0x1ef0] sm:$0xff]
        %v2241 = vld [vmem:[%s186 + $0x1ef8] sm:$0xff]
        %v2242 = vld [vmem:[%s186 + $0x1f00] sm:$0xff]
        %v2243 = vld [vmem:[%s186 + $0x1f08] sm:$0xff]
        %v2244 = vld [vmem:[%s186 + $0x1f10] sm:$0xff]
        %v2245 = vld [vmem:[%s186 + $0x1f18] sm:$0xff]
        %v2246 = vld [vmem:[%s186 + $0x1f20] sm:$0xff]
        %v2247 = vld [vmem:[%s186 + $0x1f28] sm:$0xff]
        %v2248 = vld [vmem:[%s186 + $0x1f30] sm:$0xff]
        %v2249 = vld [vmem:[%s186 + $0x1f38] sm:$0xff]
        %v2250 = vld [vmem:[%s186 + $0x1f40] sm:$0xff]
        %v2251 = vld [vmem:[%s186 + $0x1f48] sm:$0xff]
        %v2252 = vld [vmem:[%s186 + $0x1f50] sm:$0xff]
        %v2253 = vld [vmem:[%s186 + $0x1f58] sm:$0xff]
        %v2254 = vld [vmem:[%s186 + $0x1f60] sm:$0xff]
        %v2255 = vld [vmem:[%s186 + $0x1f68] sm:$0xff]
        %v2256 = vld [vmem:[%s186 + $0x1f70] sm:$0xff]
        %v2257 = vld [vmem:[%s186 + $0x1f78] sm:$0xff]
        %v2258 = vld [vmem:[%s186 + $0x1f80] sm:$0xff]
        %v2259 = vld [vmem:[%s186 + $0x1f88] sm:$0xff]
        %v2260 = vld [vmem:[%s186 + $0x1f90] sm:$0xff]
        %v2261 = vld [vmem:[%s186 + $0x1f98] sm:$0xff]
        %v2262 = vld [vmem:[%s186 + $0x1fa0] sm:$0xff]
        %v2263 = vld [vmem:[%s186 + $0x1fa8] sm:$0xff]
        %v2264 = vld [vmem:[%s186 + $0x1fb0] sm:$0xff]
        %v2265 = vld [vmem:[%s186 + $0x1fb8] sm:$0xff]
        %v2266 = vld [vmem:[%s186 + $0x1fc0] sm:$0xff]
        %v2267 = vld [vmem:[%s186 + $0x1fc8] sm:$0xff]
        %v2268 = vld [vmem:[%s186 + $0x1fd0] sm:$0xff]
        %v2269 = vld [vmem:[%s186 + $0x1fd8] sm:$0xff]
        %v2270 = vld [vmem:[%s186 + $0x1fe0] sm:$0xff]
        %v2271 = vld [vmem:[%s186 + $0x1fe8] sm:$0xff]
        %v2272 = vld [vmem:[%s186 + $0x1ff0] sm:$0xff]
        %v2273 = vld [vmem:[%s186 + $0x1ff8] sm:$0xff]
        %v2274 = vmin.f32 %v226, %v1250
        %v2275 = vmin.f32 %v227, %v1251
        %v2276 = vmin.f32 %v228, %v1252
        %v2277 = vmin.f32 %v229, %v1253
        %v2278 = vmin.f32 %v230, %v1254
        %v2279 = vmin.f32 %v231, %v1255
        %v2280 = vmin.f32 %v232, %v1256
        %v2281 = vmin.f32 %v233, %v1257
        %v2282 = vmin.f32 %v234, %v1258
        %v2283 = vmin.f32 %v235, %v1259
        %v2284 = vmin.f32 %v236, %v1260
        %v2285 = vmin.f32 %v237, %v1261
        %v2286 = vmin.f32 %v238, %v1262
        %v2287 = vmin.f32 %v239, %v1263
        %v2288 = vmin.f32 %v240, %v1264
        %v2289 = vmin.f32 %v241, %v1265
        %v2290 = vmin.f32 %v242, %v1266
        %v2291 = vmin.f32 %v243, %v1267
        %v2292 = vmin.f32 %v244, %v1268
        %v2293 = vmin.f32 %v245, %v1269
        %v2294 = vmin.f32 %v246, %v1270
        %v2295 = vmin.f32 %v247, %v1271
        %v2296 = vmin.f32 %v248, %v1272
        %v2297 = vmin.f32 %v249, %v1273
        %v2298 = vmin.f32 %v250, %v1274
        %v2299 = vmin.f32 %v251, %v1275
        %v2300 = vmin.f32 %v252, %v1276
        %v2301 = vmin.f32 %v253, %v1277
        %v2302 = vmin.f32 %v254, %v1278
        %v2303 = vmin.f32 %v255, %v1279
        %v2304 = vmin.f32 %v256, %v1280
        %v2305 = vmin.f32 %v257, %v1281
        %v2306 = vmin.f32 %v258, %v1282
        %v2307 = vmin.f32 %v259, %v1283
        %v2308 = vmin.f32 %v260, %v1284
        %v2309 = vmin.f32 %v261, %v1285
        %v2310 = vmin.f32 %v262, %v1286
        %v2311 = vmin.f32 %v263, %v1287
        %v2312 = vmin.f32 %v264, %v1288
        %v2313 = vmin.f32 %v265, %v1289
        %v2314 = vmin.f32 %v266, %v1290
        %v2315 = vmin.f32 %v267, %v1291
        %v2316 = vmin.f32 %v268, %v1292
        %v2317 = vmin.f32 %v269, %v1293
        %v2318 = vmin.f32 %v270, %v1294
        %v2319 = vmin.f32 %v271, %v1295
        %v2320 = vmin.f32 %v272, %v1296
        %v2321 = vmin.f32 %v273, %v1297
        %v2322 = vmin.f32 %v274, %v1298
        %v2323 = vmin.f32 %v275, %v1299
        %v2324 = vmin.f32 %v276, %v1300
        %v2325 = vmin.f32 %v277, %v1301
        %v2326 = vmin.f32 %v278, %v1302
        %v2327 = vmin.f32 %v279, %v1303
        %v2328 = vmin.f32 %v280, %v1304
        %v2329 = vmin.f32 %v281, %v1305
        %v2330 = vmin.f32 %v282, %v1306
        %v2331 = vmin.f32 %v283, %v1307
        %v2332 = vmin.f32 %v284, %v1308
        %v2333 = vmin.f32 %v285, %v1309
        %v2334 = vmin.f32 %v286, %v1310
        %v2335 = vmin.f32 %v287, %v1311
        %v2336 = vmin.f32 %v288, %v1312
        %v2337 = vmin.f32 %v289, %v1313
        %v2338 = vmin.f32 %v290, %v1314
        %v2339 = vmin.f32 %v291, %v1315
        %v2340 = vmin.f32 %v292, %v1316
        %v2341 = vmin.f32 %v293, %v1317
        %v2342 = vmin.f32 %v294, %v1318
        %v2343 = vmin.f32 %v295, %v1319
        %v2344 = vmin.f32 %v296, %v1320
        %v2345 = vmin.f32 %v297, %v1321
        %v2346 = vmin.f32 %v298, %v1322
        %v2347 = vmin.f32 %v299, %v1323
        %v2348 = vmin.f32 %v300, %v1324
        %v2349 = vmin.f32 %v301, %v1325
        %v2350 = vmin.f32 %v302, %v1326
        %v2351 = vmin.f32 %v303, %v1327
        %v2352 = vmin.f32 %v304, %v1328
        %v2353 = vmin.f32 %v305, %v1329
        %v2354 = vmin.f32 %v306, %v1330
        %v2355 = vmin.f32 %v307, %v1331
        %v2356 = vmin.f32 %v308, %v1332
        %v2357 = vmin.f32 %v309, %v1333
        %v2358 = vmin.f32 %v310, %v1334
        %v2359 = vmin.f32 %v311, %v1335
        %v2360 = vmin.f32 %v312, %v1336
        %v2361 = vmin.f32 %v313, %v1337
        %v2362 = vmin.f32 %v314, %v1338
        %v2363 = vmin.f32 %v315, %v1339
        %v2364 = vmin.f32 %v316, %v1340
        %v2365 = vmin.f32 %v317, %v1341
        %v2366 = vmin.f32 %v318, %v1342
        %v2367 = vmin.f32 %v319, %v1343
        %v2368 = vmin.f32 %v320, %v1344
        %v2369 = vmin.f32 %v321, %v1345
        %v2370 = vmin.f32 %v322, %v1346
        %v2371 = vmin.f32 %v323, %v1347
        %v2372 = vmin.f32 %v324, %v1348
        %v2373 = vmin.f32 %v325, %v1349
        %v2374 = vmin.f32 %v326, %v1350
        %v2375 = vmin.f32 %v327, %v1351
        %v2376 = vmin.f32 %v328, %v1352
        %v2377 = vmin.f32 %v329, %v1353
        %v2378 = vmin.f32 %v330, %v1354
        %v2379 = vmin.f32 %v331, %v1355
        %v2380 = vmin.f32 %v332, %v1356
        %v2381 = vmin.f32 %v333, %v1357
        %v2382 = vmin.f32 %v334, %v1358
        %v2383 = vmin.f32 %v335, %v1359
        %v2384 = vmin.f32 %v336, %v1360
        %v2385 = vmin.f32 %v337, %v1361
        %v2386 = vmin.f32 %v338, %v1362
        %v2387 = vmin.f32 %v339, %v1363
        %v2388 = vmin.f32 %v340, %v1364
        %v2389 = vmin.f32 %v341, %v1365
        %v2390 = vmin.f32 %v342, %v1366
        %v2391 = vmin.f32 %v343, %v1367
        %v2392 = vmin.f32 %v344, %v1368
        %v2393 = vmin.f32 %v345, %v1369
        %v2394 = vmin.f32 %v346, %v1370
        %v2395 = vmin.f32 %v347, %v1371
        %v2396 = vmin.f32 %v348, %v1372
        %v2397 = vmin.f32 %v349, %v1373
        %v2398 = vmin.f32 %v350, %v1374
        %v2399 = vmin.f32 %v351, %v1375
        %v2400 = vmin.f32 %v352, %v1376
        %v2401 = vmin.f32 %v353, %v1377
        %v2402 = vmin.f32 %v354, %v1378
        %v2403 = vmin.f32 %v355, %v1379
        %v2404 = vmin.f32 %v356, %v1380
        %v2405 = vmin.f32 %v357, %v1381
        %v2406 = vmin.f32 %v358, %v1382
        %v2407 = vmin.f32 %v359, %v1383
        %v2408 = vmin.f32 %v360, %v1384
        %v2409 = vmin.f32 %v361, %v1385
        %v2410 = vmin.f32 %v362, %v1386
        %v2411 = vmin.f32 %v363, %v1387
        %v2412 = vmin.f32 %v364, %v1388
        %v2413 = vmin.f32 %v365, %v1389
        %v2414 = vmin.f32 %v366, %v1390
        %v2415 = vmin.f32 %v367, %v1391
        %v2416 = vmin.f32 %v368, %v1392
        %v2417 = vmin.f32 %v369, %v1393
        %v2418 = vmin.f32 %v370, %v1394
        %v2419 = vmin.f32 %v371, %v1395
        %v2420 = vmin.f32 %v372, %v1396
        %v2421 = vmin.f32 %v373, %v1397
        %v2422 = vmin.f32 %v374, %v1398
        %v2423 = vmin.f32 %v375, %v1399
        %v2424 = vmin.f32 %v376, %v1400
        %v2425 = vmin.f32 %v377, %v1401
        %v2426 = vmin.f32 %v378, %v1402
        %v2427 = vmin.f32 %v379, %v1403
        %v2428 = vmin.f32 %v380, %v1404
        %v2429 = vmin.f32 %v381, %v1405
        %v2430 = vmin.f32 %v382, %v1406
        %v2431 = vmin.f32 %v383, %v1407
        %v2432 = vmin.f32 %v384, %v1408
        %v2433 = vmin.f32 %v385, %v1409
        %v2434 = vmin.f32 %v386, %v1410
        %v2435 = vmin.f32 %v387, %v1411
        %v2436 = vmin.f32 %v388, %v1412
        %v2437 = vmin.f32 %v389, %v1413
        %v2438 = vmin.f32 %v390, %v1414
        %v2439 = vmin.f32 %v391, %v1415
        %v2440 = vmin.f32 %v392, %v1416
        %v2441 = vmin.f32 %v393, %v1417
        %v2442 = vmin.f32 %v394, %v1418
        %v2443 = vmin.f32 %v395, %v1419
        %v2444 = vmin.f32 %v396, %v1420
        %v2445 = vmin.f32 %v397, %v1421
        %v2446 = vmin.f32 %v398, %v1422
        %v2447 = vmin.f32 %v399, %v1423
        %v2448 = vmin.f32 %v400, %v1424
        %v2449 = vmin.f32 %v401, %v1425
        %v2450 = vmin.f32 %v402, %v1426
        %v2451 = vmin.f32 %v403, %v1427
        %v2452 = vmin.f32 %v404, %v1428
        %v2453 = vmin.f32 %v405, %v1429
        %v2454 = vmin.f32 %v406, %v1430
        %v2455 = vmin.f32 %v407, %v1431
        %v2456 = vmin.f32 %v408, %v1432
        %v2457 = vmin.f32 %v409, %v1433
        %v2458 = vmin.f32 %v410, %v1434
        %v2459 = vmin.f32 %v411, %v1435
        %v2460 = vmin.f32 %v412, %v1436
        %v2461 = vmin.f32 %v413, %v1437
        %v2462 = vmin.f32 %v414, %v1438
        %v2463 = vmin.f32 %v415, %v1439
        %v2464 = vmin.f32 %v416, %v1440
        %v2465 = vmin.f32 %v417, %v1441
        %v2466 = vmin.f32 %v418, %v1442
        %v2467 = vmin.f32 %v419, %v1443
        %v2468 = vmin.f32 %v420, %v1444
        %v2469 = vmin.f32 %v421, %v1445
        %v2470 = vmin.f32 %v422, %v1446
        %v2471 = vmin.f32 %v423, %v1447
        %v2472 = vmin.f32 %v424, %v1448
        %v2473 = vmin.f32 %v425, %v1449
        %v2474 = vmin.f32 %v426, %v1450
        %v2475 = vmin.f32 %v427, %v1451
        %v2476 = vmin.f32 %v428, %v1452
        %v2477 = vmin.f32 %v429, %v1453
        %v2478 = vmin.f32 %v430, %v1454
        %v2479 = vmin.f32 %v431, %v1455
        %v2480 = vmin.f32 %v432, %v1456
        %v2481 = vmin.f32 %v433, %v1457
        %v2482 = vmin.f32 %v434, %v1458
        %v2483 = vmin.f32 %v435, %v1459
        %v2484 = vmin.f32 %v436, %v1460
        %v2485 = vmin.f32 %v437, %v1461
        %v2486 = vmin.f32 %v438, %v1462
        %v2487 = vmin.f32 %v439, %v1463
        %v2488 = vmin.f32 %v440, %v1464
        %v2489 = vmin.f32 %v441, %v1465
        %v2490 = vmin.f32 %v442, %v1466
        %v2491 = vmin.f32 %v443, %v1467
        %v2492 = vmin.f32 %v444, %v1468
        %v2493 = vmin.f32 %v445, %v1469
        %v2494 = vmin.f32 %v446, %v1470
        %v2495 = vmin.f32 %v447, %v1471
        %v2496 = vmin.f32 %v448, %v1472
        %v2497 = vmin.f32 %v449, %v1473
        %v2498 = vmin.f32 %v450, %v1474
        %v2499 = vmin.f32 %v451, %v1475
        %v2500 = vmin.f32 %v452, %v1476
        %v2501 = vmin.f32 %v453, %v1477
        %v2502 = vmin.f32 %v454, %v1478
        %v2503 = vmin.f32 %v455, %v1479
        %v2504 = vmin.f32 %v456, %v1480
        %v2505 = vmin.f32 %v457, %v1481
        %v2506 = vmin.f32 %v458, %v1482
        %v2507 = vmin.f32 %v459, %v1483
        %v2508 = vmin.f32 %v460, %v1484
        %v2509 = vmin.f32 %v461, %v1485
        %v2510 = vmin.f32 %v462, %v1486
        %v2511 = vmin.f32 %v463, %v1487
        %v2512 = vmin.f32 %v464, %v1488
        %v2513 = vmin.f32 %v465, %v1489
        %v2514 = vmin.f32 %v466, %v1490
        %v2515 = vmin.f32 %v467, %v1491
        %v2516 = vmin.f32 %v468, %v1492
        %v2517 = vmin.f32 %v469, %v1493
        %v2518 = vmin.f32 %v470, %v1494
        %v2519 = vmin.f32 %v471, %v1495
        %v2520 = vmin.f32 %v472, %v1496
        %v2521 = vmin.f32 %v473, %v1497
        %v2522 = vmin.f32 %v474, %v1498
        %v2523 = vmin.f32 %v475, %v1499
        %v2524 = vmin.f32 %v476, %v1500
        %v2525 = vmin.f32 %v477, %v1501
        %v2526 = vmin.f32 %v478, %v1502
        %v2527 = vmin.f32 %v479, %v1503
        %v2528 = vmin.f32 %v480, %v1504
        %v2529 = vmin.f32 %v481, %v1505
        %v2530 = vmin.f32 %v482, %v1506
        %v2531 = vmin.f32 %v483, %v1507
        %v2532 = vmin.f32 %v484, %v1508
        %v2533 = vmin.f32 %v485, %v1509
        %v2534 = vmin.f32 %v486, %v1510
        %v2535 = vmin.f32 %v487, %v1511
        %v2536 = vmin.f32 %v488, %v1512
        %v2537 = vmin.f32 %v489, %v1513
        %v2538 = vmin.f32 %v490, %v1514
        %v2539 = vmin.f32 %v491, %v1515
        %v2540 = vmin.f32 %v492, %v1516
        %v2541 = vmin.f32 %v493, %v1517
        %v2542 = vmin.f32 %v494, %v1518
        %v2543 = vmin.f32 %v495, %v1519
        %v2544 = vmin.f32 %v496, %v1520
        %v2545 = vmin.f32 %v497, %v1521
        %v2546 = vmin.f32 %v498, %v1522
        %v2547 = vmin.f32 %v499, %v1523
        %v2548 = vmin.f32 %v500, %v1524
        %v2549 = vmin.f32 %v501, %v1525
        %v2550 = vmin.f32 %v502, %v1526
        %v2551 = vmin.f32 %v503, %v1527
        %v2552 = vmin.f32 %v504, %v1528
        %v2553 = vmin.f32 %v505, %v1529
        %v2554 = vmin.f32 %v506, %v1530
        %v2555 = vmin.f32 %v507, %v1531
        %v2556 = vmin.f32 %v508, %v1532
        %v2557 = vmin.f32 %v509, %v1533
        %v2558 = vmin.f32 %v510, %v1534
        %v2559 = vmin.f32 %v511, %v1535
        %v2560 = vmin.f32 %v512, %v1536
        %v2561 = vmin.f32 %v513, %v1537
        %v2562 = vmin.f32 %v514, %v1538
        %v2563 = vmin.f32 %v515, %v1539
        %v2564 = vmin.f32 %v516, %v1540
        %v2565 = vmin.f32 %v517, %v1541
        %v2566 = vmin.f32 %v518, %v1542
        %v2567 = vmin.f32 %v519, %v1543
        %v2568 = vmin.f32 %v520, %v1544
        %v2569 = vmin.f32 %v521, %v1545
        %v2570 = vmin.f32 %v522, %v1546
        %v2571 = vmin.f32 %v523, %v1547
        %v2572 = vmin.f32 %v524, %v1548
        %v2573 = vmin.f32 %v525, %v1549
        %v2574 = vmin.f32 %v526, %v1550
        %v2575 = vmin.f32 %v527, %v1551
        %v2576 = vmin.f32 %v528, %v1552
        %v2577 = vmin.f32 %v529, %v1553
        %v2578 = vmin.f32 %v530, %v1554
        %v2579 = vmin.f32 %v531, %v1555
        %v2580 = vmin.f32 %v532, %v1556
        %v2581 = vmin.f32 %v533, %v1557
        %v2582 = vmin.f32 %v534, %v1558
        %v2583 = vmin.f32 %v535, %v1559
        %v2584 = vmin.f32 %v536, %v1560
        %v2585 = vmin.f32 %v537, %v1561
        %v2586 = vmin.f32 %v538, %v1562
        %v2587 = vmin.f32 %v539, %v1563
        %v2588 = vmin.f32 %v540, %v1564
        %v2589 = vmin.f32 %v541, %v1565
        %v2590 = vmin.f32 %v542, %v1566
        %v2591 = vmin.f32 %v543, %v1567
        %v2592 = vmin.f32 %v544, %v1568
        %v2593 = vmin.f32 %v545, %v1569
        %v2594 = vmin.f32 %v546, %v1570
        %v2595 = vmin.f32 %v547, %v1571
        %v2596 = vmin.f32 %v548, %v1572
        %v2597 = vmin.f32 %v549, %v1573
        %v2598 = vmin.f32 %v550, %v1574
        %v2599 = vmin.f32 %v551, %v1575
        %v2600 = vmin.f32 %v552, %v1576
        %v2601 = vmin.f32 %v553, %v1577
        %v2602 = vmin.f32 %v554, %v1578
        %v2603 = vmin.f32 %v555, %v1579
        %v2604 = vmin.f32 %v556, %v1580
        %v2605 = vmin.f32 %v557, %v1581
        %v2606 = vmin.f32 %v558, %v1582
        %v2607 = vmin.f32 %v559, %v1583
        %v2608 = vmin.f32 %v560, %v1584
        %v2609 = vmin.f32 %v561, %v1585
        %v2610 = vmin.f32 %v562, %v1586
        %v2611 = vmin.f32 %v563, %v1587
        %v2612 = vmin.f32 %v564, %v1588
        %v2613 = vmin.f32 %v565, %v1589
        %v2614 = vmin.f32 %v566, %v1590
        %v2615 = vmin.f32 %v567, %v1591
        %v2616 = vmin.f32 %v568, %v1592
        %v2617 = vmin.f32 %v569, %v1593
        %v2618 = vmin.f32 %v570, %v1594
        %v2619 = vmin.f32 %v571, %v1595
        %v2620 = vmin.f32 %v572, %v1596
        %v2621 = vmin.f32 %v573, %v1597
        %v2622 = vmin.f32 %v574, %v1598
        %v2623 = vmin.f32 %v575, %v1599
        %v2624 = vmin.f32 %v576, %v1600
        %v2625 = vmin.f32 %v577, %v1601
        %v2626 = vmin.f32 %v578, %v1602
        %v2627 = vmin.f32 %v579, %v1603
        %v2628 = vmin.f32 %v580, %v1604
        %v2629 = vmin.f32 %v581, %v1605
        %v2630 = vmin.f32 %v582, %v1606
        %v2631 = vmin.f32 %v583, %v1607
        %v2632 = vmin.f32 %v584, %v1608
        %v2633 = vmin.f32 %v585, %v1609
        %v2634 = vmin.f32 %v586, %v1610
        %v2635 = vmin.f32 %v587, %v1611
        %v2636 = vmin.f32 %v588, %v1612
        %v2637 = vmin.f32 %v589, %v1613
        %v2638 = vmin.f32 %v590, %v1614
        %v2639 = vmin.f32 %v591, %v1615
        %v2640 = vmin.f32 %v592, %v1616
        %v2641 = vmin.f32 %v593, %v1617
        %v2642 = vmin.f32 %v594, %v1618
        %v2643 = vmin.f32 %v595, %v1619
        %v2644 = vmin.f32 %v596, %v1620
        %v2645 = vmin.f32 %v597, %v1621
        %v2646 = vmin.f32 %v598, %v1622
        %v2647 = vmin.f32 %v599, %v1623
        %v2648 = vmin.f32 %v600, %v1624
        %v2649 = vmin.f32 %v601, %v1625
        %v2650 = vmin.f32 %v602, %v1626
        %v2651 = vmin.f32 %v603, %v1627
        %v2652 = vmin.f32 %v604, %v1628
        %v2653 = vmin.f32 %v605, %v1629
        %v2654 = vmin.f32 %v606, %v1630
        %v2655 = vmin.f32 %v607, %v1631
        %v2656 = vmin.f32 %v608, %v1632
        %v2657 = vmin.f32 %v609, %v1633
        %v2658 = vmin.f32 %v610, %v1634
        %v2659 = vmin.f32 %v611, %v1635
        %v2660 = vmin.f32 %v612, %v1636
        %v2661 = vmin.f32 %v613, %v1637
        %v2662 = vmin.f32 %v614, %v1638
        %v2663 = vmin.f32 %v615, %v1639
        %v2664 = vmin.f32 %v616, %v1640
        %v2665 = vmin.f32 %v617, %v1641
        %v2666 = vmin.f32 %v618, %v1642
        %v2667 = vmin.f32 %v619, %v1643
        %v2668 = vmin.f32 %v620, %v1644
        %v2669 = vmin.f32 %v621, %v1645
        %v2670 = vmin.f32 %v622, %v1646
        %v2671 = vmin.f32 %v623, %v1647
        %v2672 = vmin.f32 %v624, %v1648
        %v2673 = vmin.f32 %v625, %v1649
        %v2674 = vmin.f32 %v626, %v1650
        %v2675 = vmin.f32 %v627, %v1651
        %v2676 = vmin.f32 %v628, %v1652
        %v2677 = vmin.f32 %v629, %v1653
        %v2678 = vmin.f32 %v630, %v1654
        %v2679 = vmin.f32 %v631, %v1655
        %v2680 = vmin.f32 %v632, %v1656
        %v2681 = vmin.f32 %v633, %v1657
        %v2682 = vmin.f32 %v634, %v1658
        %v2683 = vmin.f32 %v635, %v1659
        %v2684 = vmin.f32 %v636, %v1660
        %v2685 = vmin.f32 %v637, %v1661
        %v2686 = vmin.f32 %v638, %v1662
        %v2687 = vmin.f32 %v639, %v1663
        %v2688 = vmin.f32 %v640, %v1664
        %v2689 = vmin.f32 %v641, %v1665
        %v2690 = vmin.f32 %v642, %v1666
        %v2691 = vmin.f32 %v643, %v1667
        %v2692 = vmin.f32 %v644, %v1668
        %v2693 = vmin.f32 %v645, %v1669
        %v2694 = vmin.f32 %v646, %v1670
        %v2695 = vmin.f32 %v647, %v1671
        %v2696 = vmin.f32 %v648, %v1672
        %v2697 = vmin.f32 %v649, %v1673
        %v2698 = vmin.f32 %v650, %v1674
        %v2699 = vmin.f32 %v651, %v1675
        %v2700 = vmin.f32 %v652, %v1676
        %v2701 = vmin.f32 %v653, %v1677
        %v2702 = vmin.f32 %v654, %v1678
        %v2703 = vmin.f32 %v655, %v1679
        %v2704 = vmin.f32 %v656, %v1680
        %v2705 = vmin.f32 %v657, %v1681
        %v2706 = vmin.f32 %v658, %v1682
        %v2707 = vmin.f32 %v659, %v1683
        %v2708 = vmin.f32 %v660, %v1684
        %v2709 = vmin.f32 %v661, %v1685
        %v2710 = vmin.f32 %v662, %v1686
        %v2711 = vmin.f32 %v663, %v1687
        %v2712 = vmin.f32 %v664, %v1688
        %v2713 = vmin.f32 %v665, %v1689
        %v2714 = vmin.f32 %v666, %v1690
        %v2715 = vmin.f32 %v667, %v1691
        %v2716 = vmin.f32 %v668, %v1692
        %v2717 = vmin.f32 %v669, %v1693
        %v2718 = vmin.f32 %v670, %v1694
        %v2719 = vmin.f32 %v671, %v1695
        %v2720 = vmin.f32 %v672, %v1696
        %v2721 = vmin.f32 %v673, %v1697
        %v2722 = vmin.f32 %v674, %v1698
        %v2723 = vmin.f32 %v675, %v1699
        %v2724 = vmin.f32 %v676, %v1700
        %v2725 = vmin.f32 %v677, %v1701
        %v2726 = vmin.f32 %v678, %v1702
        %v2727 = vmin.f32 %v679, %v1703
        %v2728 = vmin.f32 %v680, %v1704
        %v2729 = vmin.f32 %v681, %v1705
        %v2730 = vmin.f32 %v682, %v1706
        %v2731 = vmin.f32 %v683, %v1707
        %v2732 = vmin.f32 %v684, %v1708
        %v2733 = vmin.f32 %v685, %v1709
        %v2734 = vmin.f32 %v686, %v1710
        %v2735 = vmin.f32 %v687, %v1711
        %v2736 = vmin.f32 %v688, %v1712
        %v2737 = vmin.f32 %v689, %v1713
        %v2738 = vmin.f32 %v690, %v1714
        %v2739 = vmin.f32 %v691, %v1715
        %v2740 = vmin.f32 %v692, %v1716
        %v2741 = vmin.f32 %v693, %v1717
        %v2742 = vmin.f32 %v694, %v1718
        %v2743 = vmin.f32 %v695, %v1719
        %v2744 = vmin.f32 %v696, %v1720
        %v2745 = vmin.f32 %v697, %v1721
        %v2746 = vmin.f32 %v698, %v1722
        %v2747 = vmin.f32 %v699, %v1723
        %v2748 = vmin.f32 %v700, %v1724
        %v2749 = vmin.f32 %v701, %v1725
        %v2750 = vmin.f32 %v702, %v1726
        %v2751 = vmin.f32 %v703, %v1727
        %v2752 = vmin.f32 %v704, %v1728
        %v2753 = vmin.f32 %v705, %v1729
        %v2754 = vmin.f32 %v706, %v1730
        %v2755 = vmin.f32 %v707, %v1731
        %v2756 = vmin.f32 %v708, %v1732
        %v2757 = vmin.f32 %v709, %v1733
        %v2758 = vmin.f32 %v710, %v1734
        %v2759 = vmin.f32 %v711, %v1735
        %v2760 = vmin.f32 %v712, %v1736
        %v2761 = vmin.f32 %v713, %v1737
        %v2762 = vmin.f32 %v714, %v1738
        %v2763 = vmin.f32 %v715, %v1739
        %v2764 = vmin.f32 %v716, %v1740
        %v2765 = vmin.f32 %v717, %v1741
        %v2766 = vmin.f32 %v718, %v1742
        %v2767 = vmin.f32 %v719, %v1743
        %v2768 = vmin.f32 %v720, %v1744
        %v2769 = vmin.f32 %v721, %v1745
        %v2770 = vmin.f32 %v722, %v1746
        %v2771 = vmin.f32 %v723, %v1747
        %v2772 = vmin.f32 %v724, %v1748
        %v2773 = vmin.f32 %v725, %v1749
        %v2774 = vmin.f32 %v726, %v1750
        %v2775 = vmin.f32 %v727, %v1751
        %v2776 = vmin.f32 %v728, %v1752
        %v2777 = vmin.f32 %v729, %v1753
        %v2778 = vmin.f32 %v730, %v1754
        %v2779 = vmin.f32 %v731, %v1755
        %v2780 = vmin.f32 %v732, %v1756
        %v2781 = vmin.f32 %v733, %v1757
        %v2782 = vmin.f32 %v734, %v1758
        %v2783 = vmin.f32 %v735, %v1759
        %v2784 = vmin.f32 %v736, %v1760
        %v2785 = vmin.f32 %v737, %v1761
        %v2786 = vmin.f32 %v738, %v1762
        %v2787 = vmin.f32 %v739, %v1763
        %v2788 = vmin.f32 %v740, %v1764
        %v2789 = vmin.f32 %v741, %v1765
        %v2790 = vmin.f32 %v742, %v1766
        %v2791 = vmin.f32 %v743, %v1767
        %v2792 = vmin.f32 %v744, %v1768
        %v2793 = vmin.f32 %v745, %v1769
        %v2794 = vmin.f32 %v746, %v1770
        %v2795 = vmin.f32 %v747, %v1771
        %v2796 = vmin.f32 %v748, %v1772
        %v2797 = vmin.f32 %v749, %v1773
        %v2798 = vmin.f32 %v750, %v1774
        %v2799 = vmin.f32 %v751, %v1775
        %v2800 = vmin.f32 %v752, %v1776
        %v2801 = vmin.f32 %v753, %v1777
        %v2802 = vmin.f32 %v754, %v1778
        %v2803 = vmin.f32 %v755, %v1779
        %v2804 = vmin.f32 %v756, %v1780
        %v2805 = vmin.f32 %v757, %v1781
        %v2806 = vmin.f32 %v758, %v1782
        %v2807 = vmin.f32 %v759, %v1783
        %v2808 = vmin.f32 %v760, %v1784
        %v2809 = vmin.f32 %v761, %v1785
        %v2810 = vmin.f32 %v762, %v1786
        %v2811 = vmin.f32 %v763, %v1787
        %v2812 = vmin.f32 %v764, %v1788
        %v2813 = vmin.f32 %v765, %v1789
        %v2814 = vmin.f32 %v766, %v1790
        %v2815 = vmin.f32 %v767, %v1791
        %v2816 = vmin.f32 %v768, %v1792
        %v2817 = vmin.f32 %v769, %v1793
        %v2818 = vmin.f32 %v770, %v1794
        %v2819 = vmin.f32 %v771, %v1795
        %v2820 = vmin.f32 %v772, %v1796
        %v2821 = vmin.f32 %v773, %v1797
        %v2822 = vmin.f32 %v774, %v1798
        %v2823 = vmin.f32 %v775, %v1799
        %v2824 = vmin.f32 %v776, %v1800
        %v2825 = vmin.f32 %v777, %v1801
        %v2826 = vmin.f32 %v778, %v1802
        %v2827 = vmin.f32 %v779, %v1803
        %v2828 = vmin.f32 %v780, %v1804
        %v2829 = vmin.f32 %v781, %v1805
        %v2830 = vmin.f32 %v782, %v1806
        %v2831 = vmin.f32 %v783, %v1807
        %v2832 = vmin.f32 %v784, %v1808
        %v2833 = vmin.f32 %v785, %v1809
        %v2834 = vmin.f32 %v786, %v1810
        %v2835 = vmin.f32 %v787, %v1811
        %v2836 = vmin.f32 %v788, %v1812
        %v2837 = vmin.f32 %v789, %v1813
        %v2838 = vmin.f32 %v790, %v1814
        %v2839 = vmin.f32 %v791, %v1815
        %v2840 = vmin.f32 %v792, %v1816
        %v2841 = vmin.f32 %v793, %v1817
        %v2842 = vmin.f32 %v794, %v1818
        %v2843 = vmin.f32 %v795, %v1819
        %v2844 = vmin.f32 %v796, %v1820
        %v2845 = vmin.f32 %v797, %v1821
        %v2846 = vmin.f32 %v798, %v1822
        %v2847 = vmin.f32 %v799, %v1823
        %v2848 = vmin.f32 %v800, %v1824
        %v2849 = vmin.f32 %v801, %v1825
        %v2850 = vmin.f32 %v802, %v1826
        %v2851 = vmin.f32 %v803, %v1827
        %v2852 = vmin.f32 %v804, %v1828
        %v2853 = vmin.f32 %v805, %v1829
        %v2854 = vmin.f32 %v806, %v1830
        %v2855 = vmin.f32 %v807, %v1831
        %v2856 = vmin.f32 %v808, %v1832
        %v2857 = vmin.f32 %v809, %v1833
        %v2858 = vmin.f32 %v810, %v1834
        %v2859 = vmin.f32 %v811, %v1835
        %v2860 = vmin.f32 %v812, %v1836
        %v2861 = vmin.f32 %v813, %v1837
        %v2862 = vmin.f32 %v814, %v1838
        %v2863 = vmin.f32 %v815, %v1839
        %v2864 = vmin.f32 %v816, %v1840
        %v2865 = vmin.f32 %v817, %v1841
        %v2866 = vmin.f32 %v818, %v1842
        %v2867 = vmin.f32 %v819, %v1843
        %v2868 = vmin.f32 %v820, %v1844
        %v2869 = vmin.f32 %v821, %v1845
        %v2870 = vmin.f32 %v822, %v1846
        %v2871 = vmin.f32 %v823, %v1847
        %v2872 = vmin.f32 %v824, %v1848
        %v2873 = vmin.f32 %v825, %v1849
        %v2874 = vmin.f32 %v826, %v1850
        %v2875 = vmin.f32 %v827, %v1851
        %v2876 = vmin.f32 %v828, %v1852
        %v2877 = vmin.f32 %v829, %v1853
        %v2878 = vmin.f32 %v830, %v1854
        %v2879 = vmin.f32 %v831, %v1855
        %v2880 = vmin.f32 %v832, %v1856
        %v2881 = vmin.f32 %v833, %v1857
        %v2882 = vmin.f32 %v834, %v1858
        %v2883 = vmin.f32 %v835, %v1859
        %v2884 = vmin.f32 %v836, %v1860
        %v2885 = vmin.f32 %v837, %v1861
        %v2886 = vmin.f32 %v838, %v1862
        %v2887 = vmin.f32 %v839, %v1863
        %v2888 = vmin.f32 %v840, %v1864
        %v2889 = vmin.f32 %v841, %v1865
        %v2890 = vmin.f32 %v842, %v1866
        %v2891 = vmin.f32 %v843, %v1867
        %v2892 = vmin.f32 %v844, %v1868
        %v2893 = vmin.f32 %v845, %v1869
        %v2894 = vmin.f32 %v846, %v1870
        %v2895 = vmin.f32 %v847, %v1871
        %v2896 = vmin.f32 %v848, %v1872
        %v2897 = vmin.f32 %v849, %v1873
        %v2898 = vmin.f32 %v850, %v1874
        %v2899 = vmin.f32 %v851, %v1875
        %v2900 = vmin.f32 %v852, %v1876
        %v2901 = vmin.f32 %v853, %v1877
        %v2902 = vmin.f32 %v854, %v1878
        %v2903 = vmin.f32 %v855, %v1879
        %v2904 = vmin.f32 %v856, %v1880
        %v2905 = vmin.f32 %v857, %v1881
        %v2906 = vmin.f32 %v858, %v1882
        %v2907 = vmin.f32 %v859, %v1883
        %v2908 = vmin.f32 %v860, %v1884
        %v2909 = vmin.f32 %v861, %v1885
        %v2910 = vmin.f32 %v862, %v1886
        %v2911 = vmin.f32 %v863, %v1887
        %v2912 = vmin.f32 %v864, %v1888
        %v2913 = vmin.f32 %v865, %v1889
        %v2914 = vmin.f32 %v866, %v1890
        %v2915 = vmin.f32 %v867, %v1891
        %v2916 = vmin.f32 %v868, %v1892
        %v2917 = vmin.f32 %v869, %v1893
        %v2918 = vmin.f32 %v870, %v1894
        %v2919 = vmin.f32 %v871, %v1895
        %v2920 = vmin.f32 %v872, %v1896
        %v2921 = vmin.f32 %v873, %v1897
        %v2922 = vmin.f32 %v874, %v1898
        %v2923 = vmin.f32 %v875, %v1899
        %v2924 = vmin.f32 %v876, %v1900
        %v2925 = vmin.f32 %v877, %v1901
        %v2926 = vmin.f32 %v878, %v1902
        %v2927 = vmin.f32 %v879, %v1903
        %v2928 = vmin.f32 %v880, %v1904
        %v2929 = vmin.f32 %v881, %v1905
        %v2930 = vmin.f32 %v882, %v1906
        %v2931 = vmin.f32 %v883, %v1907
        %v2932 = vmin.f32 %v884, %v1908
        %v2933 = vmin.f32 %v885, %v1909
        %v2934 = vmin.f32 %v886, %v1910
        %v2935 = vmin.f32 %v887, %v1911
        %v2936 = vmin.f32 %v888, %v1912
        %v2937 = vmin.f32 %v889, %v1913
        %v2938 = vmin.f32 %v890, %v1914
        %v2939 = vmin.f32 %v891, %v1915
        %v2940 = vmin.f32 %v892, %v1916
        %v2941 = vmin.f32 %v893, %v1917
        %v2942 = vmin.f32 %v894, %v1918
        %v2943 = vmin.f32 %v895, %v1919
        %v2944 = vmin.f32 %v896, %v1920
        %v2945 = vmin.f32 %v897, %v1921
        %v2946 = vmin.f32 %v898, %v1922
        %v2947 = vmin.f32 %v899, %v1923
        %v2948 = vmin.f32 %v900, %v1924
        %v2949 = vmin.f32 %v901, %v1925
        %v2950 = vmin.f32 %v902, %v1926
        %v2951 = vmin.f32 %v903, %v1927
        %v2952 = vmin.f32 %v904, %v1928
        %v2953 = vmin.f32 %v905, %v1929
        %v2954 = vmin.f32 %v906, %v1930
        %v2955 = vmin.f32 %v907, %v1931
        %v2956 = vmin.f32 %v908, %v1932
        %v2957 = vmin.f32 %v909, %v1933
        %v2958 = vmin.f32 %v910, %v1934
        %v2959 = vmin.f32 %v911, %v1935
        %v2960 = vmin.f32 %v912, %v1936
        %v2961 = vmin.f32 %v913, %v1937
        %v2962 = vmin.f32 %v914, %v1938
        %v2963 = vmin.f32 %v915, %v1939
        %v2964 = vmin.f32 %v916, %v1940
        %v2965 = vmin.f32 %v917, %v1941
        %v2966 = vmin.f32 %v918, %v1942
        %v2967 = vmin.f32 %v919, %v1943
        %v2968 = vmin.f32 %v920, %v1944
        %v2969 = vmin.f32 %v921, %v1945
        %v2970 = vmin.f32 %v922, %v1946
        %v2971 = vmin.f32 %v923, %v1947
        %v2972 = vmin.f32 %v924, %v1948
        %v2973 = vmin.f32 %v925, %v1949
        %v2974 = vmin.f32 %v926, %v1950
        %v2975 = vmin.f32 %v927, %v1951
        %v2976 = vmin.f32 %v928, %v1952
        %v2977 = vmin.f32 %v929, %v1953
        %v2978 = vmin.f32 %v930, %v1954
        %v2979 = vmin.f32 %v931, %v1955
        %v2980 = vmin.f32 %v932, %v1956
        %v2981 = vmin.f32 %v933, %v1957
        %v2982 = vmin.f32 %v934, %v1958
        %v2983 = vmin.f32 %v935, %v1959
        %v2984 = vmin.f32 %v936, %v1960
        %v2985 = vmin.f32 %v937, %v1961
        %v2986 = vmin.f32 %v938, %v1962
        %v2987 = vmin.f32 %v939, %v1963
        %v2988 = vmin.f32 %v940, %v1964
        %v2989 = vmin.f32 %v941, %v1965
        %v2990 = vmin.f32 %v942, %v1966
        %v2991 = vmin.f32 %v943, %v1967
        %v2992 = vmin.f32 %v944, %v1968
        %v2993 = vmin.f32 %v945, %v1969
        %v2994 = vmin.f32 %v946, %v1970
        %v2995 = vmin.f32 %v947, %v1971
        %v2996 = vmin.f32 %v948, %v1972
        %v2997 = vmin.f32 %v949, %v1973
        %v2998 = vmin.f32 %v950, %v1974
        %v2999 = vmin.f32 %v951, %v1975
        %v3000 = vmin.f32 %v952, %v1976
        %v3001 = vmin.f32 %v953, %v1977
        %v3002 = vmin.f32 %v954, %v1978
        %v3003 = vmin.f32 %v955, %v1979
        %v3004 = vmin.f32 %v956, %v1980
        %v3005 = vmin.f32 %v957, %v1981
        %v3006 = vmin.f32 %v958, %v1982
        %v3007 = vmin.f32 %v959, %v1983
        %v3008 = vmin.f32 %v960, %v1984
        %v3009 = vmin.f32 %v961, %v1985
        %v3010 = vmin.f32 %v962, %v1986
        %v3011 = vmin.f32 %v963, %v1987
        %v3012 = vmin.f32 %v964, %v1988
        %v3013 = vmin.f32 %v965, %v1989
        %v3014 = vmin.f32 %v966, %v1990
        %v3015 = vmin.f32 %v967, %v1991
        %v3016 = vmin.f32 %v968, %v1992
        %v3017 = vmin.f32 %v969, %v1993
        %v3018 = vmin.f32 %v970, %v1994
        %v3019 = vmin.f32 %v971, %v1995
        %v3020 = vmin.f32 %v972, %v1996
        %v3021 = vmin.f32 %v973, %v1997
        %v3022 = vmin.f32 %v974, %v1998
        %v3023 = vmin.f32 %v975, %v1999
        %v3024 = vmin.f32 %v976, %v2000
        %v3025 = vmin.f32 %v977, %v2001
        %v3026 = vmin.f32 %v978, %v2002
        %v3027 = vmin.f32 %v979, %v2003
        %v3028 = vmin.f32 %v980, %v2004
        %v3029 = vmin.f32 %v981, %v2005
        %v3030 = vmin.f32 %v982, %v2006
        %v3031 = vmin.f32 %v983, %v2007
        %v3032 = vmin.f32 %v984, %v2008
        %v3033 = vmin.f32 %v985, %v2009
        %v3034 = vmin.f32 %v986, %v2010
        %v3035 = vmin.f32 %v987, %v2011
        %v3036 = vmin.f32 %v988, %v2012
        %v3037 = vmin.f32 %v989, %v2013
        %v3038 = vmin.f32 %v990, %v2014
        %v3039 = vmin.f32 %v991, %v2015
        %v3040 = vmin.f32 %v992, %v2016
        %v3041 = vmin.f32 %v993, %v2017
        %v3042 = vmin.f32 %v994, %v2018
        %v3043 = vmin.f32 %v995, %v2019
        %v3044 = vmin.f32 %v996, %v2020
        %v3045 = vmin.f32 %v997, %v2021
        %v3046 = vmin.f32 %v998, %v2022
        %v3047 = vmin.f32 %v999, %v2023
        %v3048 = vmin.f32 %v1000, %v2024
        %v3049 = vmin.f32 %v1001, %v2025
        %v3050 = vmin.f32 %v1002, %v2026
        %v3051 = vmin.f32 %v1003, %v2027
        %v3052 = vmin.f32 %v1004, %v2028
        %v3053 = vmin.f32 %v1005, %v2029
        %v3054 = vmin.f32 %v1006, %v2030
        %v3055 = vmin.f32 %v1007, %v2031
        %v3056 = vmin.f32 %v1008, %v2032
        %v3057 = vmin.f32 %v1009, %v2033
        %v3058 = vmin.f32 %v1010, %v2034
        %v3059 = vmin.f32 %v1011, %v2035
        %v3060 = vmin.f32 %v1012, %v2036
        %v3061 = vmin.f32 %v1013, %v2037
        %v3062 = vmin.f32 %v1014, %v2038
        %v3063 = vmin.f32 %v1015, %v2039
        %v3064 = vmin.f32 %v1016, %v2040
        %v3065 = vmin.f32 %v1017, %v2041
        %v3066 = vmin.f32 %v1018, %v2042
        %v3067 = vmin.f32 %v1019, %v2043
        %v3068 = vmin.f32 %v1020, %v2044
        %v3069 = vmin.f32 %v1021, %v2045
        %v3070 = vmin.f32 %v1022, %v2046
        %v3071 = vmin.f32 %v1023, %v2047
        %v3072 = vmin.f32 %v1024, %v2048
        %v3073 = vmin.f32 %v1025, %v2049
        %v3074 = vmin.f32 %v1026, %v2050
        %v3075 = vmin.f32 %v1027, %v2051
        %v3076 = vmin.f32 %v1028, %v2052
        %v3077 = vmin.f32 %v1029, %v2053
        %v3078 = vmin.f32 %v1030, %v2054
        %v3079 = vmin.f32 %v1031, %v2055
        %v3080 = vmin.f32 %v1032, %v2056
        %v3081 = vmin.f32 %v1033, %v2057
        %v3082 = vmin.f32 %v1034, %v2058
        %v3083 = vmin.f32 %v1035, %v2059
        %v3084 = vmin.f32 %v1036, %v2060
        %v3085 = vmin.f32 %v1037, %v2061
        %v3086 = vmin.f32 %v1038, %v2062
        %v3087 = vmin.f32 %v1039, %v2063
        %v3088 = vmin.f32 %v1040, %v2064
        %v3089 = vmin.f32 %v1041, %v2065
        %v3090 = vmin.f32 %v1042, %v2066
        %v3091 = vmin.f32 %v1043, %v2067
        %v3092 = vmin.f32 %v1044, %v2068
        %v3093 = vmin.f32 %v1045, %v2069
        %v3094 = vmin.f32 %v1046, %v2070
        %v3095 = vmin.f32 %v1047, %v2071
        %v3096 = vmin.f32 %v1048, %v2072
        %v3097 = vmin.f32 %v1049, %v2073
        %v3098 = vmin.f32 %v1050, %v2074
        %v3099 = vmin.f32 %v1051, %v2075
        %v3100 = vmin.f32 %v1052, %v2076
        %v3101 = vmin.f32 %v1053, %v2077
        %v3102 = vmin.f32 %v1054, %v2078
        %v3103 = vmin.f32 %v1055, %v2079
        %v3104 = vmin.f32 %v1056, %v2080
        %v3105 = vmin.f32 %v1057, %v2081
        %v3106 = vmin.f32 %v1058, %v2082
        %v3107 = vmin.f32 %v1059, %v2083
        %v3108 = vmin.f32 %v1060, %v2084
        %v3109 = vmin.f32 %v1061, %v2085
        %v3110 = vmin.f32 %v1062, %v2086
        %v3111 = vmin.f32 %v1063, %v2087
        %v3112 = vmin.f32 %v1064, %v2088
        %v3113 = vmin.f32 %v1065, %v2089
        %v3114 = vmin.f32 %v1066, %v2090
        %v3115 = vmin.f32 %v1067, %v2091
        %v3116 = vmin.f32 %v1068, %v2092
        %v3117 = vmin.f32 %v1069, %v2093
        %v3118 = vmin.f32 %v1070, %v2094
        %v3119 = vmin.f32 %v1071, %v2095
        %v3120 = vmin.f32 %v1072, %v2096
        %v3121 = vmin.f32 %v1073, %v2097
        %v3122 = vmin.f32 %v1074, %v2098
        %v3123 = vmin.f32 %v1075, %v2099
        %v3124 = vmin.f32 %v1076, %v2100
        %v3125 = vmin.f32 %v1077, %v2101
        %v3126 = vmin.f32 %v1078, %v2102
        %v3127 = vmin.f32 %v1079, %v2103
        %v3128 = vmin.f32 %v1080, %v2104
        %v3129 = vmin.f32 %v1081, %v2105
        %v3130 = vmin.f32 %v1082, %v2106
        %v3131 = vmin.f32 %v1083, %v2107
        %v3132 = vmin.f32 %v1084, %v2108
        %v3133 = vmin.f32 %v1085, %v2109
        %v3134 = vmin.f32 %v1086, %v2110
        %v3135 = vmin.f32 %v1087, %v2111
        %v3136 = vmin.f32 %v1088, %v2112
        %v3137 = vmin.f32 %v1089, %v2113
        %v3138 = vmin.f32 %v1090, %v2114
        %v3139 = vmin.f32 %v1091, %v2115
        %v3140 = vmin.f32 %v1092, %v2116
        %v3141 = vmin.f32 %v1093, %v2117
        %v3142 = vmin.f32 %v1094, %v2118
        %v3143 = vmin.f32 %v1095, %v2119
        %v3144 = vmin.f32 %v1096, %v2120
        %v3145 = vmin.f32 %v1097, %v2121
        %v3146 = vmin.f32 %v1098, %v2122
        %v3147 = vmin.f32 %v1099, %v2123
        %v3148 = vmin.f32 %v1100, %v2124
        %v3149 = vmin.f32 %v1101, %v2125
        %v3150 = vmin.f32 %v1102, %v2126
        %v3151 = vmin.f32 %v1103, %v2127
        %v3152 = vmin.f32 %v1104, %v2128
        %v3153 = vmin.f32 %v1105, %v2129
        %v3154 = vmin.f32 %v1106, %v2130
        %v3155 = vmin.f32 %v1107, %v2131
        %v3156 = vmin.f32 %v1108, %v2132
        %v3157 = vmin.f32 %v1109, %v2133
        %v3158 = vmin.f32 %v1110, %v2134
        %v3159 = vmin.f32 %v1111, %v2135
        %v3160 = vmin.f32 %v1112, %v2136
        %v3161 = vmin.f32 %v1113, %v2137
        %v3162 = vmin.f32 %v1114, %v2138
        %v3163 = vmin.f32 %v1115, %v2139
        %v3164 = vmin.f32 %v1116, %v2140
        %v3165 = vmin.f32 %v1117, %v2141
        %v3166 = vmin.f32 %v1118, %v2142
        %v3167 = vmin.f32 %v1119, %v2143
        %v3168 = vmin.f32 %v1120, %v2144
        %v3169 = vmin.f32 %v1121, %v2145
        %v3170 = vmin.f32 %v1122, %v2146
        %v3171 = vmin.f32 %v1123, %v2147
        %v3172 = vmin.f32 %v1124, %v2148
        %v3173 = vmin.f32 %v1125, %v2149
        %v3174 = vmin.f32 %v1126, %v2150
        %v3175 = vmin.f32 %v1127, %v2151
        %v3176 = vmin.f32 %v1128, %v2152
        %v3177 = vmin.f32 %v1129, %v2153
        %v3178 = vmin.f32 %v1130, %v2154
        %v3179 = vmin.f32 %v1131, %v2155
        %v3180 = vmin.f32 %v1132, %v2156
        %v3181 = vmin.f32 %v1133, %v2157
        %v3182 = vmin.f32 %v1134, %v2158
        %v3183 = vmin.f32 %v1135, %v2159
        %v3184 = vmin.f32 %v1136, %v2160
        %v3185 = vmin.f32 %v1137, %v2161
        %v3186 = vmin.f32 %v1138, %v2162
        %v3187 = vmin.f32 %v1139, %v2163
        %v3188 = vmin.f32 %v1140, %v2164
        %v3189 = vmin.f32 %v1141, %v2165
        %v3190 = vmin.f32 %v1142, %v2166
        %v3191 = vmin.f32 %v1143, %v2167
        %v3192 = vmin.f32 %v1144, %v2168
        %v3193 = vmin.f32 %v1145, %v2169
        %v3194 = vmin.f32 %v1146, %v2170
        %v3195 = vmin.f32 %v1147, %v2171
        %v3196 = vmin.f32 %v1148, %v2172
        %v3197 = vmin.f32 %v1149, %v2173
        %v3198 = vmin.f32 %v1150, %v2174
        %v3199 = vmin.f32 %v1151, %v2175
        %v3200 = vmin.f32 %v1152, %v2176
        %v3201 = vmin.f32 %v1153, %v2177
        %v3202 = vmin.f32 %v1154, %v2178
        %v3203 = vmin.f32 %v1155, %v2179
        %v3204 = vmin.f32 %v1156, %v2180
        %v3205 = vmin.f32 %v1157, %v2181
        %v3206 = vmin.f32 %v1158, %v2182
        %v3207 = vmin.f32 %v1159, %v2183
        %v3208 = vmin.f32 %v1160, %v2184
        %v3209 = vmin.f32 %v1161, %v2185
        %v3210 = vmin.f32 %v1162, %v2186
        %v3211 = vmin.f32 %v1163, %v2187
        %v3212 = vmin.f32 %v1164, %v2188
        %v3213 = vmin.f32 %v1165, %v2189
        %v3214 = vmin.f32 %v1166, %v2190
        %v3215 = vmin.f32 %v1167, %v2191
        %v3216 = vmin.f32 %v1168, %v2192
        %v3217 = vmin.f32 %v1169, %v2193
        %v3218 = vmin.f32 %v1170, %v2194
        %v3219 = vmin.f32 %v1171, %v2195
        %v3220 = vmin.f32 %v1172, %v2196
        %v3221 = vmin.f32 %v1173, %v2197
        %v3222 = vmin.f32 %v1174, %v2198
        %v3223 = vmin.f32 %v1175, %v2199
        %v3224 = vmin.f32 %v1176, %v2200
        %v3225 = vmin.f32 %v1177, %v2201
        %v3226 = vmin.f32 %v1178, %v2202
        %v3227 = vmin.f32 %v1179, %v2203
        %v3228 = vmin.f32 %v1180, %v2204
        %v3229 = vmin.f32 %v1181, %v2205
        %v3230 = vmin.f32 %v1182, %v2206
        %v3231 = vmin.f32 %v1183, %v2207
        %v3232 = vmin.f32 %v1184, %v2208
        %v3233 = vmin.f32 %v1185, %v2209
        %v3234 = vmin.f32 %v1186, %v2210
        %v3235 = vmin.f32 %v1187, %v2211
        %v3236 = vmin.f32 %v1188, %v2212
        %v3237 = vmin.f32 %v1189, %v2213
        %v3238 = vmin.f32 %v1190, %v2214
        %v3239 = vmin.f32 %v1191, %v2215
        %v3240 = vmin.f32 %v1192, %v2216
        %v3241 = vmin.f32 %v1193, %v2217
        %v3242 = vmin.f32 %v1194, %v2218
        %v3243 = vmin.f32 %v1195, %v2219
        %v3244 = vmin.f32 %v1196, %v2220
        %v3245 = vmin.f32 %v1197, %v2221
        %v3246 = vmin.f32 %v1198, %v2222
        %v3247 = vmin.f32 %v1199, %v2223
        %v3248 = vmin.f32 %v1200, %v2224
        %v3249 = vmin.f32 %v1201, %v2225
        %v3250 = vmin.f32 %v1202, %v2226
        %v3251 = vmin.f32 %v1203, %v2227
        %v3252 = vmin.f32 %v1204, %v2228
        %v3253 = vmin.f32 %v1205, %v2229
        %v3254 = vmin.f32 %v1206, %v2230
        %v3255 = vmin.f32 %v1207, %v2231
        %v3256 = vmin.f32 %v1208, %v2232
        %v3257 = vmin.f32 %v1209, %v2233
        %v3258 = vmin.f32 %v1210, %v2234
        %v3259 = vmin.f32 %v1211, %v2235
        %v3260 = vmin.f32 %v1212, %v2236
        %v3261 = vmin.f32 %v1213, %v2237
        %v3262 = vmin.f32 %v1214, %v2238
        %v3263 = vmin.f32 %v1215, %v2239
        %v3264 = vmin.f32 %v1216, %v2240
        %v3265 = vmin.f32 %v1217, %v2241
        %v3266 = vmin.f32 %v1218, %v2242
        %v3267 = vmin.f32 %v1219, %v2243
        %v3268 = vmin.f32 %v1220, %v2244
        %v3269 = vmin.f32 %v1221, %v2245
        %v3270 = vmin.f32 %v1222, %v2246
        %v3271 = vmin.f32 %v1223, %v2247
        %v3272 = vmin.f32 %v1224, %v2248
        %v3273 = vmin.f32 %v1225, %v2249
        %v3274 = vmin.f32 %v1226, %v2250
        %v3275 = vmin.f32 %v1227, %v2251
        %v3276 = vmin.f32 %v1228, %v2252
        %v3277 = vmin.f32 %v1229, %v2253
        %v3278 = vmin.f32 %v1230, %v2254
        %v3279 = vmin.f32 %v1231, %v2255
        %v3280 = vmin.f32 %v1232, %v2256
        %v3281 = vmin.f32 %v1233, %v2257
        %v3282 = vmin.f32 %v1234, %v2258
        %v3283 = vmin.f32 %v1235, %v2259
        %v3284 = vmin.f32 %v1236, %v2260
        %v3285 = vmin.f32 %v1237, %v2261
        %v3286 = vmin.f32 %v1238, %v2262
        %v3287 = vmin.f32 %v1239, %v2263
        %v3288 = vmin.f32 %v1240, %v2264
        %v3289 = vmin.f32 %v1241, %v2265
        %v3290 = vmin.f32 %v1242, %v2266
        %v3291 = vmin.f32 %v1243, %v2267
        %v3292 = vmin.f32 %v1244, %v2268
        %v3293 = vmin.f32 %v1245, %v2269
        %v3294 = vmin.f32 %v1246, %v2270
        %v3295 = vmin.f32 %v1247, %v2271
        %v3296 = vmin.f32 %v1248, %v2272
        %v3297 = vmin.f32 %v1249, %v2273
        %v3298 = vld [vmem:[#allocation7] sm:$0xff]
        %v3299 = vld [vmem:[#allocation7 + $0x8] sm:$0xff]
        %v3300 = vld [vmem:[#allocation7 + $0x10] sm:$0xff]
        %v3301 = vld [vmem:[#allocation7 + $0x18] sm:$0xff]
        %v3302 = vld [vmem:[#allocation7 + $0x20] sm:$0xff]
        %v3303 = vld [vmem:[#allocation7 + $0x28] sm:$0xff]
        %v3304 = vld [vmem:[#allocation7 + $0x30] sm:$0xff]
        %v3305 = vld [vmem:[#allocation7 + $0x38] sm:$0xff]
        %v3306 = vadd.f32 %v2274, %v2282
        %v3307 = vadd.f32 %v3306, %v2290
        %v3308 = vadd.f32 %v3307, %v2298
        %v3309 = vadd.f32 %v3308, %v2306
        %v3310 = vadd.f32 %v3309, %v2314
        %v3311 = vadd.f32 %v3310, %v2322
        %v3312 = vadd.f32 %v3311, %v2330
        %v3313 = vadd.f32 %v3312, %v2338
        %v3314 = vadd.f32 %v3313, %v2346
        %v3315 = vadd.f32 %v3314, %v2354
        %v3316 = vadd.f32 %v3315, %v2362
        %v3317 = vadd.f32 %v3316, %v2370
        %v3318 = vadd.f32 %v3317, %v2378
        %v3319 = vadd.f32 %v3318, %v2386
        %v3320 = vadd.f32 %v3319, %v2394
        %v3321 = vadd.f32 %v3320, %v2402
        %v3322 = vadd.f32 %v3321, %v2410
        %v3323 = vadd.f32 %v3322, %v2418
        %v3324 = vadd.f32 %v3323, %v2426
        %v3325 = vadd.f32 %v3324, %v2434
        %v3326 = vadd.f32 %v3325, %v2442
        %v3327 = vadd.f32 %v3326, %v2450
        %v3328 = vadd.f32 %v3327, %v2458
        %v3329 = vadd.f32 %v3328, %v2466
        %v3330 = vadd.f32 %v3329, %v2474
        %v3331 = vadd.f32 %v3330, %v2482
        %v3332 = vadd.f32 %v3331, %v2490
        %v3333 = vadd.f32 %v3332, %v2498
        %v3334 = vadd.f32 %v3333, %v2506
        %v3335 = vadd.f32 %v3334, %v2514
        %v3336 = vadd.f32 %v3335, %v2522
        %v3337 = vadd.f32 %v3336, %v2530
        %v3338 = vadd.f32 %v3337, %v2538
        %v3339 = vadd.f32 %v3338, %v2546
        %v3340 = vadd.f32 %v3339, %v2554
        %v3341 = vadd.f32 %v3340, %v2562
        %v3342 = vadd.f32 %v3341, %v2570
        %v3343 = vadd.f32 %v3342, %v2578
        %v3344 = vadd.f32 %v3343, %v2586
        %v3345 = vadd.f32 %v3344, %v2594
        %v3346 = vadd.f32 %v3345, %v2602
        %v3347 = vadd.f32 %v3346, %v2610
        %v3348 = vadd.f32 %v3347, %v2618
        %v3349 = vadd.f32 %v3348, %v2626
        %v3350 = vadd.f32 %v3349, %v2634
        %v3351 = vadd.f32 %v3350, %v2642
        %v3352 = vadd.f32 %v3351, %v2650
        %v3353 = vadd.f32 %v3352, %v2658
        %v3354 = vadd.f32 %v3353, %v2666
        %v3355 = vadd.f32 %v3354, %v2674
        %v3356 = vadd.f32 %v3355, %v2682
        %v3357 = vadd.f32 %v3356, %v2690
        %v3358 = vadd.f32 %v3357, %v2698
        %v3359 = vadd.f32 %v3358, %v2706
        %v3360 = vadd.f32 %v3359, %v2714
        %v3361 = vadd.f32 %v3360, %v2722
        %v3362 = vadd.f32 %v3361, %v2730
        %v3363 = vadd.f32 %v3362, %v2738
        %v3364 = vadd.f32 %v3363, %v2746
        %v3365 = vadd.f32 %v3364, %v2754
        %v3366 = vadd.f32 %v3365, %v2762
        %v3367 = vadd.f32 %v3366, %v2770
        %v3368 = vadd.f32 %v3367, %v2778
        %v3369 = vadd.f32 %v3368, %v2786
        %v3370 = vadd.f32 %v3369, %v2794
        %v3371 = vadd.f32 %v3370, %v2802
        %v3372 = vadd.f32 %v3371, %v2810
        %v3373 = vadd.f32 %v3372, %v2818
        %v3374 = vadd.f32 %v3373, %v2826
        %v3375 = vadd.f32 %v3374, %v2834
        %v3376 = vadd.f32 %v3375, %v2842
        %v3377 = vadd.f32 %v3376, %v2850
        %v3378 = vadd.f32 %v3377, %v2858
        %v3379 = vadd.f32 %v3378, %v2866
        %v3380 = vadd.f32 %v3379, %v2874
        %v3381 = vadd.f32 %v3380, %v2882
        %v3382 = vadd.f32 %v3381, %v2890
        %v3383 = vadd.f32 %v3382, %v2898
        %v3384 = vadd.f32 %v3383, %v2906
        %v3385 = vadd.f32 %v3384, %v2914
        %v3386 = vadd.f32 %v3385, %v2922
        %v3387 = vadd.f32 %v3386, %v2930
        %v3388 = vadd.f32 %v3387, %v2938
        %v3389 = vadd.f32 %v3388, %v2946
        %v3390 = vadd.f32 %v3389, %v2954
        %v3391 = vadd.f32 %v3390, %v2962
        %v3392 = vadd.f32 %v3391, %v2970
        %v3393 = vadd.f32 %v3392, %v2978
        %v3394 = vadd.f32 %v3393, %v2986
        %v3395 = vadd.f32 %v3394, %v2994
        %v3396 = vadd.f32 %v3395, %v3002
        %v3397 = vadd.f32 %v3396, %v3010
        %v3398 = vadd.f32 %v3397, %v3018
        %v3399 = vadd.f32 %v3398, %v3026
        %v3400 = vadd.f32 %v3399, %v3034
        %v3401 = vadd.f32 %v3400, %v3042
        %v3402 = vadd.f32 %v3401, %v3050
        %v3403 = vadd.f32 %v3402, %v3058
        %v3404 = vadd.f32 %v3403, %v3066
        %v3405 = vadd.f32 %v3404, %v3074
        %v3406 = vadd.f32 %v3405, %v3082
        %v3407 = vadd.f32 %v3406, %v3090
        %v3408 = vadd.f32 %v3407, %v3098
        %v3409 = vadd.f32 %v3408, %v3106
        %v3410 = vadd.f32 %v3409, %v3114
        %v3411 = vadd.f32 %v3410, %v3122
        %v3412 = vadd.f32 %v3411, %v3130
        %v3413 = vadd.f32 %v3412, %v3138
        %v3414 = vadd.f32 %v3413, %v3146
        %v3415 = vadd.f32 %v3414, %v3154
        %v3416 = vadd.f32 %v3415, %v3162
        %v3417 = vadd.f32 %v3416, %v3170
        %v3418 = vadd.f32 %v3417, %v3178
        %v3419 = vadd.f32 %v3418, %v3186
        %v3420 = vadd.f32 %v3419, %v3194
        %v3421 = vadd.f32 %v3420, %v3202
        %v3422 = vadd.f32 %v3421, %v3210
        %v3423 = vadd.f32 %v3422, %v3218
        %v3424 = vadd.f32 %v3423, %v3226
        %v3425 = vadd.f32 %v3424, %v3234
        %v3426 = vadd.f32 %v3425, %v3242
        %v3427 = vadd.f32 %v3426, %v3250
        %v3428 = vadd.f32 %v3427, %v3258
        %v3429 = vadd.f32 %v3428, %v3266
        %v3430 = vadd.f32 %v3429, %v3274
        %v3431 = vadd.f32 %v3430, %v3282
        %v3432 = vadd.f32 %v3431, %v3290
        %v3433 = vadd.f32 %v2275, %v2283
        %v3434 = vadd.f32 %v3433, %v2291
        %v3435 = vadd.f32 %v3434, %v2299
        %v3436 = vadd.f32 %v3435, %v2307
        %v3437 = vadd.f32 %v3436, %v2315
        %v3438 = vadd.f32 %v3437, %v2323
        %v3439 = vadd.f32 %v3438, %v2331
        %v3440 = vadd.f32 %v3439, %v2339
        %v3441 = vadd.f32 %v3440, %v2347
        %v3442 = vadd.f32 %v3441, %v2355
        %v3443 = vadd.f32 %v3442, %v2363
        %v3444 = vadd.f32 %v3443, %v2371
        %v3445 = vadd.f32 %v3444, %v2379
        %v3446 = vadd.f32 %v3445, %v2387
        %v3447 = vadd.f32 %v3446, %v2395
        %v3448 = vadd.f32 %v3447, %v2403
        %v3449 = vadd.f32 %v3448, %v2411
        %v3450 = vadd.f32 %v3449, %v2419
        %v3451 = vadd.f32 %v3450, %v2427
        %v3452 = vadd.f32 %v3451, %v2435
        %v3453 = vadd.f32 %v3452, %v2443
        %v3454 = vadd.f32 %v3453, %v2451
        %v3455 = vadd.f32 %v3454, %v2459
        %v3456 = vadd.f32 %v3455, %v2467
        %v3457 = vadd.f32 %v3456, %v2475
        %v3458 = vadd.f32 %v3457, %v2483
        %v3459 = vadd.f32 %v3458, %v2491
        %v3460 = vadd.f32 %v3459, %v2499
        %v3461 = vadd.f32 %v3460, %v2507
        %v3462 = vadd.f32 %v3461, %v2515
        %v3463 = vadd.f32 %v3462, %v2523
        %v3464 = vadd.f32 %v3463, %v2531
        %v3465 = vadd.f32 %v3464, %v2539
        %v3466 = vadd.f32 %v3465, %v2547
        %v3467 = vadd.f32 %v3466, %v2555
        %v3468 = vadd.f32 %v3467, %v2563
        %v3469 = vadd.f32 %v3468, %v2571
        %v3470 = vadd.f32 %v3469, %v2579
        %v3471 = vadd.f32 %v3470, %v2587
        %v3472 = vadd.f32 %v3471, %v2595
        %v3473 = vadd.f32 %v3472, %v2603
        %v3474 = vadd.f32 %v3473, %v2611
        %v3475 = vadd.f32 %v3474, %v2619
        %v3476 = vadd.f32 %v3475, %v2627
        %v3477 = vadd.f32 %v3476, %v2635
        %v3478 = vadd.f32 %v3477, %v2643
        %v3479 = vadd.f32 %v3478, %v2651
        %v3480 = vadd.f32 %v3479, %v2659
        %v3481 = vadd.f32 %v3480, %v2667
        %v3482 = vadd.f32 %v3481, %v2675
        %v3483 = vadd.f32 %v3482, %v2683
        %v3484 = vadd.f32 %v3483, %v2691
        %v3485 = vadd.f32 %v3484, %v2699
        %v3486 = vadd.f32 %v3485, %v2707
        %v3487 = vadd.f32 %v3486, %v2715
        %v3488 = vadd.f32 %v3487, %v2723
        %v3489 = vadd.f32 %v3488, %v2731
        %v3490 = vadd.f32 %v3489, %v2739
        %v3491 = vadd.f32 %v3490, %v2747
        %v3492 = vadd.f32 %v3491, %v2755
        %v3493 = vadd.f32 %v3492, %v2763
        %v3494 = vadd.f32 %v3493, %v2771
        %v3495 = vadd.f32 %v3494, %v2779
        %v3496 = vadd.f32 %v3495, %v2787
        %v3497 = vadd.f32 %v3496, %v2795
        %v3498 = vadd.f32 %v3497, %v2803
        %v3499 = vadd.f32 %v3498, %v2811
        %v3500 = vadd.f32 %v3499, %v2819
        %v3501 = vadd.f32 %v3500, %v2827
        %v3502 = vadd.f32 %v3501, %v2835
        %v3503 = vadd.f32 %v3502, %v2843
        %v3504 = vadd.f32 %v3503, %v2851
        %v3505 = vadd.f32 %v3504, %v2859
        %v3506 = vadd.f32 %v3505, %v2867
        %v3507 = vadd.f32 %v3506, %v2875
        %v3508 = vadd.f32 %v3507, %v2883
        %v3509 = vadd.f32 %v3508, %v2891
        %v3510 = vadd.f32 %v3509, %v2899
        %v3511 = vadd.f32 %v3510, %v2907
        %v3512 = vadd.f32 %v3511, %v2915
        %v3513 = vadd.f32 %v3512, %v2923
        %v3514 = vadd.f32 %v3513, %v2931
        %v3515 = vadd.f32 %v3514, %v2939
        %v3516 = vadd.f32 %v3515, %v2947
        %v3517 = vadd.f32 %v3516, %v2955
        %v3518 = vadd.f32 %v3517, %v2963
        %v3519 = vadd.f32 %v3518, %v2971
        %v3520 = vadd.f32 %v3519, %v2979
        %v3521 = vadd.f32 %v3520, %v2987
        %v3522 = vadd.f32 %v3521, %v2995
        %v3523 = vadd.f32 %v3522, %v3003
        %v3524 = vadd.f32 %v3523, %v3011
        %v3525 = vadd.f32 %v3524, %v3019
        %v3526 = vadd.f32 %v3525, %v3027
        %v3527 = vadd.f32 %v3526, %v3035
        %v3528 = vadd.f32 %v3527, %v3043
        %v3529 = vadd.f32 %v3528, %v3051
        %v3530 = vadd.f32 %v3529, %v3059
        %v3531 = vadd.f32 %v3530, %v3067
        %v3532 = vadd.f32 %v3531, %v3075
        %v3533 = vadd.f32 %v3532, %v3083
        %v3534 = vadd.f32 %v3533, %v3091
        %v3535 = vadd.f32 %v3534, %v3099
        %v3536 = vadd.f32 %v3535, %v3107
        %v3537 = vadd.f32 %v3536, %v3115
        %v3538 = vadd.f32 %v3537, %v3123
        %v3539 = vadd.f32 %v3538, %v3131
        %v3540 = vadd.f32 %v3539, %v3139
        %v3541 = vadd.f32 %v3540, %v3147
        %v3542 = vadd.f32 %v3541, %v3155
        %v3543 = vadd.f32 %v3542, %v3163
        %v3544 = vadd.f32 %v3543, %v3171
        %v3545 = vadd.f32 %v3544, %v3179
        %v3546 = vadd.f32 %v3545, %v3187
        %v3547 = vadd.f32 %v3546, %v3195
        %v3548 = vadd.f32 %v3547, %v3203
        %v3549 = vadd.f32 %v3548, %v3211
        %v3550 = vadd.f32 %v3549, %v3219
        %v3551 = vadd.f32 %v3550, %v3227
        %v3552 = vadd.f32 %v3551, %v3235
        %v3553 = vadd.f32 %v3552, %v3243
        %v3554 = vadd.f32 %v3553, %v3251
        %v3555 = vadd.f32 %v3554, %v3259
        %v3556 = vadd.f32 %v3555, %v3267
        %v3557 = vadd.f32 %v3556, %v3275
        %v3558 = vadd.f32 %v3557, %v3283
        %v3559 = vadd.f32 %v3558, %v3291
        %v3560 = vadd.f32 %v2276, %v2284
        %v3561 = vadd.f32 %v3560, %v2292
        %v3562 = vadd.f32 %v3561, %v2300
        %v3563 = vadd.f32 %v3562, %v2308
        %v3564 = vadd.f32 %v3563, %v2316
        %v3565 = vadd.f32 %v3564, %v2324
        %v3566 = vadd.f32 %v3565, %v2332
        %v3567 = vadd.f32 %v3566, %v2340
        %v3568 = vadd.f32 %v3567, %v2348
        %v3569 = vadd.f32 %v3568, %v2356
        %v3570 = vadd.f32 %v3569, %v2364
        %v3571 = vadd.f32 %v3570, %v2372
        %v3572 = vadd.f32 %v3571, %v2380
        %v3573 = vadd.f32 %v3572, %v2388
        %v3574 = vadd.f32 %v3573, %v2396
        %v3575 = vadd.f32 %v3574, %v2404
        %v3576 = vadd.f32 %v3575, %v2412
        %v3577 = vadd.f32 %v3576, %v2420
        %v3578 = vadd.f32 %v3577, %v2428
        %v3579 = vadd.f32 %v3578, %v2436
        %v3580 = vadd.f32 %v3579, %v2444
        %v3581 = vadd.f32 %v3580, %v2452
        %v3582 = vadd.f32 %v3581, %v2460
        %v3583 = vadd.f32 %v3582, %v2468
        %v3584 = vadd.f32 %v3583, %v2476
        %v3585 = vadd.f32 %v3584, %v2484
        %v3586 = vadd.f32 %v3585, %v2492
        %v3587 = vadd.f32 %v3586, %v2500
        %v3588 = vadd.f32 %v3587, %v2508
        %v3589 = vadd.f32 %v3588, %v2516
        %v3590 = vadd.f32 %v3589, %v2524
        %v3591 = vadd.f32 %v3590, %v2532
        %v3592 = vadd.f32 %v3591, %v2540
        %v3593 = vadd.f32 %v3592, %v2548
        %v3594 = vadd.f32 %v3593, %v2556
        %v3595 = vadd.f32 %v3594, %v2564
        %v3596 = vadd.f32 %v3595, %v2572
        %v3597 = vadd.f32 %v3596, %v2580
        %v3598 = vadd.f32 %v3597, %v2588
        %v3599 = vadd.f32 %v3598, %v2596
        %v3600 = vadd.f32 %v3599, %v2604
        %v3601 = vadd.f32 %v3600, %v2612
        %v3602 = vadd.f32 %v3601, %v2620
        %v3603 = vadd.f32 %v3602, %v2628
        %v3604 = vadd.f32 %v3603, %v2636
        %v3605 = vadd.f32 %v3604, %v2644
        %v3606 = vadd.f32 %v3605, %v2652
        %v3607 = vadd.f32 %v3606, %v2660
        %v3608 = vadd.f32 %v3607, %v2668
        %v3609 = vadd.f32 %v3608, %v2676
        %v3610 = vadd.f32 %v3609, %v2684
        %v3611 = vadd.f32 %v3610, %v2692
        %v3612 = vadd.f32 %v3611, %v2700
        %v3613 = vadd.f32 %v3612, %v2708
        %v3614 = vadd.f32 %v3613, %v2716
        %v3615 = vadd.f32 %v3614, %v2724
        %v3616 = vadd.f32 %v3615, %v2732
        %v3617 = vadd.f32 %v3616, %v2740
        %v3618 = vadd.f32 %v3617, %v2748
        %v3619 = vadd.f32 %v3618, %v2756
        %v3620 = vadd.f32 %v3619, %v2764
        %v3621 = vadd.f32 %v3620, %v2772
        %v3622 = vadd.f32 %v3621, %v2780
        %v3623 = vadd.f32 %v3622, %v2788
        %v3624 = vadd.f32 %v3623, %v2796
        %v3625 = vadd.f32 %v3624, %v2804
        %v3626 = vadd.f32 %v3625, %v2812
        %v3627 = vadd.f32 %v3626, %v2820
        %v3628 = vadd.f32 %v3627, %v2828
        %v3629 = vadd.f32 %v3628, %v2836
        %v3630 = vadd.f32 %v3629, %v2844
        %v3631 = vadd.f32 %v3630, %v2852
        %v3632 = vadd.f32 %v3631, %v2860
        %v3633 = vadd.f32 %v3632, %v2868
        %v3634 = vadd.f32 %v3633, %v2876
        %v3635 = vadd.f32 %v3634, %v2884
        %v3636 = vadd.f32 %v3635, %v2892
        %v3637 = vadd.f32 %v3636, %v2900
        %v3638 = vadd.f32 %v3637, %v2908
        %v3639 = vadd.f32 %v3638, %v2916
        %v3640 = vadd.f32 %v3639, %v2924
        %v3641 = vadd.f32 %v3640, %v2932
        %v3642 = vadd.f32 %v3641, %v2940
        %v3643 = vadd.f32 %v3642, %v2948
        %v3644 = vadd.f32 %v3643, %v2956
        %v3645 = vadd.f32 %v3644, %v2964
        %v3646 = vadd.f32 %v3645, %v2972
        %v3647 = vadd.f32 %v3646, %v2980
        %v3648 = vadd.f32 %v3647, %v2988
        %v3649 = vadd.f32 %v3648, %v2996
        %v3650 = vadd.f32 %v3649, %v3004
        %v3651 = vadd.f32 %v3650, %v3012
        %v3652 = vadd.f32 %v3651, %v3020
        %v3653 = vadd.f32 %v3652, %v3028
        %v3654 = vadd.f32 %v3653, %v3036
        %v3655 = vadd.f32 %v3654, %v3044
        %v3656 = vadd.f32 %v3655, %v3052
        %v3657 = vadd.f32 %v3656, %v3060
        %v3658 = vadd.f32 %v3657, %v3068
        %v3659 = vadd.f32 %v3658, %v3076
        %v3660 = vadd.f32 %v3659, %v3084
        %v3661 = vadd.f32 %v3660, %v3092
        %v3662 = vadd.f32 %v3661, %v3100
        %v3663 = vadd.f32 %v3662, %v3108
        %v3664 = vadd.f32 %v3663, %v3116
        %v3665 = vadd.f32 %v3664, %v3124
        %v3666 = vadd.f32 %v3665, %v3132
        %v3667 = vadd.f32 %v3666, %v3140
        %v3668 = vadd.f32 %v3667, %v3148
        %v3669 = vadd.f32 %v3668, %v3156
        %v3670 = vadd.f32 %v3669, %v3164
        %v3671 = vadd.f32 %v3670, %v3172
        %v3672 = vadd.f32 %v3671, %v3180
        %v3673 = vadd.f32 %v3672, %v3188
        %v3674 = vadd.f32 %v3673, %v3196
        %v3675 = vadd.f32 %v3674, %v3204
        %v3676 = vadd.f32 %v3675, %v3212
        %v3677 = vadd.f32 %v3676, %v3220
        %v3678 = vadd.f32 %v3677, %v3228
        %v3679 = vadd.f32 %v3678, %v3236
        %v3680 = vadd.f32 %v3679, %v3244
        %v3681 = vadd.f32 %v3680, %v3252
        %v3682 = vadd.f32 %v3681, %v3260
        %v3683 = vadd.f32 %v3682, %v3268
        %v3684 = vadd.f32 %v3683, %v3276
        %v3685 = vadd.f32 %v3684, %v3284
        %v3686 = vadd.f32 %v3685, %v3292
        %v3687 = vadd.f32 %v2277, %v2285
        %v3688 = vadd.f32 %v3687, %v2293
        %v3689 = vadd.f32 %v3688, %v2301
        %v3690 = vadd.f32 %v3689, %v2309
        %v3691 = vadd.f32 %v3690, %v2317
        %v3692 = vadd.f32 %v3691, %v2325
        %v3693 = vadd.f32 %v3692, %v2333
        %v3694 = vadd.f32 %v3693, %v2341
        %v3695 = vadd.f32 %v3694, %v2349
        %v3696 = vadd.f32 %v3695, %v2357
        %v3697 = vadd.f32 %v3696, %v2365
        %v3698 = vadd.f32 %v3697, %v2373
        %v3699 = vadd.f32 %v3698, %v2381
        %v3700 = vadd.f32 %v3699, %v2389
        %v3701 = vadd.f32 %v3700, %v2397
        %v3702 = vadd.f32 %v3701, %v2405
        %v3703 = vadd.f32 %v3702, %v2413
        %v3704 = vadd.f32 %v3703, %v2421
        %v3705 = vadd.f32 %v3704, %v2429
        %v3706 = vadd.f32 %v3705, %v2437
        %v3707 = vadd.f32 %v3706, %v2445
        %v3708 = vadd.f32 %v3707, %v2453
        %v3709 = vadd.f32 %v3708, %v2461
        %v3710 = vadd.f32 %v3709, %v2469
        %v3711 = vadd.f32 %v3710, %v2477
        %v3712 = vadd.f32 %v3711, %v2485
        %v3713 = vadd.f32 %v3712, %v2493
        %v3714 = vadd.f32 %v3713, %v2501
        %v3715 = vadd.f32 %v3714, %v2509
        %v3716 = vadd.f32 %v3715, %v2517
        %v3717 = vadd.f32 %v3716, %v2525
        %v3718 = vadd.f32 %v3717, %v2533
        %v3719 = vadd.f32 %v3718, %v2541
        %v3720 = vadd.f32 %v3719, %v2549
        %v3721 = vadd.f32 %v3720, %v2557
        %v3722 = vadd.f32 %v3721, %v2565
        %v3723 = vadd.f32 %v3722, %v2573
        %v3724 = vadd.f32 %v3723, %v2581
        %v3725 = vadd.f32 %v3724, %v2589
        %v3726 = vadd.f32 %v3725, %v2597
        %v3727 = vadd.f32 %v3726, %v2605
        %v3728 = vadd.f32 %v3727, %v2613
        %v3729 = vadd.f32 %v3728, %v2621
        %v3730 = vadd.f32 %v3729, %v2629
        %v3731 = vadd.f32 %v3730, %v2637
        %v3732 = vadd.f32 %v3731, %v2645
        %v3733 = vadd.f32 %v3732, %v2653
        %v3734 = vadd.f32 %v3733, %v2661
        %v3735 = vadd.f32 %v3734, %v2669
        %v3736 = vadd.f32 %v3735, %v2677
        %v3737 = vadd.f32 %v3736, %v2685
        %v3738 = vadd.f32 %v3737, %v2693
        %v3739 = vadd.f32 %v3738, %v2701
        %v3740 = vadd.f32 %v3739, %v2709
        %v3741 = vadd.f32 %v3740, %v2717
        %v3742 = vadd.f32 %v3741, %v2725
        %v3743 = vadd.f32 %v3742, %v2733
        %v3744 = vadd.f32 %v3743, %v2741
        %v3745 = vadd.f32 %v3744, %v2749
        %v3746 = vadd.f32 %v3745, %v2757
        %v3747 = vadd.f32 %v3746, %v2765
        %v3748 = vadd.f32 %v3747, %v2773
        %v3749 = vadd.f32 %v3748, %v2781
        %v3750 = vadd.f32 %v3749, %v2789
        %v3751 = vadd.f32 %v3750, %v2797
        %v3752 = vadd.f32 %v3751, %v2805
        %v3753 = vadd.f32 %v3752, %v2813
        %v3754 = vadd.f32 %v3753, %v2821
        %v3755 = vadd.f32 %v3754, %v2829
        %v3756 = vadd.f32 %v3755, %v2837
        %v3757 = vadd.f32 %v3756, %v2845
        %v3758 = vadd.f32 %v3757, %v2853
        %v3759 = vadd.f32 %v3758, %v2861
        %v3760 = vadd.f32 %v3759, %v2869
        %v3761 = vadd.f32 %v3760, %v2877
        %v3762 = vadd.f32 %v3761, %v2885
        %v3763 = vadd.f32 %v3762, %v2893
        %v3764 = vadd.f32 %v3763, %v2901
        %v3765 = vadd.f32 %v3764, %v2909
        %v3766 = vadd.f32 %v3765, %v2917
        %v3767 = vadd.f32 %v3766, %v2925
        %v3768 = vadd.f32 %v3767, %v2933
        %v3769 = vadd.f32 %v3768, %v2941
        %v3770 = vadd.f32 %v3769, %v2949
        %v3771 = vadd.f32 %v3770, %v2957
        %v3772 = vadd.f32 %v3771, %v2965
        %v3773 = vadd.f32 %v3772, %v2973
        %v3774 = vadd.f32 %v3773, %v2981
        %v3775 = vadd.f32 %v3774, %v2989
        %v3776 = vadd.f32 %v3775, %v2997
        %v3777 = vadd.f32 %v3776, %v3005
        %v3778 = vadd.f32 %v3777, %v3013
        %v3779 = vadd.f32 %v3778, %v3021
        %v3780 = vadd.f32 %v3779, %v3029
        %v3781 = vadd.f32 %v3780, %v3037
        %v3782 = vadd.f32 %v3781, %v3045
        %v3783 = vadd.f32 %v3782, %v3053
        %v3784 = vadd.f32 %v3783, %v3061
        %v3785 = vadd.f32 %v3784, %v3069
        %v3786 = vadd.f32 %v3785, %v3077
        %v3787 = vadd.f32 %v3786, %v3085
        %v3788 = vadd.f32 %v3787, %v3093
        %v3789 = vadd.f32 %v3788, %v3101
        %v3790 = vadd.f32 %v3789, %v3109
        %v3791 = vadd.f32 %v3790, %v3117
        %v3792 = vadd.f32 %v3791, %v3125
        %v3793 = vadd.f32 %v3792, %v3133
        %v3794 = vadd.f32 %v3793, %v3141
        %v3795 = vadd.f32 %v3794, %v3149
        %v3796 = vadd.f32 %v3795, %v3157
        %v3797 = vadd.f32 %v3796, %v3165
        %v3798 = vadd.f32 %v3797, %v3173
        %v3799 = vadd.f32 %v3798, %v3181
        %v3800 = vadd.f32 %v3799, %v3189
        %v3801 = vadd.f32 %v3800, %v3197
        %v3802 = vadd.f32 %v3801, %v3205
        %v3803 = vadd.f32 %v3802, %v3213
        %v3804 = vadd.f32 %v3803, %v3221
        %v3805 = vadd.f32 %v3804, %v3229
        %v3806 = vadd.f32 %v3805, %v3237
        %v3807 = vadd.f32 %v3806, %v3245
        %v3808 = vadd.f32 %v3807, %v3253
        %v3809 = vadd.f32 %v3808, %v3261
        %v3810 = vadd.f32 %v3809, %v3269
        %v3811 = vadd.f32 %v3810, %v3277
        %v3812 = vadd.f32 %v3811, %v3285
        %v3813 = vadd.f32 %v3812, %v3293
        %v3814 = vadd.f32 %v2278, %v2286
        %v3815 = vadd.f32 %v3814, %v2294
        %v3816 = vadd.f32 %v3815, %v2302
        %v3817 = vadd.f32 %v3816, %v2310
        %v3818 = vadd.f32 %v3817, %v2318
        %v3819 = vadd.f32 %v3818, %v2326
        %v3820 = vadd.f32 %v3819, %v2334
        %v3821 = vadd.f32 %v3820, %v2342
        %v3822 = vadd.f32 %v3821, %v2350
        %v3823 = vadd.f32 %v3822, %v2358
        %v3824 = vadd.f32 %v3823, %v2366
        %v3825 = vadd.f32 %v3824, %v2374
        %v3826 = vadd.f32 %v3825, %v2382
        %v3827 = vadd.f32 %v3826, %v2390
        %v3828 = vadd.f32 %v3827, %v2398
        %v3829 = vadd.f32 %v3828, %v2406
        %v3830 = vadd.f32 %v3829, %v2414
        %v3831 = vadd.f32 %v3830, %v2422
        %v3832 = vadd.f32 %v3831, %v2430
        %v3833 = vadd.f32 %v3832, %v2438
        %v3834 = vadd.f32 %v3833, %v2446
        %v3835 = vadd.f32 %v3834, %v2454
        %v3836 = vadd.f32 %v3835, %v2462
        %v3837 = vadd.f32 %v3836, %v2470
        %v3838 = vadd.f32 %v3837, %v2478
        %v3839 = vadd.f32 %v3838, %v2486
        %v3840 = vadd.f32 %v3839, %v2494
        %v3841 = vadd.f32 %v3840, %v2502
        %v3842 = vadd.f32 %v3841, %v2510
        %v3843 = vadd.f32 %v3842, %v2518
        %v3844 = vadd.f32 %v3843, %v2526
        %v3845 = vadd.f32 %v3844, %v2534
        %v3846 = vadd.f32 %v3845, %v2542
        %v3847 = vadd.f32 %v3846, %v2550
        %v3848 = vadd.f32 %v3847, %v2558
        %v3849 = vadd.f32 %v3848, %v2566
        %v3850 = vadd.f32 %v3849, %v2574
        %v3851 = vadd.f32 %v3850, %v2582
        %v3852 = vadd.f32 %v3851, %v2590
        %v3853 = vadd.f32 %v3852, %v2598
        %v3854 = vadd.f32 %v3853, %v2606
        %v3855 = vadd.f32 %v3854, %v2614
        %v3856 = vadd.f32 %v3855, %v2622
        %v3857 = vadd.f32 %v3856, %v2630
        %v3858 = vadd.f32 %v3857, %v2638
        %v3859 = vadd.f32 %v3858, %v2646
        %v3860 = vadd.f32 %v3859, %v2654
        %v3861 = vadd.f32 %v3860, %v2662
        %v3862 = vadd.f32 %v3861, %v2670
        %v3863 = vadd.f32 %v3862, %v2678
        %v3864 = vadd.f32 %v3863, %v2686
        %v3865 = vadd.f32 %v3864, %v2694
        %v3866 = vadd.f32 %v3865, %v2702
        %v3867 = vadd.f32 %v3866, %v2710
        %v3868 = vadd.f32 %v3867, %v2718
        %v3869 = vadd.f32 %v3868, %v2726
        %v3870 = vadd.f32 %v3869, %v2734
        %v3871 = vadd.f32 %v3870, %v2742
        %v3872 = vadd.f32 %v3871, %v2750
        %v3873 = vadd.f32 %v3872, %v2758
        %v3874 = vadd.f32 %v3873, %v2766
        %v3875 = vadd.f32 %v3874, %v2774
        %v3876 = vadd.f32 %v3875, %v2782
        %v3877 = vadd.f32 %v3876, %v2790
        %v3878 = vadd.f32 %v3877, %v2798
        %v3879 = vadd.f32 %v3878, %v2806
        %v3880 = vadd.f32 %v3879, %v2814
        %v3881 = vadd.f32 %v3880, %v2822
        %v3882 = vadd.f32 %v3881, %v2830
        %v3883 = vadd.f32 %v3882, %v2838
        %v3884 = vadd.f32 %v3883, %v2846
        %v3885 = vadd.f32 %v3884, %v2854
        %v3886 = vadd.f32 %v3885, %v2862
        %v3887 = vadd.f32 %v3886, %v2870
        %v3888 = vadd.f32 %v3887, %v2878
        %v3889 = vadd.f32 %v3888, %v2886
        %v3890 = vadd.f32 %v3889, %v2894
        %v3891 = vadd.f32 %v3890, %v2902
        %v3892 = vadd.f32 %v3891, %v2910
        %v3893 = vadd.f32 %v3892, %v2918
        %v3894 = vadd.f32 %v3893, %v2926
        %v3895 = vadd.f32 %v3894, %v2934
        %v3896 = vadd.f32 %v3895, %v2942
        %v3897 = vadd.f32 %v3896, %v2950
        %v3898 = vadd.f32 %v3897, %v2958
        %v3899 = vadd.f32 %v3898, %v2966
        %v3900 = vadd.f32 %v3899, %v2974
        %v3901 = vadd.f32 %v3900, %v2982
        %v3902 = vadd.f32 %v3901, %v2990
        %v3903 = vadd.f32 %v3902, %v2998
        %v3904 = vadd.f32 %v3903, %v3006
        %v3905 = vadd.f32 %v3904, %v3014
        %v3906 = vadd.f32 %v3905, %v3022
        %v3907 = vadd.f32 %v3906, %v3030
        %v3908 = vadd.f32 %v3907, %v3038
        %v3909 = vadd.f32 %v3908, %v3046
        %v3910 = vadd.f32 %v3909, %v3054
        %v3911 = vadd.f32 %v3910, %v3062
        %v3912 = vadd.f32 %v3911, %v3070
        %v3913 = vadd.f32 %v3912, %v3078
        %v3914 = vadd.f32 %v3913, %v3086
        %v3915 = vadd.f32 %v3914, %v3094
        %v3916 = vadd.f32 %v3915, %v3102
        %v3917 = vadd.f32 %v3916, %v3110
        %v3918 = vadd.f32 %v3917, %v3118
        %v3919 = vadd.f32 %v3918, %v3126
        %v3920 = vadd.f32 %v3919, %v3134
        %v3921 = vadd.f32 %v3920, %v3142
        %v3922 = vadd.f32 %v3921, %v3150
        %v3923 = vadd.f32 %v3922, %v3158
        %v3924 = vadd.f32 %v3923, %v3166
        %v3925 = vadd.f32 %v3924, %v3174
        %v3926 = vadd.f32 %v3925, %v3182
        %v3927 = vadd.f32 %v3926, %v3190
        %v3928 = vadd.f32 %v3927, %v3198
        %v3929 = vadd.f32 %v3928, %v3206
        %v3930 = vadd.f32 %v3929, %v3214
        %v3931 = vadd.f32 %v3930, %v3222
        %v3932 = vadd.f32 %v3931, %v3230
        %v3933 = vadd.f32 %v3932, %v3238
        %v3934 = vadd.f32 %v3933, %v3246
        %v3935 = vadd.f32 %v3934, %v3254
        %v3936 = vadd.f32 %v3935, %v3262
        %v3937 = vadd.f32 %v3936, %v3270
        %v3938 = vadd.f32 %v3937, %v3278
        %v3939 = vadd.f32 %v3938, %v3286
        %v3940 = vadd.f32 %v3939, %v3294
        %v3941 = vadd.f32 %v2279, %v2287
        %v3942 = vadd.f32 %v3941, %v2295
        %v3943 = vadd.f32 %v3942, %v2303
        %v3944 = vadd.f32 %v3943, %v2311
        %v3945 = vadd.f32 %v3944, %v2319
        %v3946 = vadd.f32 %v3945, %v2327
        %v3947 = vadd.f32 %v3946, %v2335
        %v3948 = vadd.f32 %v3947, %v2343
        %v3949 = vadd.f32 %v3948, %v2351
        %v3950 = vadd.f32 %v3949, %v2359
        %v3951 = vadd.f32 %v3950, %v2367
        %v3952 = vadd.f32 %v3951, %v2375
        %v3953 = vadd.f32 %v3952, %v2383
        %v3954 = vadd.f32 %v3953, %v2391
        %v3955 = vadd.f32 %v3954, %v2399
        %v3956 = vadd.f32 %v3955, %v2407
        %v3957 = vadd.f32 %v3956, %v2415
        %v3958 = vadd.f32 %v3957, %v2423
        %v3959 = vadd.f32 %v3958, %v2431
        %v3960 = vadd.f32 %v3959, %v2439
        %v3961 = vadd.f32 %v3960, %v2447
        %v3962 = vadd.f32 %v3961, %v2455
        %v3963 = vadd.f32 %v3962, %v2463
        %v3964 = vadd.f32 %v3963, %v2471
        %v3965 = vadd.f32 %v3964, %v2479
        %v3966 = vadd.f32 %v3965, %v2487
        %v3967 = vadd.f32 %v3966, %v2495
        %v3968 = vadd.f32 %v3967, %v2503
        %v3969 = vadd.f32 %v3968, %v2511
        %v3970 = vadd.f32 %v3969, %v2519
        %v3971 = vadd.f32 %v3970, %v2527
        %v3972 = vadd.f32 %v3971, %v2535
        %v3973 = vadd.f32 %v3972, %v2543
        %v3974 = vadd.f32 %v3973, %v2551
        %v3975 = vadd.f32 %v3974, %v2559
        %v3976 = vadd.f32 %v3975, %v2567
        %v3977 = vadd.f32 %v3976, %v2575
        %v3978 = vadd.f32 %v3977, %v2583
        %v3979 = vadd.f32 %v3978, %v2591
        %v3980 = vadd.f32 %v3979, %v2599
        %v3981 = vadd.f32 %v3980, %v2607
        %v3982 = vadd.f32 %v3981, %v2615
        %v3983 = vadd.f32 %v3982, %v2623
        %v3984 = vadd.f32 %v3983, %v2631
        %v3985 = vadd.f32 %v3984, %v2639
        %v3986 = vadd.f32 %v3985, %v2647
        %v3987 = vadd.f32 %v3986, %v2655
        %v3988 = vadd.f32 %v3987, %v2663
        %v3989 = vadd.f32 %v3988, %v2671
        %v3990 = vadd.f32 %v3989, %v2679
        %v3991 = vadd.f32 %v3990, %v2687
        %v3992 = vadd.f32 %v3991, %v2695
        %v3993 = vadd.f32 %v3992, %v2703
        %v3994 = vadd.f32 %v3993, %v2711
        %v3995 = vadd.f32 %v3994, %v2719
        %v3996 = vadd.f32 %v3995, %v2727
        %v3997 = vadd.f32 %v3996, %v2735
        %v3998 = vadd.f32 %v3997, %v2743
        %v3999 = vadd.f32 %v3998, %v2751
        %v4000 = vadd.f32 %v3999, %v2759
        %v4001 = vadd.f32 %v4000, %v2767
        %v4002 = vadd.f32 %v4001, %v2775
        %v4003 = vadd.f32 %v4002, %v2783
        %v4004 = vadd.f32 %v4003, %v2791
        %v4005 = vadd.f32 %v4004, %v2799
        %v4006 = vadd.f32 %v4005, %v2807
        %v4007 = vadd.f32 %v4006, %v2815
        %v4008 = vadd.f32 %v4007, %v2823
        %v4009 = vadd.f32 %v4008, %v2831
        %v4010 = vadd.f32 %v4009, %v2839
        %v4011 = vadd.f32 %v4010, %v2847
        %v4012 = vadd.f32 %v4011, %v2855
        %v4013 = vadd.f32 %v4012, %v2863
        %v4014 = vadd.f32 %v4013, %v2871
        %v4015 = vadd.f32 %v4014, %v2879
        %v4016 = vadd.f32 %v4015, %v2887
        %v4017 = vadd.f32 %v4016, %v2895
        %v4018 = vadd.f32 %v4017, %v2903
        %v4019 = vadd.f32 %v4018, %v2911
        %v4020 = vadd.f32 %v4019, %v2919
        %v4021 = vadd.f32 %v4020, %v2927
        %v4022 = vadd.f32 %v4021, %v2935
        %v4023 = vadd.f32 %v4022, %v2943
        %v4024 = vadd.f32 %v4023, %v2951
        %v4025 = vadd.f32 %v4024, %v2959
        %v4026 = vadd.f32 %v4025, %v2967
        %v4027 = vadd.f32 %v4026, %v2975
        %v4028 = vadd.f32 %v4027, %v2983
        %v4029 = vadd.f32 %v4028, %v2991
        %v4030 = vadd.f32 %v4029, %v2999
        %v4031 = vadd.f32 %v4030, %v3007
        %v4032 = vadd.f32 %v4031, %v3015
        %v4033 = vadd.f32 %v4032, %v3023
        %v4034 = vadd.f32 %v4033, %v3031
        %v4035 = vadd.f32 %v4034, %v3039
        %v4036 = vadd.f32 %v4035, %v3047
        %v4037 = vadd.f32 %v4036, %v3055
        %v4038 = vadd.f32 %v4037, %v3063
        %v4039 = vadd.f32 %v4038, %v3071
        %v4040 = vadd.f32 %v4039, %v3079
        %v4041 = vadd.f32 %v4040, %v3087
        %v4042 = vadd.f32 %v4041, %v3095
        %v4043 = vadd.f32 %v4042, %v3103
        %v4044 = vadd.f32 %v4043, %v3111
        %v4045 = vadd.f32 %v4044, %v3119
        %v4046 = vadd.f32 %v4045, %v3127
        %v4047 = vadd.f32 %v4046, %v3135
        %v4048 = vadd.f32 %v4047, %v3143
        %v4049 = vadd.f32 %v4048, %v3151
        %v4050 = vadd.f32 %v4049, %v3159
        %v4051 = vadd.f32 %v4050, %v3167
        %v4052 = vadd.f32 %v4051, %v3175
        %v4053 = vadd.f32 %v4052, %v3183
        %v4054 = vadd.f32 %v4053, %v3191
        %v4055 = vadd.f32 %v4054, %v3199
        %v4056 = vadd.f32 %v4055, %v3207
        %v4057 = vadd.f32 %v4056, %v3215
        %v4058 = vadd.f32 %v4057, %v3223
        %v4059 = vadd.f32 %v4058, %v3231
        %v4060 = vadd.f32 %v4059, %v3239
        %v4061 = vadd.f32 %v4060, %v3247
        %v4062 = vadd.f32 %v4061, %v3255
        %v4063 = vadd.f32 %v4062, %v3263
        %v4064 = vadd.f32 %v4063, %v3271
        %v4065 = vadd.f32 %v4064, %v3279
        %v4066 = vadd.f32 %v4065, %v3287
        %v4067 = vadd.f32 %v4066, %v3295
        %v4068 = vadd.f32 %v2280, %v2288
        %v4069 = vadd.f32 %v4068, %v2296
        %v4070 = vadd.f32 %v4069, %v2304
        %v4071 = vadd.f32 %v4070, %v2312
        %v4072 = vadd.f32 %v4071, %v2320
        %v4073 = vadd.f32 %v4072, %v2328
        %v4074 = vadd.f32 %v4073, %v2336
        %v4075 = vadd.f32 %v4074, %v2344
        %v4076 = vadd.f32 %v4075, %v2352
        %v4077 = vadd.f32 %v4076, %v2360
        %v4078 = vadd.f32 %v4077, %v2368
        %v4079 = vadd.f32 %v4078, %v2376
        %v4080 = vadd.f32 %v4079, %v2384
        %v4081 = vadd.f32 %v4080, %v2392
        %v4082 = vadd.f32 %v4081, %v2400
        %v4083 = vadd.f32 %v4082, %v2408
        %v4084 = vadd.f32 %v4083, %v2416
        %v4085 = vadd.f32 %v4084, %v2424
        %v4086 = vadd.f32 %v4085, %v2432
        %v4087 = vadd.f32 %v4086, %v2440
        %v4088 = vadd.f32 %v4087, %v2448
        %v4089 = vadd.f32 %v4088, %v2456
        %v4090 = vadd.f32 %v4089, %v2464
        %v4091 = vadd.f32 %v4090, %v2472
        %v4092 = vadd.f32 %v4091, %v2480
        %v4093 = vadd.f32 %v4092, %v2488
        %v4094 = vadd.f32 %v4093, %v2496
        %v4095 = vadd.f32 %v4094, %v2504
        %v4096 = vadd.f32 %v4095, %v2512
        %v4097 = vadd.f32 %v4096, %v2520
        %v4098 = vadd.f32 %v4097, %v2528
        %v4099 = vadd.f32 %v4098, %v2536
        %v4100 = vadd.f32 %v4099, %v2544
        %v4101 = vadd.f32 %v4100, %v2552
        %v4102 = vadd.f32 %v4101, %v2560
        %v4103 = vadd.f32 %v4102, %v2568
        %v4104 = vadd.f32 %v4103, %v2576
        %v4105 = vadd.f32 %v4104, %v2584
        %v4106 = vadd.f32 %v4105, %v2592
        %v4107 = vadd.f32 %v4106, %v2600
        %v4108 = vadd.f32 %v4107, %v2608
        %v4109 = vadd.f32 %v4108, %v2616
        %v4110 = vadd.f32 %v4109, %v2624
        %v4111 = vadd.f32 %v4110, %v2632
        %v4112 = vadd.f32 %v4111, %v2640
        %v4113 = vadd.f32 %v4112, %v2648
        %v4114 = vadd.f32 %v4113, %v2656
        %v4115 = vadd.f32 %v4114, %v2664
        %v4116 = vadd.f32 %v4115, %v2672
        %v4117 = vadd.f32 %v4116, %v2680
        %v4118 = vadd.f32 %v4117, %v2688
        %v4119 = vadd.f32 %v4118, %v2696
        %v4120 = vadd.f32 %v4119, %v2704
        %v4121 = vadd.f32 %v4120, %v2712
        %v4122 = vadd.f32 %v4121, %v2720
        %v4123 = vadd.f32 %v4122, %v2728
        %v4124 = vadd.f32 %v4123, %v2736
        %v4125 = vadd.f32 %v4124, %v2744
        %v4126 = vadd.f32 %v4125, %v2752
        %v4127 = vadd.f32 %v4126, %v2760
        %v4128 = vadd.f32 %v4127, %v2768
        %v4129 = vadd.f32 %v4128, %v2776
        %v4130 = vadd.f32 %v4129, %v2784
        %v4131 = vadd.f32 %v4130, %v2792
        %v4132 = vadd.f32 %v4131, %v2800
        %v4133 = vadd.f32 %v4132, %v2808
        %v4134 = vadd.f32 %v4133, %v2816
        %v4135 = vadd.f32 %v4134, %v2824
        %v4136 = vadd.f32 %v4135, %v2832
        %v4137 = vadd.f32 %v4136, %v2840
        %v4138 = vadd.f32 %v4137, %v2848
        %v4139 = vadd.f32 %v4138, %v2856
        %v4140 = vadd.f32 %v4139, %v2864
        %v4141 = vadd.f32 %v4140, %v2872
        %v4142 = vadd.f32 %v4141, %v2880
        %v4143 = vadd.f32 %v4142, %v2888
        %v4144 = vadd.f32 %v4143, %v2896
        %v4145 = vadd.f32 %v4144, %v2904
        %v4146 = vadd.f32 %v4145, %v2912
        %v4147 = vadd.f32 %v4146, %v2920
        %v4148 = vadd.f32 %v4147, %v2928
        %v4149 = vadd.f32 %v4148, %v2936
        %v4150 = vadd.f32 %v4149, %v2944
        %v4151 = vadd.f32 %v4150, %v2952
        %v4152 = vadd.f32 %v4151, %v2960
        %v4153 = vadd.f32 %v4152, %v2968
        %v4154 = vadd.f32 %v4153, %v2976
        %v4155 = vadd.f32 %v4154, %v2984
        %v4156 = vadd.f32 %v4155, %v2992
        %v4157 = vadd.f32 %v4156, %v3000
        %v4158 = vadd.f32 %v4157, %v3008
        %v4159 = vadd.f32 %v4158, %v3016
        %v4160 = vadd.f32 %v4159, %v3024
        %v4161 = vadd.f32 %v4160, %v3032
        %v4162 = vadd.f32 %v4161, %v3040
        %v4163 = vadd.f32 %v4162, %v3048
        %v4164 = vadd.f32 %v4163, %v3056
        %v4165 = vadd.f32 %v4164, %v3064
        %v4166 = vadd.f32 %v4165, %v3072
        %v4167 = vadd.f32 %v4166, %v3080
        %v4168 = vadd.f32 %v4167, %v3088
        %v4169 = vadd.f32 %v4168, %v3096
        %v4170 = vadd.f32 %v4169, %v3104
        %v4171 = vadd.f32 %v4170, %v3112
        %v4172 = vadd.f32 %v4171, %v3120
        %v4173 = vadd.f32 %v4172, %v3128
        %v4174 = vadd.f32 %v4173, %v3136
        %v4175 = vadd.f32 %v4174, %v3144
        %v4176 = vadd.f32 %v4175, %v3152
        %v4177 = vadd.f32 %v4176, %v3160
        %v4178 = vadd.f32 %v4177, %v3168
        %v4179 = vadd.f32 %v4178, %v3176
        %v4180 = vadd.f32 %v4179, %v3184
        %v4181 = vadd.f32 %v4180, %v3192
        %v4182 = vadd.f32 %v4181, %v3200
        %v4183 = vadd.f32 %v4182, %v3208
        %v4184 = vadd.f32 %v4183, %v3216
        %v4185 = vadd.f32 %v4184, %v3224
        %v4186 = vadd.f32 %v4185, %v3232
        %v4187 = vadd.f32 %v4186, %v3240
        %v4188 = vadd.f32 %v4187, %v3248
        %v4189 = vadd.f32 %v4188, %v3256
        %v4190 = vadd.f32 %v4189, %v3264
        %v4191 = vadd.f32 %v4190, %v3272
        %v4192 = vadd.f32 %v4191, %v3280
        %v4193 = vadd.f32 %v4192, %v3288
        %v4194 = vadd.f32 %v4193, %v3296
        %v4195 = vadd.f32 %v2281, %v2289
        %v4196 = vadd.f32 %v4195, %v2297
        %v4197 = vadd.f32 %v4196, %v2305
        %v4198 = vadd.f32 %v4197, %v2313
        %v4199 = vadd.f32 %v4198, %v2321
        %v4200 = vadd.f32 %v4199, %v2329
        %v4201 = vadd.f32 %v4200, %v2337
        %v4202 = vadd.f32 %v4201, %v2345
        %v4203 = vadd.f32 %v4202, %v2353
        %v4204 = vadd.f32 %v4203, %v2361
        %v4205 = vadd.f32 %v4204, %v2369
        %v4206 = vadd.f32 %v4205, %v2377
        %v4207 = vadd.f32 %v4206, %v2385
        %v4208 = vadd.f32 %v4207, %v2393
        %v4209 = vadd.f32 %v4208, %v2401
        %v4210 = vadd.f32 %v4209, %v2409
        %v4211 = vadd.f32 %v4210, %v2417
        %v4212 = vadd.f32 %v4211, %v2425
        %v4213 = vadd.f32 %v4212, %v2433
        %v4214 = vadd.f32 %v4213, %v2441
        %v4215 = vadd.f32 %v4214, %v2449
        %v4216 = vadd.f32 %v4215, %v2457
        %v4217 = vadd.f32 %v4216, %v2465
        %v4218 = vadd.f32 %v4217, %v2473
        %v4219 = vadd.f32 %v4218, %v2481
        %v4220 = vadd.f32 %v4219, %v2489
        %v4221 = vadd.f32 %v4220, %v2497
        %v4222 = vadd.f32 %v4221, %v2505
        %v4223 = vadd.f32 %v4222, %v2513
        %v4224 = vadd.f32 %v4223, %v2521
        %v4225 = vadd.f32 %v4224, %v2529
        %v4226 = vadd.f32 %v4225, %v2537
        %v4227 = vadd.f32 %v4226, %v2545
        %v4228 = vadd.f32 %v4227, %v2553
        %v4229 = vadd.f32 %v4228, %v2561
        %v4230 = vadd.f32 %v4229, %v2569
        %v4231 = vadd.f32 %v4230, %v2577
        %v4232 = vadd.f32 %v4231, %v2585
        %v4233 = vadd.f32 %v4232, %v2593
        %v4234 = vadd.f32 %v4233, %v2601
        %v4235 = vadd.f32 %v4234, %v2609
        %v4236 = vadd.f32 %v4235, %v2617
        %v4237 = vadd.f32 %v4236, %v2625
        %v4238 = vadd.f32 %v4237, %v2633
        %v4239 = vadd.f32 %v4238, %v2641
        %v4240 = vadd.f32 %v4239, %v2649
        %v4241 = vadd.f32 %v4240, %v2657
        %v4242 = vadd.f32 %v4241, %v2665
        %v4243 = vadd.f32 %v4242, %v2673
        %v4244 = vadd.f32 %v4243, %v2681
        %v4245 = vadd.f32 %v4244, %v2689
        %v4246 = vadd.f32 %v4245, %v2697
        %v4247 = vadd.f32 %v4246, %v2705
        %v4248 = vadd.f32 %v4247, %v2713
        %v4249 = vadd.f32 %v4248, %v2721
        %v4250 = vadd.f32 %v4249, %v2729
        %v4251 = vadd.f32 %v4250, %v2737
        %v4252 = vadd.f32 %v4251, %v2745
        %v4253 = vadd.f32 %v4252, %v2753
        %v4254 = vadd.f32 %v4253, %v2761
        %v4255 = vadd.f32 %v4254, %v2769
        %v4256 = vadd.f32 %v4255, %v2777
        %v4257 = vadd.f32 %v4256, %v2785
        %v4258 = vadd.f32 %v4257, %v2793
        %v4259 = vadd.f32 %v4258, %v2801
        %v4260 = vadd.f32 %v4259, %v2809
        %v4261 = vadd.f32 %v4260, %v2817
        %v4262 = vadd.f32 %v4261, %v2825
        %v4263 = vadd.f32 %v4262, %v2833
        %v4264 = vadd.f32 %v4263, %v2841
        %v4265 = vadd.f32 %v4264, %v2849
        %v4266 = vadd.f32 %v4265, %v2857
        %v4267 = vadd.f32 %v4266, %v2865
        %v4268 = vadd.f32 %v4267, %v2873
        %v4269 = vadd.f32 %v4268, %v2881
        %v4270 = vadd.f32 %v4269, %v2889
        %v4271 = vadd.f32 %v4270, %v2897
        %v4272 = vadd.f32 %v4271, %v2905
        %v4273 = vadd.f32 %v4272, %v2913
        %v4274 = vadd.f32 %v4273, %v2921
        %v4275 = vadd.f32 %v4274, %v2929
        %v4276 = vadd.f32 %v4275, %v2937
        %v4277 = vadd.f32 %v4276, %v2945
        %v4278 = vadd.f32 %v4277, %v2953
        %v4279 = vadd.f32 %v4278, %v2961
        %v4280 = vadd.f32 %v4279, %v2969
        %v4281 = vadd.f32 %v4280, %v2977
        %v4282 = vadd.f32 %v4281, %v2985
        %v4283 = vadd.f32 %v4282, %v2993
        %v4284 = vadd.f32 %v4283, %v3001
        %v4285 = vadd.f32 %v4284, %v3009
        %v4286 = vadd.f32 %v4285, %v3017
        %v4287 = vadd.f32 %v4286, %v3025
        %v4288 = vadd.f32 %v4287, %v3033
        %v4289 = vadd.f32 %v4288, %v3041
        %v4290 = vadd.f32 %v4289, %v3049
        %v4291 = vadd.f32 %v4290, %v3057
        %v4292 = vadd.f32 %v4291, %v3065
        %v4293 = vadd.f32 %v4292, %v3073
        %v4294 = vadd.f32 %v4293, %v3081
        %v4295 = vadd.f32 %v4294, %v3089
        %v4296 = vadd.f32 %v4295, %v3097
        %v4297 = vadd.f32 %v4296, %v3105
        %v4298 = vadd.f32 %v4297, %v3113
        %v4299 = vadd.f32 %v4298, %v3121
        %v4300 = vadd.f32 %v4299, %v3129
        %v4301 = vadd.f32 %v4300, %v3137
        %v4302 = vadd.f32 %v4301, %v3145
        %v4303 = vadd.f32 %v4302, %v3153
        %v4304 = vadd.f32 %v4303, %v3161
        %v4305 = vadd.f32 %v4304, %v3169
        %v4306 = vadd.f32 %v4305, %v3177
        %v4307 = vadd.f32 %v4306, %v3185
        %v4308 = vadd.f32 %v4307, %v3193
        %v4309 = vadd.f32 %v4308, %v3201
        %v4310 = vadd.f32 %v4309, %v3209
        %v4311 = vadd.f32 %v4310, %v3217
        %v4312 = vadd.f32 %v4311, %v3225
        %v4313 = vadd.f32 %v4312, %v3233
        %v4314 = vadd.f32 %v4313, %v3241
        %v4315 = vadd.f32 %v4314, %v3249
        %v4316 = vadd.f32 %v4315, %v3257
        %v4317 = vadd.f32 %v4316, %v3265
        %v4318 = vadd.f32 %v4317, %v3273
        %v4319 = vadd.f32 %v4318, %v3281
        %v4320 = vadd.f32 %v4319, %v3289
        %v4321 = vadd.f32 %v4320, %v3297
        %v4322 = vadd.f32 %v3298, %v3432
        %v4323 = vadd.f32 %v3299, %v3559
        %v4324 = vadd.f32 %v3300, %v3686
        %v4325 = vadd.f32 %v3301, %v3813
        %v4326 = vadd.f32 %v3302, %v3940
        %v4327 = vadd.f32 %v3303, %v4067
        %v4328 = vadd.f32 %v3304, %v4194
        %v4329 = vadd.f32 %v3305, %v4321
        %4330 = vst [vmem:[#allocation7] sm:$0xff] %v4322
        %4331 = vst [vmem:[#allocation7 + $0x8] sm:$0xff] %v4323
        %4332 = vst [vmem:[#allocation7 + $0x10] sm:$0xff] %v4324
        %4333 = vst [vmem:[#allocation7 + $0x18] sm:$0xff] %v4325
        %4334 = vst [vmem:[#allocation7 + $0x20] sm:$0xff] %v4326
        %4335 = vst [vmem:[#allocation7 + $0x28] sm:$0xff] %v4327
        %4336 = vst [vmem:[#allocation7 + $0x30] sm:$0xff] %v4328
        %4337 = vst [vmem:[#allocation7 + $0x38] sm:$0xff] %v4329
        // Predicated region
        $region41: #{tpu_custom_call.1} parent=27 // pred_check
          %p4338 = pneg %p93
        $region42: #{tpu_custom_call.1} parent=27 // pred_check_branch
          %4340 = sbr.rel (%p4338) target = $region44
        $region43: #{tpu_custom_call.1} parent=27 // pred_region
          %4342 = vsyncadd [#allocation4], 0
          %s4344 = sshll.u32 [#allocation7], 4
          %s4345 = int_to_ptr.vmem [resolvable:$true] %s4344
          %s4346 = sshll.u32 %s2, 4
          %s4347 = int_to_ptr.hbm [resolvable:$true] %s4346
          %4349 = dma.vmem_to_hbm [thread:$0]  %s4345, 1024, %s4347, [#allocation4]
        $region44: #{tpu_custom_call.1} parent=27 // pred_fallthru
          _
        // Predicated region
        $region45: #{tpu_custom_call.1} parent=27 // pred_check
          %p4350 = pneg %p93
        $region46: #{tpu_custom_call.1} parent=27 // pred_check_branch
          %4352 = sbr.rel (%p4350) target = $region48
        $region47: #{tpu_custom_call.1} parent=27 // pred_region
          %4354 = dma.done [#allocation4], 1024
        $region48: #{tpu_custom_call.1} parent=27 // pred_fallthru
          _
      $region28: #{tpu_custom_call.1} parent=5 // pred_fallthru
        _
      %p4355 = scmp.le.s32.totalorder 2, %s15
      // Predicated region
      $region49: #{tpu_custom_call.1} parent=5 // pred_check
        %p4356 = pneg %p4355
      $region50: #{tpu_custom_call.1} parent=5 // pred_check_branch
        %4358 = sbr.rel (%p4356) target = $region52
      $region51: #{tpu_custom_call.1} parent=5 // pred_region
        %s4359 = ssub.s32 %s15, 2
      $region52: #{tpu_custom_call.1} parent=5 // pred_fallthru
        _
    $region6: #{tpu_custom_call.1} parent=1 // loop_footer
      %s19 = sadd.s32 1, %s15
    $region7: #{tpu_custom_call.1} parent=1 // loop_footer_branch
      %14 = sbr.rel target = $region3
    $region8: #{tpu_custom_call.1} parent=1 // loop_exit
      _
    %4360 = vsyncpa [#allocation3], 1
    %s4361 = scalar_lea.sflag [#allocation3], 1
    %4362 = vsyncpa %s4361, 1
    %4363 = vsyncpa [#allocation6], 1
    %s4364 = scalar_lea.sflag [#allocation6], 1
    %4365 = vsyncpa %s4364, 1
    %4366 = vsyncpa [#allocation4], 1
    %s4367 = scalar_lea.sflag [#allocation4], 1
    %4368 = vsyncpa %s4367, 1

</llo_original>
